<compile_context>
chip_gen: v7x
topology: tpu7x:2x2x1
jax: 0.10.0
libtpu: 0.0.40
codegen_flags: <defaults>
</compile_context>

<pallas_src>
import functools

import jax
import jax.numpy as jnp
from jax.experimental import pallas as pl
from jax.experimental.pallas import tpu as pltpu

_EPS = 1e-5  # nn.LayerNorm default


# ------------------------------- Pallas kernel ------------------------------ #

def _residual_kernel(x_ref, w1_ref, w2_ref, g_ref, b_ref, o_ref, y1_ref, *, C, F, T):
    """One batch element: conv1 -> LN -> ReLU -> conv2 -> LN -> ReLU -> + x."""
    gamma = g_ref[...]                       # (F, 1) f32
    beta = b_ref[...]                        # (F, 1) f32
    zrow = jnp.zeros((1, T), jnp.float32)
    zcol = jnp.zeros((F, 1), jnp.float32)

    def shift2d(p, dh, dw):
        # s[f, t] = p[f + dh, t + dw] with zeros outside bounds (conv padding=1).
        if dh == 1:
            p = jnp.concatenate([p[1:, :], zrow], axis=0)
        elif dh == -1:
            p = jnp.concatenate([zrow, p[:-1, :]], axis=0)
        if dw == 1:
            p = jnp.concatenate([p[:, 1:], zcol], axis=1)
        elif dw == -1:
            p = jnp.concatenate([zcol, p[:, :-1]], axis=1)
        return p

    def conv3x3(planes, w_ref):
        # 3x3 conv (padding=1, bias dropped) as 9 shifted VPU multiply-accumulates.
        # Weight scalars come from SMEM (sreg -> vector broadcast multiply).
        acc = [jnp.zeros((F, T), jnp.float32) for _ in range(C)]
        for kh in range(3):
            for kw in range(3):
                dh, dw = kh - 1, kw - 1
                for ci in range(C):
                    s = shift2d(planes[ci], dh, dw)
                    for co in range(C):
                        w = w_ref[((co * C + ci) * 3 + kh) * 3 + kw]
                        acc[co] = acc[co] + w * s
        return acc

    def ln_relu(p):
        # One-pass LayerNorm over F (sublane axis) + ReLU, f32.
        s1 = jnp.sum(p, axis=0, keepdims=True)                    # (1, T)
        s2 = jnp.sum(p * p, axis=0, keepdims=True)                # (1, T)
        mean = s1 * (1.0 / F)
        var = jnp.maximum(s2 * (1.0 / F) - mean * mean, 0.0)      # clamp f32 cancellation
        inv = jax.lax.rsqrt(var + _EPS)
        return jnp.maximum((p - mean) * inv * gamma + beta, 0.0)

    # ---- block 1: conv1 -> LN -> ReLU (intermediate kept on-chip) ----
    x_planes = [x_ref[0, ci].astype(jnp.float32) for ci in range(C)]
    acc1 = conv3x3(x_planes, w1_ref)
    for co in range(C):
        y1_ref[co] = ln_relu(acc1[co])

    # ---- block 2: conv2 -> LN -> ReLU -> + residual (original x) ----
    y1_planes = [y1_ref[ci] for ci in range(C)]
    acc2 = conv3x3(y1_planes, w2_ref)
    for co in range(C):
        out = ln_relu(acc2[co]) + x_ref[0, co].astype(jnp.float32)
        o_ref[0, co] = out.astype(o_ref.dtype)


# --------------------------------- Wrapper ---------------------------------- #

@jax.jit
def residual_forward(x, w1, b1, w2, b2, gamma, beta):
    """Residual.forward.  b1/b2 are accepted for API parity but unused: a bias
    constant over F is cancelled exactly by the F-axis LayerNorm mean subtraction."""
    del b1, b2
    B, C, F, T = x.shape

    kernel = functools.partial(_residual_kernel, C=C, F=F, T=T)
    data_spec = pl.BlockSpec((1, C, F, T), lambda b: (b, 0, 0, 0))
    vec_spec = pl.BlockSpec((F, 1), lambda b: (0, 0))                 # constant block
    smem_spec = pl.BlockSpec(memory_space=pltpu.MemorySpace.SMEM)     # tiny weight table

    return pl.pallas_call(
        kernel,
        out_shape=jax.ShapeDtypeStruct((B, C, F, T), x.dtype),
        grid_spec=pltpu.PrefetchScalarGridSpec(
            num_scalar_prefetch=0,
            grid=(B,),
            in_specs=[data_spec, smem_spec, smem_spec, vec_spec, vec_spec],
            out_specs=data_spec,
            scratch_shapes=[pltpu.VMEM((C, F, T), jnp.float32)],       # on-chip y1
        ),
        # Per-step footprint is tiny (C*F*T per stream), well under the default
        # scoped VMEM on v5e/v6e/v7x, so no vmem_limit_bytes override needed.
        compiler_params=pltpu.CompilerParams(
            dimension_semantics=("parallel",)),
    )(x,
      w1.astype(jnp.float32).reshape(-1),
      w2.astype(jnp.float32).reshape(-1),
      gamma.astype(jnp.float32).reshape(F, 1),
      beta.astype(jnp.float32).reshape(F, 1))


# -------------------------------- Reference ---------------------------------- #

def _reference(x, w1, b1, w2, b2, gamma, beta):
    def conv(v, w, b):
        y = jax.lax.conv_general_dilated(
            v, w, window_strides=(1, 1), padding=((1, 1), (1, 1)),
            dimension_numbers=("NCHW", "OIHW", "NCHW"),
            precision=jax.lax.Precision.HIGHEST)
        return y + b[None, :, None, None]       # bias included (cancelled by LN)

    def cnn_ln(v):
        vt = jnp.transpose(v, (0, 1, 3, 2)).astype(jnp.float32)
        mean = jnp.mean(vt, axis=-1, keepdims=True)
        var = jnp.mean((vt - mean) ** 2, axis=-1, keepdims=True)
        out = (vt - mean) / jnp.sqrt(var + _EPS) * gamma + beta
        return jnp.transpose(out, (0, 1, 3, 2)).astype(v.dtype)

    y = jax.nn.relu(cnn_ln(conv(x, w1, b1)))
    y = jax.nn.relu(cnn_ln(conv(y, w2, b2)))
    return x + y


# ----------------------------------- Test ------------------------------------ #

if __name__ == "__main__":
    key = jax.random.PRNGKey(0)
    B, n_channel, n_feats, T = 2, 4, 16, 128   # T multiple of 128 -> lane-dense stores
    F = n_feats // 2 + 1                       # LayerNorm dim == spatial H of NCHW input
    ksize = 3                                  # padding=1 keeps spatial size (skip add)

    k1, k2, k3, k4, k5, k6, k7 = jax.random.split(key, 7)
    x = jax.random.normal(k1, (B, n_channel, F, T), dtype=jnp.float32)

    fan_in = n_channel * ksize * ksize
    bound = 1.0 / (fan_in ** 0.5)
    w1 = jax.random.uniform(k2, (n_channel, n_channel, ksize, ksize),
                            jnp.float32, -bound, bound)
    b1 = jax.random.uniform(k3, (n_channel,), jnp.float32, -bound, bound)
    w2 = jax.random.uniform(k4, (n_channel, n_channel, ksize, ksize),
                            jnp.float32, -bound, bound)
    b2 = jax.random.uniform(k5, (n_channel,), jnp.float32, -bound, bound)

    # Non-trivial LayerNorm affine params (one instance shared by both blocks).
    gamma = 1.0 + 0.1 * jax.random.normal(k6, (F,), jnp.float32)
    beta = 0.1 * jax.random.normal(k7, (F,), jnp.float32)

    out = jax.block_until_ready(residual_forward(x, w1, b1, w2, b2, gamma, beta))
    ref = _reference(x, w1, b1, w2, b2, gamma, beta)

    assert out.shape == x.shape and out.dtype == x.dtype
    err = float(jnp.max(jnp.abs(out - ref)))
    assert err < 2e-4, f"max abs error {err}"
    print("KERNEL_OK")
</pallas_src>

<mosaic_0001>
module attributes {stable_mosaic.version = 11 : i64} {
  func.func @_residual_kernel(%arg0: i32, %arg1: memref<1x4x9x128xf32, #tpu.memory_space<vmem>>, %arg2: memref<144xf32, #tpu.memory_space<smem>>, %arg3: memref<144xf32, #tpu.memory_space<smem>>, %arg4: memref<9x1xf32, #tpu.memory_space<vmem>>, %arg5: memref<9x1xf32, #tpu.memory_space<vmem>>, %arg6: memref<1x4x9x128xf32, #tpu.memory_space<vmem>>, %arg7: memref<4x9x128xf32, #tpu.memory_space<vmem>>) attributes {dimension_semantics = [#tpu.dimension_semantics<parallel>], iteration_bounds = array<i64: 2>, scalar_prefetch = 0 : i64, scratch_operands = 1 : i64, tpu.core_type = #tpu.core_type<tc>, window_params = [{transform_indices = @transform_0, window_bounds = array<i64: 1, 4, 9, 128>}, {transform_indices = @transform_1, window_bounds = array<i64: 144>}, {transform_indices = @transform_2, window_bounds = array<i64: 144>}, {pipeline_mode = #tpu.pipeline_mode<synchronous>, transform_indices = @transform_3, window_bounds = array<i64: 9, 1>}, {pipeline_mode = #tpu.pipeline_mode<synchronous>, transform_indices = @transform_4, window_bounds = array<i64: 9, 1>}, {transform_indices = @transform_5, window_bounds = array<i64: 1, 4, 9, 128>}]} {
    %c0 = arith.constant 0 : index
    %c0_0 = arith.constant 0 : index
    %0 = vector.load %arg4[%c0, %c0_0] : memref<9x1xf32, #tpu.memory_space<vmem>>, vector<9x1xf32>
    %c0_1 = arith.constant 0 : index
    %c0_2 = arith.constant 0 : index
    %1 = vector.load %arg5[%c0_1, %c0_2] : memref<9x1xf32, #tpu.memory_space<vmem>>, vector<9x1xf32>
    %cst = arith.constant 0.000000e+00 : f32
    %2 = vector.broadcast %cst : f32 to vector<1x128xf32>
    %cst_3 = arith.constant 0.000000e+00 : f32
    %3 = vector.broadcast %cst_3 : f32 to vector<9x1xf32>
    %c0_4 = arith.constant 0 : index
    %c0_5 = arith.constant 0 : index
    %c0_6 = arith.constant 0 : index
    %c0_7 = arith.constant 0 : index
    %4 = vector.load %arg1[%c0_4, %c0_5, %c0_6, %c0_7] : memref<1x4x9x128xf32, #tpu.memory_space<vmem>>, vector<1x1x9x128xf32>
    %5 = vector.shape_cast %4 : vector<1x1x9x128xf32> to vector<9x128xf32>
    %c0_8 = arith.constant 0 : index
    %c1 = arith.constant 1 : index
    %c0_9 = arith.constant 0 : index
    %c0_10 = arith.constant 0 : index
    %6 = vector.load %arg1[%c0_8, %c1, %c0_9, %c0_10] : memref<1x4x9x128xf32, #tpu.memory_space<vmem>>, vector<1x1x9x128xf32>
    %7 = vector.shape_cast %6 : vector<1x1x9x128xf32> to vector<9x128xf32>
    %c0_11 = arith.constant 0 : index
    %c2 = arith.constant 2 : index
    %c0_12 = arith.constant 0 : index
    %c0_13 = arith.constant 0 : index
    %8 = vector.load %arg1[%c0_11, %c2, %c0_12, %c0_13] : memref<1x4x9x128xf32, #tpu.memory_space<vmem>>, vector<1x1x9x128xf32>
    %9 = vector.shape_cast %8 : vector<1x1x9x128xf32> to vector<9x128xf32>
    %c0_14 = arith.constant 0 : index
    %c3 = arith.constant 3 : index
    %c0_15 = arith.constant 0 : index
    %c0_16 = arith.constant 0 : index
    %10 = vector.load %arg1[%c0_14, %c3, %c0_15, %c0_16] : memref<1x4x9x128xf32, #tpu.memory_space<vmem>>, vector<1x1x9x128xf32>
    %11 = vector.shape_cast %10 : vector<1x1x9x128xf32> to vector<9x128xf32>
    %cst_17 = arith.constant 0.000000e+00 : f32
    %12 = vector.broadcast %cst_17 : f32 to vector<9x128xf32>
    %cst_18 = arith.constant 0.000000e+00 : f32
    %13 = vector.broadcast %cst_18 : f32 to vector<9x128xf32>
    %cst_19 = arith.constant 0.000000e+00 : f32
    %14 = vector.broadcast %cst_19 : f32 to vector<9x128xf32>
    %cst_20 = arith.constant 0.000000e+00 : f32
    %15 = vector.broadcast %cst_20 : f32 to vector<9x128xf32>
    %16 = vector.extract_strided_slice %5 {offsets = [0, 0], sizes = [8, 128], strides = [1, 1]} : vector<9x128xf32> to vector<8x128xf32>
    %17 = tpu.concatenate %2, %16 in 0 : vector<1x128xf32>, vector<8x128xf32> -> vector<9x128xf32>
    %18 = vector.extract_strided_slice %17 {offsets = [0, 0], sizes = [9, 127], strides = [1, 1]} : vector<9x128xf32> to vector<9x127xf32>
    %19 = tpu.concatenate %3, %18 in 1 : vector<9x1xf32>, vector<9x127xf32> -> vector<9x128xf32>
    %c0_21 = arith.constant 0 : index
    %20 = memref.load %arg2[%c0_21] : memref<144xf32, #tpu.memory_space<smem>>
    %21 = vector.broadcast %20 : f32 to vector<9x128xf32>
    %22 = arith.mulf %21, %19 : vector<9x128xf32>
    %23 = arith.addf %12, %22 : vector<9x128xf32>
    %c36 = arith.constant 36 : index
    %24 = memref.load %arg2[%c36] : memref<144xf32, #tpu.memory_space<smem>>
    %25 = vector.broadcast %24 : f32 to vector<9x128xf32>
    %26 = arith.mulf %25, %19 : vector<9x128xf32>
    %27 = arith.addf %13, %26 : vector<9x128xf32>
    %c72 = arith.constant 72 : index
    %28 = memref.load %arg2[%c72] : memref<144xf32, #tpu.memory_space<smem>>
    %29 = vector.broadcast %28 : f32 to vector<9x128xf32>
    %30 = arith.mulf %29, %19 : vector<9x128xf32>
    %31 = arith.addf %14, %30 : vector<9x128xf32>
    %c108 = arith.constant 108 : index
    %32 = memref.load %arg2[%c108] : memref<144xf32, #tpu.memory_space<smem>>
    %33 = vector.broadcast %32 : f32 to vector<9x128xf32>
    %34 = arith.mulf %33, %19 : vector<9x128xf32>
    %35 = arith.addf %15, %34 : vector<9x128xf32>
    %36 = vector.extract_strided_slice %7 {offsets = [0, 0], sizes = [8, 128], strides = [1, 1]} : vector<9x128xf32> to vector<8x128xf32>
    %37 = tpu.concatenate %2, %36 in 0 : vector<1x128xf32>, vector<8x128xf32> -> vector<9x128xf32>
    %38 = vector.extract_strided_slice %37 {offsets = [0, 0], sizes = [9, 127], strides = [1, 1]} : vector<9x128xf32> to vector<9x127xf32>
    %39 = tpu.concatenate %3, %38 in 1 : vector<9x1xf32>, vector<9x127xf32> -> vector<9x128xf32>
    %c9 = arith.constant 9 : index
    %40 = memref.load %arg2[%c9] : memref<144xf32, #tpu.memory_space<smem>>
    %41 = vector.broadcast %40 : f32 to vector<9x128xf32>
    %42 = arith.mulf %41, %39 : vector<9x128xf32>
    %43 = arith.addf %23, %42 : vector<9x128xf32>
    %c45 = arith.constant 45 : index
    %44 = memref.load %arg2[%c45] : memref<144xf32, #tpu.memory_space<smem>>
    %45 = vector.broadcast %44 : f32 to vector<9x128xf32>
    %46 = arith.mulf %45, %39 : vector<9x128xf32>
    %47 = arith.addf %27, %46 : vector<9x128xf32>
    %c81 = arith.constant 81 : index
    %48 = memref.load %arg2[%c81] : memref<144xf32, #tpu.memory_space<smem>>
    %49 = vector.broadcast %48 : f32 to vector<9x128xf32>
    %50 = arith.mulf %49, %39 : vector<9x128xf32>
    %51 = arith.addf %31, %50 : vector<9x128xf32>
    %c117 = arith.constant 117 : index
    %52 = memref.load %arg2[%c117] : memref<144xf32, #tpu.memory_space<smem>>
    %53 = vector.broadcast %52 : f32 to vector<9x128xf32>
    %54 = arith.mulf %53, %39 : vector<9x128xf32>
    %55 = arith.addf %35, %54 : vector<9x128xf32>
    %56 = vector.extract_strided_slice %9 {offsets = [0, 0], sizes = [8, 128], strides = [1, 1]} : vector<9x128xf32> to vector<8x128xf32>
    %57 = tpu.concatenate %2, %56 in 0 : vector<1x128xf32>, vector<8x128xf32> -> vector<9x128xf32>
    %58 = vector.extract_strided_slice %57 {offsets = [0, 0], sizes = [9, 127], strides = [1, 1]} : vector<9x128xf32> to vector<9x127xf32>
    %59 = tpu.concatenate %3, %58 in 1 : vector<9x1xf32>, vector<9x127xf32> -> vector<9x128xf32>
    %c18 = arith.constant 18 : index
    %60 = memref.load %arg2[%c18] : memref<144xf32, #tpu.memory_space<smem>>
    %61 = vector.broadcast %60 : f32 to vector<9x128xf32>
    %62 = arith.mulf %61, %59 : vector<9x128xf32>
    %63 = arith.addf %43, %62 : vector<9x128xf32>
    %c54 = arith.constant 54 : index
    %64 = memref.load %arg2[%c54] : memref<144xf32, #tpu.memory_space<smem>>
    %65 = vector.broadcast %64 : f32 to vector<9x128xf32>
    %66 = arith.mulf %65, %59 : vector<9x128xf32>
    %67 = arith.addf %47, %66 : vector<9x128xf32>
    %c90 = arith.constant 90 : index
    %68 = memref.load %arg2[%c90] : memref<144xf32, #tpu.memory_space<smem>>
    %69 = vector.broadcast %68 : f32 to vector<9x128xf32>
    %70 = arith.mulf %69, %59 : vector<9x128xf32>
    %71 = arith.addf %51, %70 : vector<9x128xf32>
    %c126 = arith.constant 126 : index
    %72 = memref.load %arg2[%c126] : memref<144xf32, #tpu.memory_space<smem>>
    %73 = vector.broadcast %72 : f32 to vector<9x128xf32>
    %74 = arith.mulf %73, %59 : vector<9x128xf32>
    %75 = arith.addf %55, %74 : vector<9x128xf32>
    %76 = vector.extract_strided_slice %11 {offsets = [0, 0], sizes = [8, 128], strides = [1, 1]} : vector<9x128xf32> to vector<8x128xf32>
    %77 = tpu.concatenate %2, %76 in 0 : vector<1x128xf32>, vector<8x128xf32> -> vector<9x128xf32>
    %78 = vector.extract_strided_slice %77 {offsets = [0, 0], sizes = [9, 127], strides = [1, 1]} : vector<9x128xf32> to vector<9x127xf32>
    %79 = tpu.concatenate %3, %78 in 1 : vector<9x1xf32>, vector<9x127xf32> -> vector<9x128xf32>
    %c27 = arith.constant 27 : index
    %80 = memref.load %arg2[%c27] : memref<144xf32, #tpu.memory_space<smem>>
    %81 = vector.broadcast %80 : f32 to vector<9x128xf32>
    %82 = arith.mulf %81, %79 : vector<9x128xf32>
    %83 = arith.addf %63, %82 : vector<9x128xf32>
    %c63 = arith.constant 63 : index
    %84 = memref.load %arg2[%c63] : memref<144xf32, #tpu.memory_space<smem>>
    %85 = vector.broadcast %84 : f32 to vector<9x128xf32>
    %86 = arith.mulf %85, %79 : vector<9x128xf32>
    %87 = arith.addf %67, %86 : vector<9x128xf32>
    %c99 = arith.constant 99 : index
    %88 = memref.load %arg2[%c99] : memref<144xf32, #tpu.memory_space<smem>>
    %89 = vector.broadcast %88 : f32 to vector<9x128xf32>
    %90 = arith.mulf %89, %79 : vector<9x128xf32>
    %91 = arith.addf %71, %90 : vector<9x128xf32>
    %c135 = arith.constant 135 : index
    %92 = memref.load %arg2[%c135] : memref<144xf32, #tpu.memory_space<smem>>
    %93 = vector.broadcast %92 : f32 to vector<9x128xf32>
    %94 = arith.mulf %93, %79 : vector<9x128xf32>
    %95 = arith.addf %75, %94 : vector<9x128xf32>
    %96 = vector.extract_strided_slice %5 {offsets = [0, 0], sizes = [8, 128], strides = [1, 1]} : vector<9x128xf32> to vector<8x128xf32>
    %97 = tpu.concatenate %2, %96 in 0 : vector<1x128xf32>, vector<8x128xf32> -> vector<9x128xf32>
    %c1_22 = arith.constant 1 : index
    %98 = memref.load %arg2[%c1_22] : memref<144xf32, #tpu.memory_space<smem>>
    %99 = vector.broadcast %98 : f32 to vector<9x128xf32>
    %100 = arith.mulf %99, %97 : vector<9x128xf32>
    %101 = arith.addf %83, %100 : vector<9x128xf32>
    %c37 = arith.constant 37 : index
    %102 = memref.load %arg2[%c37] : memref<144xf32, #tpu.memory_space<smem>>
    %103 = vector.broadcast %102 : f32 to vector<9x128xf32>
    %104 = arith.mulf %103, %97 : vector<9x128xf32>
    %105 = arith.addf %87, %104 : vector<9x128xf32>
    %c73 = arith.constant 73 : index
    %106 = memref.load %arg2[%c73] : memref<144xf32, #tpu.memory_space<smem>>
    %107 = vector.broadcast %106 : f32 to vector<9x128xf32>
    %108 = arith.mulf %107, %97 : vector<9x128xf32>
    %109 = arith.addf %91, %108 : vector<9x128xf32>
    %c109 = arith.constant 109 : index
    %110 = memref.load %arg2[%c109] : memref<144xf32, #tpu.memory_space<smem>>
    %111 = vector.broadcast %110 : f32 to vector<9x128xf32>
    %112 = arith.mulf %111, %97 : vector<9x128xf32>
    %113 = arith.addf %95, %112 : vector<9x128xf32>
    %114 = vector.extract_strided_slice %7 {offsets = [0, 0], sizes = [8, 128], strides = [1, 1]} : vector<9x128xf32> to vector<8x128xf32>
    %115 = tpu.concatenate %2, %114 in 0 : vector<1x128xf32>, vector<8x128xf32> -> vector<9x128xf32>
    %c10 = arith.constant 10 : index
    %116 = memref.load %arg2[%c10] : memref<144xf32, #tpu.memory_space<smem>>
    %117 = vector.broadcast %116 : f32 to vector<9x128xf32>
    %118 = arith.mulf %117, %115 : vector<9x128xf32>
    %119 = arith.addf %101, %118 : vector<9x128xf32>
    %c46 = arith.constant 46 : index
    %120 = memref.load %arg2[%c46] : memref<144xf32, #tpu.memory_space<smem>>
    %121 = vector.broadcast %120 : f32 to vector<9x128xf32>
    %122 = arith.mulf %121, %115 : vector<9x128xf32>
    %123 = arith.addf %105, %122 : vector<9x128xf32>
    %c82 = arith.constant 82 : index
    %124 = memref.load %arg2[%c82] : memref<144xf32, #tpu.memory_space<smem>>
    %125 = vector.broadcast %124 : f32 to vector<9x128xf32>
    %126 = arith.mulf %125, %115 : vector<9x128xf32>
    %127 = arith.addf %109, %126 : vector<9x128xf32>
    %c118 = arith.constant 118 : index
    %128 = memref.load %arg2[%c118] : memref<144xf32, #tpu.memory_space<smem>>
    %129 = vector.broadcast %128 : f32 to vector<9x128xf32>
    %130 = arith.mulf %129, %115 : vector<9x128xf32>
    %131 = arith.addf %113, %130 : vector<9x128xf32>
    %132 = vector.extract_strided_slice %9 {offsets = [0, 0], sizes = [8, 128], strides = [1, 1]} : vector<9x128xf32> to vector<8x128xf32>
    %133 = tpu.concatenate %2, %132 in 0 : vector<1x128xf32>, vector<8x128xf32> -> vector<9x128xf32>
    %c19 = arith.constant 19 : index
    %134 = memref.load %arg2[%c19] : memref<144xf32, #tpu.memory_space<smem>>
    %135 = vector.broadcast %134 : f32 to vector<9x128xf32>
    %136 = arith.mulf %135, %133 : vector<9x128xf32>
    %137 = arith.addf %119, %136 : vector<9x128xf32>
    %c55 = arith.constant 55 : index
    %138 = memref.load %arg2[%c55] : memref<144xf32, #tpu.memory_space<smem>>
    %139 = vector.broadcast %138 : f32 to vector<9x128xf32>
    %140 = arith.mulf %139, %133 : vector<9x128xf32>
    %141 = arith.addf %123, %140 : vector<9x128xf32>
    %c91 = arith.constant 91 : index
    %142 = memref.load %arg2[%c91] : memref<144xf32, #tpu.memory_space<smem>>
    %143 = vector.broadcast %142 : f32 to vector<9x128xf32>
    %144 = arith.mulf %143, %133 : vector<9x128xf32>
    %145 = arith.addf %127, %144 : vector<9x128xf32>
    %c127 = arith.constant 127 : index
    %146 = memref.load %arg2[%c127] : memref<144xf32, #tpu.memory_space<smem>>
    %147 = vector.broadcast %146 : f32 to vector<9x128xf32>
    %148 = arith.mulf %147, %133 : vector<9x128xf32>
    %149 = arith.addf %131, %148 : vector<9x128xf32>
    %150 = vector.extract_strided_slice %11 {offsets = [0, 0], sizes = [8, 128], strides = [1, 1]} : vector<9x128xf32> to vector<8x128xf32>
    %151 = tpu.concatenate %2, %150 in 0 : vector<1x128xf32>, vector<8x128xf32> -> vector<9x128xf32>
    %c28 = arith.constant 28 : index
    %152 = memref.load %arg2[%c28] : memref<144xf32, #tpu.memory_space<smem>>
    %153 = vector.broadcast %152 : f32 to vector<9x128xf32>
    %154 = arith.mulf %153, %151 : vector<9x128xf32>
    %155 = arith.addf %137, %154 : vector<9x128xf32>
    %c64 = arith.constant 64 : index
    %156 = memref.load %arg2[%c64] : memref<144xf32, #tpu.memory_space<smem>>
    %157 = vector.broadcast %156 : f32 to vector<9x128xf32>
    %158 = arith.mulf %157, %151 : vector<9x128xf32>
    %159 = arith.addf %141, %158 : vector<9x128xf32>
    %c100 = arith.constant 100 : index
    %160 = memref.load %arg2[%c100] : memref<144xf32, #tpu.memory_space<smem>>
    %161 = vector.broadcast %160 : f32 to vector<9x128xf32>
    %162 = arith.mulf %161, %151 : vector<9x128xf32>
    %163 = arith.addf %145, %162 : vector<9x128xf32>
    %c136 = arith.constant 136 : index
    %164 = memref.load %arg2[%c136] : memref<144xf32, #tpu.memory_space<smem>>
    %165 = vector.broadcast %164 : f32 to vector<9x128xf32>
    %166 = arith.mulf %165, %151 : vector<9x128xf32>
    %167 = arith.addf %149, %166 : vector<9x128xf32>
    %168 = vector.extract_strided_slice %5 {offsets = [0, 0], sizes = [8, 128], strides = [1, 1]} : vector<9x128xf32> to vector<8x128xf32>
    %169 = tpu.concatenate %2, %168 in 0 : vector<1x128xf32>, vector<8x128xf32> -> vector<9x128xf32>
    %170 = vector.extract_strided_slice %169 {offsets = [0, 1], sizes = [9, 127], strides = [1, 1]} : vector<9x128xf32> to vector<9x127xf32>
    %171 = tpu.concatenate %170, %3 in 1 : vector<9x127xf32>, vector<9x1xf32> -> vector<9x128xf32>
    %c2_23 = arith.constant 2 : index
    %172 = memref.load %arg2[%c2_23] : memref<144xf32, #tpu.memory_space<smem>>
    %173 = vector.broadcast %172 : f32 to vector<9x128xf32>
    %174 = arith.mulf %173, %171 : vector<9x128xf32>
    %175 = arith.addf %155, %174 : vector<9x128xf32>
    %c38 = arith.constant 38 : index
    %176 = memref.load %arg2[%c38] : memref<144xf32, #tpu.memory_space<smem>>
    %177 = vector.broadcast %176 : f32 to vector<9x128xf32>
    %178 = arith.mulf %177, %171 : vector<9x128xf32>
    %179 = arith.addf %159, %178 : vector<9x128xf32>
    %c74 = arith.constant 74 : index
    %180 = memref.load %arg2[%c74] : memref<144xf32, #tpu.memory_space<smem>>
    %181 = vector.broadcast %180 : f32 to vector<9x128xf32>
    %182 = arith.mulf %181, %171 : vector<9x128xf32>
    %183 = arith.addf %163, %182 : vector<9x128xf32>
    %c110 = arith.constant 110 : index
    %184 = memref.load %arg2[%c110] : memref<144xf32, #tpu.memory_space<smem>>
    %185 = vector.broadcast %184 : f32 to vector<9x128xf32>
    %186 = arith.mulf %185, %171 : vector<9x128xf32>
    %187 = arith.addf %167, %186 : vector<9x128xf32>
    %188 = vector.extract_strided_slice %7 {offsets = [0, 0], sizes = [8, 128], strides = [1, 1]} : vector<9x128xf32> to vector<8x128xf32>
    %189 = tpu.concatenate %2, %188 in 0 : vector<1x128xf32>, vector<8x128xf32> -> vector<9x128xf32>
    %190 = vector.extract_strided_slice %189 {offsets = [0, 1], sizes = [9, 127], strides = [1, 1]} : vector<9x128xf32> to vector<9x127xf32>
    %191 = tpu.concatenate %190, %3 in 1 : vector<9x127xf32>, vector<9x1xf32> -> vector<9x128xf32>
    %c11 = arith.constant 11 : index
    %192 = memref.load %arg2[%c11] : memref<144xf32, #tpu.memory_space<smem>>
    %193 = vector.broadcast %192 : f32 to vector<9x128xf32>
    %194 = arith.mulf %193, %191 : vector<9x128xf32>
    %195 = arith.addf %175, %194 : vector<9x128xf32>
    %c47 = arith.constant 47 : index
    %196 = memref.load %arg2[%c47] : memref<144xf32, #tpu.memory_space<smem>>
    %197 = vector.broadcast %196 : f32 to vector<9x128xf32>
    %198 = arith.mulf %197, %191 : vector<9x128xf32>
    %199 = arith.addf %179, %198 : vector<9x128xf32>
    %c83 = arith.constant 83 : index
    %200 = memref.load %arg2[%c83] : memref<144xf32, #tpu.memory_space<smem>>
    %201 = vector.broadcast %200 : f32 to vector<9x128xf32>
    %202 = arith.mulf %201, %191 : vector<9x128xf32>
    %203 = arith.addf %183, %202 : vector<9x128xf32>
    %c119 = arith.constant 119 : index
    %204 = memref.load %arg2[%c119] : memref<144xf32, #tpu.memory_space<smem>>
    %205 = vector.broadcast %204 : f32 to vector<9x128xf32>
    %206 = arith.mulf %205, %191 : vector<9x128xf32>
    %207 = arith.addf %187, %206 : vector<9x128xf32>
    %208 = vector.extract_strided_slice %9 {offsets = [0, 0], sizes = [8, 128], strides = [1, 1]} : vector<9x128xf32> to vector<8x128xf32>
    %209 = tpu.concatenate %2, %208 in 0 : vector<1x128xf32>, vector<8x128xf32> -> vector<9x128xf32>
    %210 = vector.extract_strided_slice %209 {offsets = [0, 1], sizes = [9, 127], strides = [1, 1]} : vector<9x128xf32> to vector<9x127xf32>
    %211 = tpu.concatenate %210, %3 in 1 : vector<9x127xf32>, vector<9x1xf32> -> vector<9x128xf32>
    %c20 = arith.constant 20 : index
    %212 = memref.load %arg2[%c20] : memref<144xf32, #tpu.memory_space<smem>>
    %213 = vector.broadcast %212 : f32 to vector<9x128xf32>
    %214 = arith.mulf %213, %211 : vector<9x128xf32>
    %215 = arith.addf %195, %214 : vector<9x128xf32>
    %c56 = arith.constant 56 : index
    %216 = memref.load %arg2[%c56] : memref<144xf32, #tpu.memory_space<smem>>
    %217 = vector.broadcast %216 : f32 to vector<9x128xf32>
    %218 = arith.mulf %217, %211 : vector<9x128xf32>
    %219 = arith.addf %199, %218 : vector<9x128xf32>
    %c92 = arith.constant 92 : index
    %220 = memref.load %arg2[%c92] : memref<144xf32, #tpu.memory_space<smem>>
    %221 = vector.broadcast %220 : f32 to vector<9x128xf32>
    %222 = arith.mulf %221, %211 : vector<9x128xf32>
    %223 = arith.addf %203, %222 : vector<9x128xf32>
    %c128 = arith.constant 128 : index
    %224 = memref.load %arg2[%c128] : memref<144xf32, #tpu.memory_space<smem>>
    %225 = vector.broadcast %224 : f32 to vector<9x128xf32>
    %226 = arith.mulf %225, %211 : vector<9x128xf32>
    %227 = arith.addf %207, %226 : vector<9x128xf32>
    %228 = vector.extract_strided_slice %11 {offsets = [0, 0], sizes = [8, 128], strides = [1, 1]} : vector<9x128xf32> to vector<8x128xf32>
    %229 = tpu.concatenate %2, %228 in 0 : vector<1x128xf32>, vector<8x128xf32> -> vector<9x128xf32>
    %230 = vector.extract_strided_slice %229 {offsets = [0, 1], sizes = [9, 127], strides = [1, 1]} : vector<9x128xf32> to vector<9x127xf32>
    %231 = tpu.concatenate %230, %3 in 1 : vector<9x127xf32>, vector<9x1xf32> -> vector<9x128xf32>
    %c29 = arith.constant 29 : index
    %232 = memref.load %arg2[%c29] : memref<144xf32, #tpu.memory_space<smem>>
    %233 = vector.broadcast %232 : f32 to vector<9x128xf32>
    %234 = arith.mulf %233, %231 : vector<9x128xf32>
    %235 = arith.addf %215, %234 : vector<9x128xf32>
    %c65 = arith.constant 65 : index
    %236 = memref.load %arg2[%c65] : memref<144xf32, #tpu.memory_space<smem>>
    %237 = vector.broadcast %236 : f32 to vector<9x128xf32>
    %238 = arith.mulf %237, %231 : vector<9x128xf32>
    %239 = arith.addf %219, %238 : vector<9x128xf32>
    %c101 = arith.constant 101 : index
    %240 = memref.load %arg2[%c101] : memref<144xf32, #tpu.memory_space<smem>>
    %241 = vector.broadcast %240 : f32 to vector<9x128xf32>
    %242 = arith.mulf %241, %231 : vector<9x128xf32>
    %243 = arith.addf %223, %242 : vector<9x128xf32>
    %c137 = arith.constant 137 : index
    %244 = memref.load %arg2[%c137] : memref<144xf32, #tpu.memory_space<smem>>
    %245 = vector.broadcast %244 : f32 to vector<9x128xf32>
    %246 = arith.mulf %245, %231 : vector<9x128xf32>
    %247 = arith.addf %227, %246 : vector<9x128xf32>
    %248 = vector.extract_strided_slice %5 {offsets = [0, 0], sizes = [9, 127], strides = [1, 1]} : vector<9x128xf32> to vector<9x127xf32>
    %249 = tpu.concatenate %3, %248 in 1 : vector<9x1xf32>, vector<9x127xf32> -> vector<9x128xf32>
    %c3_24 = arith.constant 3 : index
    %250 = memref.load %arg2[%c3_24] : memref<144xf32, #tpu.memory_space<smem>>
    %251 = vector.broadcast %250 : f32 to vector<9x128xf32>
    %252 = arith.mulf %251, %249 : vector<9x128xf32>
    %253 = arith.addf %235, %252 : vector<9x128xf32>
    %c39 = arith.constant 39 : index
    %254 = memref.load %arg2[%c39] : memref<144xf32, #tpu.memory_space<smem>>
    %255 = vector.broadcast %254 : f32 to vector<9x128xf32>
    %256 = arith.mulf %255, %249 : vector<9x128xf32>
    %257 = arith.addf %239, %256 : vector<9x128xf32>
    %c75 = arith.constant 75 : index
    %258 = memref.load %arg2[%c75] : memref<144xf32, #tpu.memory_space<smem>>
    %259 = vector.broadcast %258 : f32 to vector<9x128xf32>
    %260 = arith.mulf %259, %249 : vector<9x128xf32>
    %261 = arith.addf %243, %260 : vector<9x128xf32>
    %c111 = arith.constant 111 : index
    %262 = memref.load %arg2[%c111] : memref<144xf32, #tpu.memory_space<smem>>
    %263 = vector.broadcast %262 : f32 to vector<9x128xf32>
    %264 = arith.mulf %263, %249 : vector<9x128xf32>
    %265 = arith.addf %247, %264 : vector<9x128xf32>
    %266 = vector.extract_strided_slice %7 {offsets = [0, 0], sizes = [9, 127], strides = [1, 1]} : vector<9x128xf32> to vector<9x127xf32>
    %267 = tpu.concatenate %3, %266 in 1 : vector<9x1xf32>, vector<9x127xf32> -> vector<9x128xf32>
    %c12 = arith.constant 12 : index
    %268 = memref.load %arg2[%c12] : memref<144xf32, #tpu.memory_space<smem>>
    %269 = vector.broadcast %268 : f32 to vector<9x128xf32>
    %270 = arith.mulf %269, %267 : vector<9x128xf32>
    %271 = arith.addf %253, %270 : vector<9x128xf32>
    %c48 = arith.constant 48 : index
    %272 = memref.load %arg2[%c48] : memref<144xf32, #tpu.memory_space<smem>>
    %273 = vector.broadcast %272 : f32 to vector<9x128xf32>
    %274 = arith.mulf %273, %267 : vector<9x128xf32>
    %275 = arith.addf %257, %274 : vector<9x128xf32>
    %c84 = arith.constant 84 : index
    %276 = memref.load %arg2[%c84] : memref<144xf32, #tpu.memory_space<smem>>
    %277 = vector.broadcast %276 : f32 to vector<9x128xf32>
    %278 = arith.mulf %277, %267 : vector<9x128xf32>
    %279 = arith.addf %261, %278 : vector<9x128xf32>
    %c120 = arith.constant 120 : index
    %280 = memref.load %arg2[%c120] : memref<144xf32, #tpu.memory_space<smem>>
    %281 = vector.broadcast %280 : f32 to vector<9x128xf32>
    %282 = arith.mulf %281, %267 : vector<9x128xf32>
    %283 = arith.addf %265, %282 : vector<9x128xf32>
    %284 = vector.extract_strided_slice %9 {offsets = [0, 0], sizes = [9, 127], strides = [1, 1]} : vector<9x128xf32> to vector<9x127xf32>
    %285 = tpu.concatenate %3, %284 in 1 : vector<9x1xf32>, vector<9x127xf32> -> vector<9x128xf32>
    %c21 = arith.constant 21 : index
    %286 = memref.load %arg2[%c21] : memref<144xf32, #tpu.memory_space<smem>>
    %287 = vector.broadcast %286 : f32 to vector<9x128xf32>
    %288 = arith.mulf %287, %285 : vector<9x128xf32>
    %289 = arith.addf %271, %288 : vector<9x128xf32>
    %c57 = arith.constant 57 : index
    %290 = memref.load %arg2[%c57] : memref<144xf32, #tpu.memory_space<smem>>
    %291 = vector.broadcast %290 : f32 to vector<9x128xf32>
    %292 = arith.mulf %291, %285 : vector<9x128xf32>
    %293 = arith.addf %275, %292 : vector<9x128xf32>
    %c93 = arith.constant 93 : index
    %294 = memref.load %arg2[%c93] : memref<144xf32, #tpu.memory_space<smem>>
    %295 = vector.broadcast %294 : f32 to vector<9x128xf32>
    %296 = arith.mulf %295, %285 : vector<9x128xf32>
    %297 = arith.addf %279, %296 : vector<9x128xf32>
    %c129 = arith.constant 129 : index
    %298 = memref.load %arg2[%c129] : memref<144xf32, #tpu.memory_space<smem>>
    %299 = vector.broadcast %298 : f32 to vector<9x128xf32>
    %300 = arith.mulf %299, %285 : vector<9x128xf32>
    %301 = arith.addf %283, %300 : vector<9x128xf32>
    %302 = vector.extract_strided_slice %11 {offsets = [0, 0], sizes = [9, 127], strides = [1, 1]} : vector<9x128xf32> to vector<9x127xf32>
    %303 = tpu.concatenate %3, %302 in 1 : vector<9x1xf32>, vector<9x127xf32> -> vector<9x128xf32>
    %c30 = arith.constant 30 : index
    %304 = memref.load %arg2[%c30] : memref<144xf32, #tpu.memory_space<smem>>
    %305 = vector.broadcast %304 : f32 to vector<9x128xf32>
    %306 = arith.mulf %305, %303 : vector<9x128xf32>
    %307 = arith.addf %289, %306 : vector<9x128xf32>
    %c66 = arith.constant 66 : index
    %308 = memref.load %arg2[%c66] : memref<144xf32, #tpu.memory_space<smem>>
    %309 = vector.broadcast %308 : f32 to vector<9x128xf32>
    %310 = arith.mulf %309, %303 : vector<9x128xf32>
    %311 = arith.addf %293, %310 : vector<9x128xf32>
    %c102 = arith.constant 102 : index
    %312 = memref.load %arg2[%c102] : memref<144xf32, #tpu.memory_space<smem>>
    %313 = vector.broadcast %312 : f32 to vector<9x128xf32>
    %314 = arith.mulf %313, %303 : vector<9x128xf32>
    %315 = arith.addf %297, %314 : vector<9x128xf32>
    %c138 = arith.constant 138 : index
    %316 = memref.load %arg2[%c138] : memref<144xf32, #tpu.memory_space<smem>>
    %317 = vector.broadcast %316 : f32 to vector<9x128xf32>
    %318 = arith.mulf %317, %303 : vector<9x128xf32>
    %319 = arith.addf %301, %318 : vector<9x128xf32>
    %c4 = arith.constant 4 : index
    %320 = memref.load %arg2[%c4] : memref<144xf32, #tpu.memory_space<smem>>
    %321 = vector.broadcast %320 : f32 to vector<9x128xf32>
    %322 = arith.mulf %321, %5 : vector<9x128xf32>
    %323 = arith.addf %307, %322 : vector<9x128xf32>
    %c40 = arith.constant 40 : index
    %324 = memref.load %arg2[%c40] : memref<144xf32, #tpu.memory_space<smem>>
    %325 = vector.broadcast %324 : f32 to vector<9x128xf32>
    %326 = arith.mulf %325, %5 : vector<9x128xf32>
    %327 = arith.addf %311, %326 : vector<9x128xf32>
    %c76 = arith.constant 76 : index
    %328 = memref.load %arg2[%c76] : memref<144xf32, #tpu.memory_space<smem>>
    %329 = vector.broadcast %328 : f32 to vector<9x128xf32>
    %330 = arith.mulf %329, %5 : vector<9x128xf32>
    %331 = arith.addf %315, %330 : vector<9x128xf32>
    %c112 = arith.constant 112 : index
    %332 = memref.load %arg2[%c112] : memref<144xf32, #tpu.memory_space<smem>>
    %333 = vector.broadcast %332 : f32 to vector<9x128xf32>
    %334 = arith.mulf %333, %5 : vector<9x128xf32>
    %335 = arith.addf %319, %334 : vector<9x128xf32>
    %c13 = arith.constant 13 : index
    %336 = memref.load %arg2[%c13] : memref<144xf32, #tpu.memory_space<smem>>
    %337 = vector.broadcast %336 : f32 to vector<9x128xf32>
    %338 = arith.mulf %337, %7 : vector<9x128xf32>
    %339 = arith.addf %323, %338 : vector<9x128xf32>
    %c49 = arith.constant 49 : index
    %340 = memref.load %arg2[%c49] : memref<144xf32, #tpu.memory_space<smem>>
    %341 = vector.broadcast %340 : f32 to vector<9x128xf32>
    %342 = arith.mulf %341, %7 : vector<9x128xf32>
    %343 = arith.addf %327, %342 : vector<9x128xf32>
    %c85 = arith.constant 85 : index
    %344 = memref.load %arg2[%c85] : memref<144xf32, #tpu.memory_space<smem>>
    %345 = vector.broadcast %344 : f32 to vector<9x128xf32>
    %346 = arith.mulf %345, %7 : vector<9x128xf32>
    %347 = arith.addf %331, %346 : vector<9x128xf32>
    %c121 = arith.constant 121 : index
    %348 = memref.load %arg2[%c121] : memref<144xf32, #tpu.memory_space<smem>>
    %349 = vector.broadcast %348 : f32 to vector<9x128xf32>
    %350 = arith.mulf %349, %7 : vector<9x128xf32>
    %351 = arith.addf %335, %350 : vector<9x128xf32>
    %c22 = arith.constant 22 : index
    %352 = memref.load %arg2[%c22] : memref<144xf32, #tpu.memory_space<smem>>
    %353 = vector.broadcast %352 : f32 to vector<9x128xf32>
    %354 = arith.mulf %353, %9 : vector<9x128xf32>
    %355 = arith.addf %339, %354 : vector<9x128xf32>
    %c58 = arith.constant 58 : index
    %356 = memref.load %arg2[%c58] : memref<144xf32, #tpu.memory_space<smem>>
    %357 = vector.broadcast %356 : f32 to vector<9x128xf32>
    %358 = arith.mulf %357, %9 : vector<9x128xf32>
    %359 = arith.addf %343, %358 : vector<9x128xf32>
    %c94 = arith.constant 94 : index
    %360 = memref.load %arg2[%c94] : memref<144xf32, #tpu.memory_space<smem>>
    %361 = vector.broadcast %360 : f32 to vector<9x128xf32>
    %362 = arith.mulf %361, %9 : vector<9x128xf32>
    %363 = arith.addf %347, %362 : vector<9x128xf32>
    %c130 = arith.constant 130 : index
    %364 = memref.load %arg2[%c130] : memref<144xf32, #tpu.memory_space<smem>>
    %365 = vector.broadcast %364 : f32 to vector<9x128xf32>
    %366 = arith.mulf %365, %9 : vector<9x128xf32>
    %367 = arith.addf %351, %366 : vector<9x128xf32>
    %c31 = arith.constant 31 : index
    %368 = memref.load %arg2[%c31] : memref<144xf32, #tpu.memory_space<smem>>
    %369 = vector.broadcast %368 : f32 to vector<9x128xf32>
    %370 = arith.mulf %369, %11 : vector<9x128xf32>
    %371 = arith.addf %355, %370 : vector<9x128xf32>
    %c67 = arith.constant 67 : index
    %372 = memref.load %arg2[%c67] : memref<144xf32, #tpu.memory_space<smem>>
    %373 = vector.broadcast %372 : f32 to vector<9x128xf32>
    %374 = arith.mulf %373, %11 : vector<9x128xf32>
    %375 = arith.addf %359, %374 : vector<9x128xf32>
    %c103 = arith.constant 103 : index
    %376 = memref.load %arg2[%c103] : memref<144xf32, #tpu.memory_space<smem>>
    %377 = vector.broadcast %376 : f32 to vector<9x128xf32>
    %378 = arith.mulf %377, %11 : vector<9x128xf32>
    %379 = arith.addf %363, %378 : vector<9x128xf32>
    %c139 = arith.constant 139 : index
    %380 = memref.load %arg2[%c139] : memref<144xf32, #tpu.memory_space<smem>>
    %381 = vector.broadcast %380 : f32 to vector<9x128xf32>
    %382 = arith.mulf %381, %11 : vector<9x128xf32>
    %383 = arith.addf %367, %382 : vector<9x128xf32>
    %384 = vector.extract_strided_slice %5 {offsets = [0, 1], sizes = [9, 127], strides = [1, 1]} : vector<9x128xf32> to vector<9x127xf32>
    %385 = tpu.concatenate %384, %3 in 1 : vector<9x127xf32>, vector<9x1xf32> -> vector<9x128xf32>
    %c5 = arith.constant 5 : index
    %386 = memref.load %arg2[%c5] : memref<144xf32, #tpu.memory_space<smem>>
    %387 = vector.broadcast %386 : f32 to vector<9x128xf32>
    %388 = arith.mulf %387, %385 : vector<9x128xf32>
    %389 = arith.addf %371, %388 : vector<9x128xf32>
    %c41 = arith.constant 41 : index
    %390 = memref.load %arg2[%c41] : memref<144xf32, #tpu.memory_space<smem>>
    %391 = vector.broadcast %390 : f32 to vector<9x128xf32>
    %392 = arith.mulf %391, %385 : vector<9x128xf32>
    %393 = arith.addf %375, %392 : vector<9x128xf32>
    %c77 = arith.constant 77 : index
    %394 = memref.load %arg2[%c77] : memref<144xf32, #tpu.memory_space<smem>>
    %395 = vector.broadcast %394 : f32 to vector<9x128xf32>
    %396 = arith.mulf %395, %385 : vector<9x128xf32>
    %397 = arith.addf %379, %396 : vector<9x128xf32>
    %c113 = arith.constant 113 : index
    %398 = memref.load %arg2[%c113] : memref<144xf32, #tpu.memory_space<smem>>
    %399 = vector.broadcast %398 : f32 to vector<9x128xf32>
    %400 = arith.mulf %399, %385 : vector<9x128xf32>
    %401 = arith.addf %383, %400 : vector<9x128xf32>
    %402 = vector.extract_strided_slice %7 {offsets = [0, 1], sizes = [9, 127], strides = [1, 1]} : vector<9x128xf32> to vector<9x127xf32>
    %403 = tpu.concatenate %402, %3 in 1 : vector<9x127xf32>, vector<9x1xf32> -> vector<9x128xf32>
    %c14 = arith.constant 14 : index
    %404 = memref.load %arg2[%c14] : memref<144xf32, #tpu.memory_space<smem>>
    %405 = vector.broadcast %404 : f32 to vector<9x128xf32>
    %406 = arith.mulf %405, %403 : vector<9x128xf32>
    %407 = arith.addf %389, %406 : vector<9x128xf32>
    %c50 = arith.constant 50 : index
    %408 = memref.load %arg2[%c50] : memref<144xf32, #tpu.memory_space<smem>>
    %409 = vector.broadcast %408 : f32 to vector<9x128xf32>
    %410 = arith.mulf %409, %403 : vector<9x128xf32>
    %411 = arith.addf %393, %410 : vector<9x128xf32>
    %c86 = arith.constant 86 : index
    %412 = memref.load %arg2[%c86] : memref<144xf32, #tpu.memory_space<smem>>
    %413 = vector.broadcast %412 : f32 to vector<9x128xf32>
    %414 = arith.mulf %413, %403 : vector<9x128xf32>
    %415 = arith.addf %397, %414 : vector<9x128xf32>
    %c122 = arith.constant 122 : index
    %416 = memref.load %arg2[%c122] : memref<144xf32, #tpu.memory_space<smem>>
    %417 = vector.broadcast %416 : f32 to vector<9x128xf32>
    %418 = arith.mulf %417, %403 : vector<9x128xf32>
    %419 = arith.addf %401, %418 : vector<9x128xf32>
    %420 = vector.extract_strided_slice %9 {offsets = [0, 1], sizes = [9, 127], strides = [1, 1]} : vector<9x128xf32> to vector<9x127xf32>
    %421 = tpu.concatenate %420, %3 in 1 : vector<9x127xf32>, vector<9x1xf32> -> vector<9x128xf32>
    %c23 = arith.constant 23 : index
    %422 = memref.load %arg2[%c23] : memref<144xf32, #tpu.memory_space<smem>>
    %423 = vector.broadcast %422 : f32 to vector<9x128xf32>
    %424 = arith.mulf %423, %421 : vector<9x128xf32>
    %425 = arith.addf %407, %424 : vector<9x128xf32>
    %c59 = arith.constant 59 : index
    %426 = memref.load %arg2[%c59] : memref<144xf32, #tpu.memory_space<smem>>
    %427 = vector.broadcast %426 : f32 to vector<9x128xf32>
    %428 = arith.mulf %427, %421 : vector<9x128xf32>
    %429 = arith.addf %411, %428 : vector<9x128xf32>
    %c95 = arith.constant 95 : index
    %430 = memref.load %arg2[%c95] : memref<144xf32, #tpu.memory_space<smem>>
    %431 = vector.broadcast %430 : f32 to vector<9x128xf32>
    %432 = arith.mulf %431, %421 : vector<9x128xf32>
    %433 = arith.addf %415, %432 : vector<9x128xf32>
    %c131 = arith.constant 131 : index
    %434 = memref.load %arg2[%c131] : memref<144xf32, #tpu.memory_space<smem>>
    %435 = vector.broadcast %434 : f32 to vector<9x128xf32>
    %436 = arith.mulf %435, %421 : vector<9x128xf32>
    %437 = arith.addf %419, %436 : vector<9x128xf32>
    %438 = vector.extract_strided_slice %11 {offsets = [0, 1], sizes = [9, 127], strides = [1, 1]} : vector<9x128xf32> to vector<9x127xf32>
    %439 = tpu.concatenate %438, %3 in 1 : vector<9x127xf32>, vector<9x1xf32> -> vector<9x128xf32>
    %c32 = arith.constant 32 : index
    %440 = memref.load %arg2[%c32] : memref<144xf32, #tpu.memory_space<smem>>
    %441 = vector.broadcast %440 : f32 to vector<9x128xf32>
    %442 = arith.mulf %441, %439 : vector<9x128xf32>
    %443 = arith.addf %425, %442 : vector<9x128xf32>
    %c68 = arith.constant 68 : index
    %444 = memref.load %arg2[%c68] : memref<144xf32, #tpu.memory_space<smem>>
    %445 = vector.broadcast %444 : f32 to vector<9x128xf32>
    %446 = arith.mulf %445, %439 : vector<9x128xf32>
    %447 = arith.addf %429, %446 : vector<9x128xf32>
    %c104 = arith.constant 104 : index
    %448 = memref.load %arg2[%c104] : memref<144xf32, #tpu.memory_space<smem>>
    %449 = vector.broadcast %448 : f32 to vector<9x128xf32>
    %450 = arith.mulf %449, %439 : vector<9x128xf32>
    %451 = arith.addf %433, %450 : vector<9x128xf32>
    %c140 = arith.constant 140 : index
    %452 = memref.load %arg2[%c140] : memref<144xf32, #tpu.memory_space<smem>>
    %453 = vector.broadcast %452 : f32 to vector<9x128xf32>
    %454 = arith.mulf %453, %439 : vector<9x128xf32>
    %455 = arith.addf %437, %454 : vector<9x128xf32>
    %456 = vector.extract_strided_slice %5 {offsets = [1, 0], sizes = [8, 128], strides = [1, 1]} : vector<9x128xf32> to vector<8x128xf32>
    %457 = tpu.concatenate %456, %2 in 0 : vector<8x128xf32>, vector<1x128xf32> -> vector<9x128xf32>
    %458 = vector.extract_strided_slice %457 {offsets = [0, 0], sizes = [9, 127], strides = [1, 1]} : vector<9x128xf32> to vector<9x127xf32>
    %459 = tpu.concatenate %3, %458 in 1 : vector<9x1xf32>, vector<9x127xf32> -> vector<9x128xf32>
    %c6 = arith.constant 6 : index
    %460 = memref.load %arg2[%c6] : memref<144xf32, #tpu.memory_space<smem>>
    %461 = vector.broadcast %460 : f32 to vector<9x128xf32>
    %462 = arith.mulf %461, %459 : vector<9x128xf32>
    %463 = arith.addf %443, %462 : vector<9x128xf32>
    %c42 = arith.constant 42 : index
    %464 = memref.load %arg2[%c42] : memref<144xf32, #tpu.memory_space<smem>>
    %465 = vector.broadcast %464 : f32 to vector<9x128xf32>
    %466 = arith.mulf %465, %459 : vector<9x128xf32>
    %467 = arith.addf %447, %466 : vector<9x128xf32>
    %c78 = arith.constant 78 : index
    %468 = memref.load %arg2[%c78] : memref<144xf32, #tpu.memory_space<smem>>
    %469 = vector.broadcast %468 : f32 to vector<9x128xf32>
    %470 = arith.mulf %469, %459 : vector<9x128xf32>
    %471 = arith.addf %451, %470 : vector<9x128xf32>
    %c114 = arith.constant 114 : index
    %472 = memref.load %arg2[%c114] : memref<144xf32, #tpu.memory_space<smem>>
    %473 = vector.broadcast %472 : f32 to vector<9x128xf32>
    %474 = arith.mulf %473, %459 : vector<9x128xf32>
    %475 = arith.addf %455, %474 : vector<9x128xf32>
    %476 = vector.extract_strided_slice %7 {offsets = [1, 0], sizes = [8, 128], strides = [1, 1]} : vector<9x128xf32> to vector<8x128xf32>
    %477 = tpu.concatenate %476, %2 in 0 : vector<8x128xf32>, vector<1x128xf32> -> vector<9x128xf32>
    %478 = vector.extract_strided_slice %477 {offsets = [0, 0], sizes = [9, 127], strides = [1, 1]} : vector<9x128xf32> to vector<9x127xf32>
    %479 = tpu.concatenate %3, %478 in 1 : vector<9x1xf32>, vector<9x127xf32> -> vector<9x128xf32>
    %c15 = arith.constant 15 : index
    %480 = memref.load %arg2[%c15] : memref<144xf32, #tpu.memory_space<smem>>
    %481 = vector.broadcast %480 : f32 to vector<9x128xf32>
    %482 = arith.mulf %481, %479 : vector<9x128xf32>
    %483 = arith.addf %463, %482 : vector<9x128xf32>
    %c51 = arith.constant 51 : index
    %484 = memref.load %arg2[%c51] : memref<144xf32, #tpu.memory_space<smem>>
    %485 = vector.broadcast %484 : f32 to vector<9x128xf32>
    %486 = arith.mulf %485, %479 : vector<9x128xf32>
    %487 = arith.addf %467, %486 : vector<9x128xf32>
    %c87 = arith.constant 87 : index
    %488 = memref.load %arg2[%c87] : memref<144xf32, #tpu.memory_space<smem>>
    %489 = vector.broadcast %488 : f32 to vector<9x128xf32>
    %490 = arith.mulf %489, %479 : vector<9x128xf32>
    %491 = arith.addf %471, %490 : vector<9x128xf32>
    %c123 = arith.constant 123 : index
    %492 = memref.load %arg2[%c123] : memref<144xf32, #tpu.memory_space<smem>>
    %493 = vector.broadcast %492 : f32 to vector<9x128xf32>
    %494 = arith.mulf %493, %479 : vector<9x128xf32>
    %495 = arith.addf %475, %494 : vector<9x128xf32>
    %496 = vector.extract_strided_slice %9 {offsets = [1, 0], sizes = [8, 128], strides = [1, 1]} : vector<9x128xf32> to vector<8x128xf32>
    %497 = tpu.concatenate %496, %2 in 0 : vector<8x128xf32>, vector<1x128xf32> -> vector<9x128xf32>
    %498 = vector.extract_strided_slice %497 {offsets = [0, 0], sizes = [9, 127], strides = [1, 1]} : vector<9x128xf32> to vector<9x127xf32>
    %499 = tpu.concatenate %3, %498 in 1 : vector<9x1xf32>, vector<9x127xf32> -> vector<9x128xf32>
    %c24 = arith.constant 24 : index
    %500 = memref.load %arg2[%c24] : memref<144xf32, #tpu.memory_space<smem>>
    %501 = vector.broadcast %500 : f32 to vector<9x128xf32>
    %502 = arith.mulf %501, %499 : vector<9x128xf32>
    %503 = arith.addf %483, %502 : vector<9x128xf32>
    %c60 = arith.constant 60 : index
    %504 = memref.load %arg2[%c60] : memref<144xf32, #tpu.memory_space<smem>>
    %505 = vector.broadcast %504 : f32 to vector<9x128xf32>
    %506 = arith.mulf %505, %499 : vector<9x128xf32>
    %507 = arith.addf %487, %506 : vector<9x128xf32>
    %c96 = arith.constant 96 : index
    %508 = memref.load %arg2[%c96] : memref<144xf32, #tpu.memory_space<smem>>
    %509 = vector.broadcast %508 : f32 to vector<9x128xf32>
    %510 = arith.mulf %509, %499 : vector<9x128xf32>
    %511 = arith.addf %491, %510 : vector<9x128xf32>
    %c132 = arith.constant 132 : index
    %512 = memref.load %arg2[%c132] : memref<144xf32, #tpu.memory_space<smem>>
    %513 = vector.broadcast %512 : f32 to vector<9x128xf32>
    %514 = arith.mulf %513, %499 : vector<9x128xf32>
    %515 = arith.addf %495, %514 : vector<9x128xf32>
    %516 = vector.extract_strided_slice %11 {offsets = [1, 0], sizes = [8, 128], strides = [1, 1]} : vector<9x128xf32> to vector<8x128xf32>
    %517 = tpu.concatenate %516, %2 in 0 : vector<8x128xf32>, vector<1x128xf32> -> vector<9x128xf32>
    %518 = vector.extract_strided_slice %517 {offsets = [0, 0], sizes = [9, 127], strides = [1, 1]} : vector<9x128xf32> to vector<9x127xf32>
    %519 = tpu.concatenate %3, %518 in 1 : vector<9x1xf32>, vector<9x127xf32> -> vector<9x128xf32>
    %c33 = arith.constant 33 : index
    %520 = memref.load %arg2[%c33] : memref<144xf32, #tpu.memory_space<smem>>
    %521 = vector.broadcast %520 : f32 to vector<9x128xf32>
    %522 = arith.mulf %521, %519 : vector<9x128xf32>
    %523 = arith.addf %503, %522 : vector<9x128xf32>
    %c69 = arith.constant 69 : index
    %524 = memref.load %arg2[%c69] : memref<144xf32, #tpu.memory_space<smem>>
    %525 = vector.broadcast %524 : f32 to vector<9x128xf32>
    %526 = arith.mulf %525, %519 : vector<9x128xf32>
    %527 = arith.addf %507, %526 : vector<9x128xf32>
    %c105 = arith.constant 105 : index
    %528 = memref.load %arg2[%c105] : memref<144xf32, #tpu.memory_space<smem>>
    %529 = vector.broadcast %528 : f32 to vector<9x128xf32>
    %530 = arith.mulf %529, %519 : vector<9x128xf32>
    %531 = arith.addf %511, %530 : vector<9x128xf32>
    %c141 = arith.constant 141 : index
    %532 = memref.load %arg2[%c141] : memref<144xf32, #tpu.memory_space<smem>>
    %533 = vector.broadcast %532 : f32 to vector<9x128xf32>
    %534 = arith.mulf %533, %519 : vector<9x128xf32>
    %535 = arith.addf %515, %534 : vector<9x128xf32>
    %536 = vector.extract_strided_slice %5 {offsets = [1, 0], sizes = [8, 128], strides = [1, 1]} : vector<9x128xf32> to vector<8x128xf32>
    %537 = tpu.concatenate %536, %2 in 0 : vector<8x128xf32>, vector<1x128xf32> -> vector<9x128xf32>
    %c7 = arith.constant 7 : index
    %538 = memref.load %arg2[%c7] : memref<144xf32, #tpu.memory_space<smem>>
    %539 = vector.broadcast %538 : f32 to vector<9x128xf32>
    %540 = arith.mulf %539, %537 : vector<9x128xf32>
    %541 = arith.addf %523, %540 : vector<9x128xf32>
    %c43 = arith.constant 43 : index
    %542 = memref.load %arg2[%c43] : memref<144xf32, #tpu.memory_space<smem>>
    %543 = vector.broadcast %542 : f32 to vector<9x128xf32>
    %544 = arith.mulf %543, %537 : vector<9x128xf32>
    %545 = arith.addf %527, %544 : vector<9x128xf32>
    %c79 = arith.constant 79 : index
    %546 = memref.load %arg2[%c79] : memref<144xf32, #tpu.memory_space<smem>>
    %547 = vector.broadcast %546 : f32 to vector<9x128xf32>
    %548 = arith.mulf %547, %537 : vector<9x128xf32>
    %549 = arith.addf %531, %548 : vector<9x128xf32>
    %c115 = arith.constant 115 : index
    %550 = memref.load %arg2[%c115] : memref<144xf32, #tpu.memory_space<smem>>
    %551 = vector.broadcast %550 : f32 to vector<9x128xf32>
    %552 = arith.mulf %551, %537 : vector<9x128xf32>
    %553 = arith.addf %535, %552 : vector<9x128xf32>
    %554 = vector.extract_strided_slice %7 {offsets = [1, 0], sizes = [8, 128], strides = [1, 1]} : vector<9x128xf32> to vector<8x128xf32>
    %555 = tpu.concatenate %554, %2 in 0 : vector<8x128xf32>, vector<1x128xf32> -> vector<9x128xf32>
    %c16 = arith.constant 16 : index
    %556 = memref.load %arg2[%c16] : memref<144xf32, #tpu.memory_space<smem>>
    %557 = vector.broadcast %556 : f32 to vector<9x128xf32>
    %558 = arith.mulf %557, %555 : vector<9x128xf32>
    %559 = arith.addf %541, %558 : vector<9x128xf32>
    %c52 = arith.constant 52 : index
    %560 = memref.load %arg2[%c52] : memref<144xf32, #tpu.memory_space<smem>>
    %561 = vector.broadcast %560 : f32 to vector<9x128xf32>
    %562 = arith.mulf %561, %555 : vector<9x128xf32>
    %563 = arith.addf %545, %562 : vector<9x128xf32>
    %c88 = arith.constant 88 : index
    %564 = memref.load %arg2[%c88] : memref<144xf32, #tpu.memory_space<smem>>
    %565 = vector.broadcast %564 : f32 to vector<9x128xf32>
    %566 = arith.mulf %565, %555 : vector<9x128xf32>
    %567 = arith.addf %549, %566 : vector<9x128xf32>
    %c124 = arith.constant 124 : index
    %568 = memref.load %arg2[%c124] : memref<144xf32, #tpu.memory_space<smem>>
    %569 = vector.broadcast %568 : f32 to vector<9x128xf32>
    %570 = arith.mulf %569, %555 : vector<9x128xf32>
    %571 = arith.addf %553, %570 : vector<9x128xf32>
    %572 = vector.extract_strided_slice %9 {offsets = [1, 0], sizes = [8, 128], strides = [1, 1]} : vector<9x128xf32> to vector<8x128xf32>
    %573 = tpu.concatenate %572, %2 in 0 : vector<8x128xf32>, vector<1x128xf32> -> vector<9x128xf32>
    %c25 = arith.constant 25 : index
    %574 = memref.load %arg2[%c25] : memref<144xf32, #tpu.memory_space<smem>>
    %575 = vector.broadcast %574 : f32 to vector<9x128xf32>
    %576 = arith.mulf %575, %573 : vector<9x128xf32>
    %577 = arith.addf %559, %576 : vector<9x128xf32>
    %c61 = arith.constant 61 : index
    %578 = memref.load %arg2[%c61] : memref<144xf32, #tpu.memory_space<smem>>
    %579 = vector.broadcast %578 : f32 to vector<9x128xf32>
    %580 = arith.mulf %579, %573 : vector<9x128xf32>
    %581 = arith.addf %563, %580 : vector<9x128xf32>
    %c97 = arith.constant 97 : index
    %582 = memref.load %arg2[%c97] : memref<144xf32, #tpu.memory_space<smem>>
    %583 = vector.broadcast %582 : f32 to vector<9x128xf32>
    %584 = arith.mulf %583, %573 : vector<9x128xf32>
    %585 = arith.addf %567, %584 : vector<9x128xf32>
    %c133 = arith.constant 133 : index
    %586 = memref.load %arg2[%c133] : memref<144xf32, #tpu.memory_space<smem>>
    %587 = vector.broadcast %586 : f32 to vector<9x128xf32>
    %588 = arith.mulf %587, %573 : vector<9x128xf32>
    %589 = arith.addf %571, %588 : vector<9x128xf32>
    %590 = vector.extract_strided_slice %11 {offsets = [1, 0], sizes = [8, 128], strides = [1, 1]} : vector<9x128xf32> to vector<8x128xf32>
    %591 = tpu.concatenate %590, %2 in 0 : vector<8x128xf32>, vector<1x128xf32> -> vector<9x128xf32>
    %c34 = arith.constant 34 : index
    %592 = memref.load %arg2[%c34] : memref<144xf32, #tpu.memory_space<smem>>
    %593 = vector.broadcast %592 : f32 to vector<9x128xf32>
    %594 = arith.mulf %593, %591 : vector<9x128xf32>
    %595 = arith.addf %577, %594 : vector<9x128xf32>
    %c70 = arith.constant 70 : index
    %596 = memref.load %arg2[%c70] : memref<144xf32, #tpu.memory_space<smem>>
    %597 = vector.broadcast %596 : f32 to vector<9x128xf32>
    %598 = arith.mulf %597, %591 : vector<9x128xf32>
    %599 = arith.addf %581, %598 : vector<9x128xf32>
    %c106 = arith.constant 106 : index
    %600 = memref.load %arg2[%c106] : memref<144xf32, #tpu.memory_space<smem>>
    %601 = vector.broadcast %600 : f32 to vector<9x128xf32>
    %602 = arith.mulf %601, %591 : vector<9x128xf32>
    %603 = arith.addf %585, %602 : vector<9x128xf32>
    %c142 = arith.constant 142 : index
    %604 = memref.load %arg2[%c142] : memref<144xf32, #tpu.memory_space<smem>>
    %605 = vector.broadcast %604 : f32 to vector<9x128xf32>
    %606 = arith.mulf %605, %591 : vector<9x128xf32>
    %607 = arith.addf %589, %606 : vector<9x128xf32>
    %608 = vector.extract_strided_slice %5 {offsets = [1, 0], sizes = [8, 128], strides = [1, 1]} : vector<9x128xf32> to vector<8x128xf32>
    %609 = tpu.concatenate %608, %2 in 0 : vector<8x128xf32>, vector<1x128xf32> -> vector<9x128xf32>
    %610 = vector.extract_strided_slice %609 {offsets = [0, 1], sizes = [9, 127], strides = [1, 1]} : vector<9x128xf32> to vector<9x127xf32>
    %611 = tpu.concatenate %610, %3 in 1 : vector<9x127xf32>, vector<9x1xf32> -> vector<9x128xf32>
    %c8 = arith.constant 8 : index
    %612 = memref.load %arg2[%c8] : memref<144xf32, #tpu.memory_space<smem>>
    %613 = vector.broadcast %612 : f32 to vector<9x128xf32>
    %614 = arith.mulf %613, %611 : vector<9x128xf32>
    %615 = arith.addf %595, %614 : vector<9x128xf32>
    %c44 = arith.constant 44 : index
    %616 = memref.load %arg2[%c44] : memref<144xf32, #tpu.memory_space<smem>>
    %617 = vector.broadcast %616 : f32 to vector<9x128xf32>
    %618 = arith.mulf %617, %611 : vector<9x128xf32>
    %619 = arith.addf %599, %618 : vector<9x128xf32>
    %c80 = arith.constant 80 : index
    %620 = memref.load %arg2[%c80] : memref<144xf32, #tpu.memory_space<smem>>
    %621 = vector.broadcast %620 : f32 to vector<9x128xf32>
    %622 = arith.mulf %621, %611 : vector<9x128xf32>
    %623 = arith.addf %603, %622 : vector<9x128xf32>
    %c116 = arith.constant 116 : index
    %624 = memref.load %arg2[%c116] : memref<144xf32, #tpu.memory_space<smem>>
    %625 = vector.broadcast %624 : f32 to vector<9x128xf32>
    %626 = arith.mulf %625, %611 : vector<9x128xf32>
    %627 = arith.addf %607, %626 : vector<9x128xf32>
    %628 = vector.extract_strided_slice %7 {offsets = [1, 0], sizes = [8, 128], strides = [1, 1]} : vector<9x128xf32> to vector<8x128xf32>
    %629 = tpu.concatenate %628, %2 in 0 : vector<8x128xf32>, vector<1x128xf32> -> vector<9x128xf32>
    %630 = vector.extract_strided_slice %629 {offsets = [0, 1], sizes = [9, 127], strides = [1, 1]} : vector<9x128xf32> to vector<9x127xf32>
    %631 = tpu.concatenate %630, %3 in 1 : vector<9x127xf32>, vector<9x1xf32> -> vector<9x128xf32>
    %c17 = arith.constant 17 : index
    %632 = memref.load %arg2[%c17] : memref<144xf32, #tpu.memory_space<smem>>
    %633 = vector.broadcast %632 : f32 to vector<9x128xf32>
    %634 = arith.mulf %633, %631 : vector<9x128xf32>
    %635 = arith.addf %615, %634 : vector<9x128xf32>
    %c53 = arith.constant 53 : index
    %636 = memref.load %arg2[%c53] : memref<144xf32, #tpu.memory_space<smem>>
    %637 = vector.broadcast %636 : f32 to vector<9x128xf32>
    %638 = arith.mulf %637, %631 : vector<9x128xf32>
    %639 = arith.addf %619, %638 : vector<9x128xf32>
    %c89 = arith.constant 89 : index
    %640 = memref.load %arg2[%c89] : memref<144xf32, #tpu.memory_space<smem>>
    %641 = vector.broadcast %640 : f32 to vector<9x128xf32>
    %642 = arith.mulf %641, %631 : vector<9x128xf32>
    %643 = arith.addf %623, %642 : vector<9x128xf32>
    %c125 = arith.constant 125 : index
    %644 = memref.load %arg2[%c125] : memref<144xf32, #tpu.memory_space<smem>>
    %645 = vector.broadcast %644 : f32 to vector<9x128xf32>
    %646 = arith.mulf %645, %631 : vector<9x128xf32>
    %647 = arith.addf %627, %646 : vector<9x128xf32>
    %648 = vector.extract_strided_slice %9 {offsets = [1, 0], sizes = [8, 128], strides = [1, 1]} : vector<9x128xf32> to vector<8x128xf32>
    %649 = tpu.concatenate %648, %2 in 0 : vector<8x128xf32>, vector<1x128xf32> -> vector<9x128xf32>
    %650 = vector.extract_strided_slice %649 {offsets = [0, 1], sizes = [9, 127], strides = [1, 1]} : vector<9x128xf32> to vector<9x127xf32>
    %651 = tpu.concatenate %650, %3 in 1 : vector<9x127xf32>, vector<9x1xf32> -> vector<9x128xf32>
    %c26 = arith.constant 26 : index
    %652 = memref.load %arg2[%c26] : memref<144xf32, #tpu.memory_space<smem>>
    %653 = vector.broadcast %652 : f32 to vector<9x128xf32>
    %654 = arith.mulf %653, %651 : vector<9x128xf32>
    %655 = arith.addf %635, %654 : vector<9x128xf32>
    %c62 = arith.constant 62 : index
    %656 = memref.load %arg2[%c62] : memref<144xf32, #tpu.memory_space<smem>>
    %657 = vector.broadcast %656 : f32 to vector<9x128xf32>
    %658 = arith.mulf %657, %651 : vector<9x128xf32>
    %659 = arith.addf %639, %658 : vector<9x128xf32>
    %c98 = arith.constant 98 : index
    %660 = memref.load %arg2[%c98] : memref<144xf32, #tpu.memory_space<smem>>
    %661 = vector.broadcast %660 : f32 to vector<9x128xf32>
    %662 = arith.mulf %661, %651 : vector<9x128xf32>
    %663 = arith.addf %643, %662 : vector<9x128xf32>
    %c134 = arith.constant 134 : index
    %664 = memref.load %arg2[%c134] : memref<144xf32, #tpu.memory_space<smem>>
    %665 = vector.broadcast %664 : f32 to vector<9x128xf32>
    %666 = arith.mulf %665, %651 : vector<9x128xf32>
    %667 = arith.addf %647, %666 : vector<9x128xf32>
    %668 = vector.extract_strided_slice %11 {offsets = [1, 0], sizes = [8, 128], strides = [1, 1]} : vector<9x128xf32> to vector<8x128xf32>
    %669 = tpu.concatenate %668, %2 in 0 : vector<8x128xf32>, vector<1x128xf32> -> vector<9x128xf32>
    %670 = vector.extract_strided_slice %669 {offsets = [0, 1], sizes = [9, 127], strides = [1, 1]} : vector<9x128xf32> to vector<9x127xf32>
    %671 = tpu.concatenate %670, %3 in 1 : vector<9x127xf32>, vector<9x1xf32> -> vector<9x128xf32>
    %c35 = arith.constant 35 : index
    %672 = memref.load %arg2[%c35] : memref<144xf32, #tpu.memory_space<smem>>
    %673 = vector.broadcast %672 : f32 to vector<9x128xf32>
    %674 = arith.mulf %673, %671 : vector<9x128xf32>
    %675 = arith.addf %655, %674 : vector<9x128xf32>
    %c71 = arith.constant 71 : index
    %676 = memref.load %arg2[%c71] : memref<144xf32, #tpu.memory_space<smem>>
    %677 = vector.broadcast %676 : f32 to vector<9x128xf32>
    %678 = arith.mulf %677, %671 : vector<9x128xf32>
    %679 = arith.addf %659, %678 : vector<9x128xf32>
    %c107 = arith.constant 107 : index
    %680 = memref.load %arg2[%c107] : memref<144xf32, #tpu.memory_space<smem>>
    %681 = vector.broadcast %680 : f32 to vector<9x128xf32>
    %682 = arith.mulf %681, %671 : vector<9x128xf32>
    %683 = arith.addf %663, %682 : vector<9x128xf32>
    %c143 = arith.constant 143 : index
    %684 = memref.load %arg2[%c143] : memref<144xf32, #tpu.memory_space<smem>>
    %685 = vector.broadcast %684 : f32 to vector<9x128xf32>
    %686 = arith.mulf %685, %671 : vector<9x128xf32>
    %687 = arith.addf %667, %686 : vector<9x128xf32>
    %cst_25 = arith.constant dense<0.000000e+00> : vector<128xf32>
    %688 = vector.multi_reduction <add>, %675, %cst_25 [0] : vector<9x128xf32> to vector<128xf32>
    %689 = vector.shape_cast %688 : vector<128xf32> to vector<1x128xf32>
    %690 = arith.mulf %675, %675 : vector<9x128xf32>
    %cst_26 = arith.constant dense<0.000000e+00> : vector<128xf32>
    %691 = vector.multi_reduction <add>, %690, %cst_26 [0] : vector<9x128xf32> to vector<128xf32>
    %692 = vector.shape_cast %691 : vector<128xf32> to vector<1x128xf32>
    %cst_27 = arith.constant 0.111111112 : f32
    %693 = vector.broadcast %cst_27 : f32 to vector<1x128xf32>
    %694 = arith.mulf %689, %693 : vector<1x128xf32>
    %cst_28 = arith.constant 0.111111112 : f32
    %695 = vector.broadcast %cst_28 : f32 to vector<1x128xf32>
    %696 = arith.mulf %692, %695 : vector<1x128xf32>
    %697 = arith.mulf %694, %694 : vector<1x128xf32>
    %698 = arith.subf %696, %697 : vector<1x128xf32>
    %cst_29 = arith.constant 0.000000e+00 : f32
    %699 = vector.broadcast %cst_29 : f32 to vector<1x128xf32>
    %700 = arith.maximumf %698, %699 : vector<1x128xf32>
    %cst_30 = arith.constant 9.99999974E-6 : f32
    %701 = vector.broadcast %cst_30 : f32 to vector<1x128xf32>
    %702 = arith.addf %700, %701 : vector<1x128xf32>
    %703 = math.rsqrt %702 : vector<1x128xf32>
    %704 = vector.broadcast %694 : vector<1x128xf32> to vector<9x128xf32>
    %705 = arith.subf %675, %704 : vector<9x128xf32>
    %706 = vector.broadcast %703 : vector<1x128xf32> to vector<9x128xf32>
    %707 = arith.mulf %705, %706 : vector<9x128xf32>
    %708 = vector.broadcast %0 : vector<9x1xf32> to vector<9x128xf32>
    %709 = arith.mulf %707, %708 : vector<9x128xf32>
    %710 = vector.broadcast %1 : vector<9x1xf32> to vector<9x128xf32>
    %711 = arith.addf %709, %710 : vector<9x128xf32>
    %cst_31 = arith.constant 0.000000e+00 : f32
    %712 = vector.broadcast %cst_31 : f32 to vector<9x128xf32>
    %713 = arith.maximumf %711, %712 : vector<9x128xf32>
    %c0_32 = arith.constant 0 : index
    %c0_33 = arith.constant 0 : index
    %c0_34 = arith.constant 0 : index
    %714 = vector.load %arg7[%c0_32, %c0_33, %c0_34] : memref<4x9x128xf32, #tpu.memory_space<vmem>>, vector<1x9x128xf32>
    %715 = vector.shape_cast %714 : vector<1x9x128xf32> to vector<9x128xf32>
    %716 = vector.shape_cast %713 : vector<9x128xf32> to vector<1x9x128xf32>
    tpu.vector_store %arg7[%c0_32, %c0_33, %c0_34], %716 {strides = array<i32>} : memref<4x9x128xf32, #tpu.memory_space<vmem>>, vector<1x9x128xf32>,
    %cst_35 = arith.constant dense<0.000000e+00> : vector<128xf32>
    %717 = vector.multi_reduction <add>, %679, %cst_35 [0] : vector<9x128xf32> to vector<128xf32>
    %718 = vector.shape_cast %717 : vector<128xf32> to vector<1x128xf32>
    %719 = arith.mulf %679, %679 : vector<9x128xf32>
    %cst_36 = arith.constant dense<0.000000e+00> : vector<128xf32>
    %720 = vector.multi_reduction <add>, %719, %cst_36 [0] : vector<9x128xf32> to vector<128xf32>
    %721 = vector.shape_cast %720 : vector<128xf32> to vector<1x128xf32>
    %cst_37 = arith.constant 0.111111112 : f32
    %722 = vector.broadcast %cst_37 : f32 to vector<1x128xf32>
    %723 = arith.mulf %718, %722 : vector<1x128xf32>
    %cst_38 = arith.constant 0.111111112 : f32
    %724 = vector.broadcast %cst_38 : f32 to vector<1x128xf32>
    %725 = arith.mulf %721, %724 : vector<1x128xf32>
    %726 = arith.mulf %723, %723 : vector<1x128xf32>
    %727 = arith.subf %725, %726 : vector<1x128xf32>
    %cst_39 = arith.constant 0.000000e+00 : f32
    %728 = vector.broadcast %cst_39 : f32 to vector<1x128xf32>
    %729 = arith.maximumf %727, %728 : vector<1x128xf32>
    %cst_40 = arith.constant 9.99999974E-6 : f32
    %730 = vector.broadcast %cst_40 : f32 to vector<1x128xf32>
    %731 = arith.addf %729, %730 : vector<1x128xf32>
    %732 = math.rsqrt %731 : vector<1x128xf32>
    %733 = vector.broadcast %723 : vector<1x128xf32> to vector<9x128xf32>
    %734 = arith.subf %679, %733 : vector<9x128xf32>
    %735 = vector.broadcast %732 : vector<1x128xf32> to vector<9x128xf32>
    %736 = arith.mulf %734, %735 : vector<9x128xf32>
    %737 = vector.broadcast %0 : vector<9x1xf32> to vector<9x128xf32>
    %738 = arith.mulf %736, %737 : vector<9x128xf32>
    %739 = vector.broadcast %1 : vector<9x1xf32> to vector<9x128xf32>
    %740 = arith.addf %738, %739 : vector<9x128xf32>
    %cst_41 = arith.constant 0.000000e+00 : f32
    %741 = vector.broadcast %cst_41 : f32 to vector<9x128xf32>
    %742 = arith.maximumf %740, %741 : vector<9x128xf32>
    %c1_42 = arith.constant 1 : index
    %c0_43 = arith.constant 0 : index
    %c0_44 = arith.constant 0 : index
    %743 = vector.load %arg7[%c1_42, %c0_43, %c0_44] : memref<4x9x128xf32, #tpu.memory_space<vmem>>, vector<1x9x128xf32>
    %744 = vector.shape_cast %743 : vector<1x9x128xf32> to vector<9x128xf32>
    %745 = vector.shape_cast %742 : vector<9x128xf32> to vector<1x9x128xf32>
    tpu.vector_store %arg7[%c1_42, %c0_43, %c0_44], %745 {strides = array<i32>} : memref<4x9x128xf32, #tpu.memory_space<vmem>>, vector<1x9x128xf32>,
    %cst_45 = arith.constant dense<0.000000e+00> : vector<128xf32>
    %746 = vector.multi_reduction <add>, %683, %cst_45 [0] : vector<9x128xf32> to vector<128xf32>
    %747 = vector.shape_cast %746 : vector<128xf32> to vector<1x128xf32>
    %748 = arith.mulf %683, %683 : vector<9x128xf32>
    %cst_46 = arith.constant dense<0.000000e+00> : vector<128xf32>
    %749 = vector.multi_reduction <add>, %748, %cst_46 [0] : vector<9x128xf32> to vector<128xf32>
    %750 = vector.shape_cast %749 : vector<128xf32> to vector<1x128xf32>
    %cst_47 = arith.constant 0.111111112 : f32
    %751 = vector.broadcast %cst_47 : f32 to vector<1x128xf32>
    %752 = arith.mulf %747, %751 : vector<1x128xf32>
    %cst_48 = arith.constant 0.111111112 : f32
    %753 = vector.broadcast %cst_48 : f32 to vector<1x128xf32>
    %754 = arith.mulf %750, %753 : vector<1x128xf32>
    %755 = arith.mulf %752, %752 : vector<1x128xf32>
    %756 = arith.subf %754, %755 : vector<1x128xf32>
    %cst_49 = arith.constant 0.000000e+00 : f32
    %757 = vector.broadcast %cst_49 : f32 to vector<1x128xf32>
    %758 = arith.maximumf %756, %757 : vector<1x128xf32>
    %cst_50 = arith.constant 9.99999974E-6 : f32
    %759 = vector.broadcast %cst_50 : f32 to vector<1x128xf32>
    %760 = arith.addf %758, %759 : vector<1x128xf32>
    %761 = math.rsqrt %760 : vector<1x128xf32>
    %762 = vector.broadcast %752 : vector<1x128xf32> to vector<9x128xf32>
    %763 = arith.subf %683, %762 : vector<9x128xf32>
    %764 = vector.broadcast %761 : vector<1x128xf32> to vector<9x128xf32>
    %765 = arith.mulf %763, %764 : vector<9x128xf32>
    %766 = vector.broadcast %0 : vector<9x1xf32> to vector<9x128xf32>
    %767 = arith.mulf %765, %766 : vector<9x128xf32>
    %768 = vector.broadcast %1 : vector<9x1xf32> to vector<9x128xf32>
    %769 = arith.addf %767, %768 : vector<9x128xf32>
    %cst_51 = arith.constant 0.000000e+00 : f32
    %770 = vector.broadcast %cst_51 : f32 to vector<9x128xf32>
    %771 = arith.maximumf %769, %770 : vector<9x128xf32>
    %c2_52 = arith.constant 2 : index
    %c0_53 = arith.constant 0 : index
    %c0_54 = arith.constant 0 : index
    %772 = vector.load %arg7[%c2_52, %c0_53, %c0_54] : memref<4x9x128xf32, #tpu.memory_space<vmem>>, vector<1x9x128xf32>
    %773 = vector.shape_cast %772 : vector<1x9x128xf32> to vector<9x128xf32>
    %774 = vector.shape_cast %771 : vector<9x128xf32> to vector<1x9x128xf32>
    tpu.vector_store %arg7[%c2_52, %c0_53, %c0_54], %774 {strides = array<i32>} : memref<4x9x128xf32, #tpu.memory_space<vmem>>, vector<1x9x128xf32>,
    %cst_55 = arith.constant dense<0.000000e+00> : vector<128xf32>
    %775 = vector.multi_reduction <add>, %687, %cst_55 [0] : vector<9x128xf32> to vector<128xf32>
    %776 = vector.shape_cast %775 : vector<128xf32> to vector<1x128xf32>
    %777 = arith.mulf %687, %687 : vector<9x128xf32>
    %cst_56 = arith.constant dense<0.000000e+00> : vector<128xf32>
    %778 = vector.multi_reduction <add>, %777, %cst_56 [0] : vector<9x128xf32> to vector<128xf32>
    %779 = vector.shape_cast %778 : vector<128xf32> to vector<1x128xf32>
    %cst_57 = arith.constant 0.111111112 : f32
    %780 = vector.broadcast %cst_57 : f32 to vector<1x128xf32>
    %781 = arith.mulf %776, %780 : vector<1x128xf32>
    %cst_58 = arith.constant 0.111111112 : f32
    %782 = vector.broadcast %cst_58 : f32 to vector<1x128xf32>
    %783 = arith.mulf %779, %782 : vector<1x128xf32>
    %784 = arith.mulf %781, %781 : vector<1x128xf32>
    %785 = arith.subf %783, %784 : vector<1x128xf32>
    %cst_59 = arith.constant 0.000000e+00 : f32
    %786 = vector.broadcast %cst_59 : f32 to vector<1x128xf32>
    %787 = arith.maximumf %785, %786 : vector<1x128xf32>
    %cst_60 = arith.constant 9.99999974E-6 : f32
    %788 = vector.broadcast %cst_60 : f32 to vector<1x128xf32>
    %789 = arith.addf %787, %788 : vector<1x128xf32>
    %790 = math.rsqrt %789 : vector<1x128xf32>
    %791 = vector.broadcast %781 : vector<1x128xf32> to vector<9x128xf32>
    %792 = arith.subf %687, %791 : vector<9x128xf32>
    %793 = vector.broadcast %790 : vector<1x128xf32> to vector<9x128xf32>
    %794 = arith.mulf %792, %793 : vector<9x128xf32>
    %795 = vector.broadcast %0 : vector<9x1xf32> to vector<9x128xf32>
    %796 = arith.mulf %794, %795 : vector<9x128xf32>
    %797 = vector.broadcast %1 : vector<9x1xf32> to vector<9x128xf32>
    %798 = arith.addf %796, %797 : vector<9x128xf32>
    %cst_61 = arith.constant 0.000000e+00 : f32
    %799 = vector.broadcast %cst_61 : f32 to vector<9x128xf32>
    %800 = arith.maximumf %798, %799 : vector<9x128xf32>
    %c3_62 = arith.constant 3 : index
    %c0_63 = arith.constant 0 : index
    %c0_64 = arith.constant 0 : index
    %801 = vector.load %arg7[%c3_62, %c0_63, %c0_64] : memref<4x9x128xf32, #tpu.memory_space<vmem>>, vector<1x9x128xf32>
    %802 = vector.shape_cast %801 : vector<1x9x128xf32> to vector<9x128xf32>
    %803 = vector.shape_cast %800 : vector<9x128xf32> to vector<1x9x128xf32>
    tpu.vector_store %arg7[%c3_62, %c0_63, %c0_64], %803 {strides = array<i32>} : memref<4x9x128xf32, #tpu.memory_space<vmem>>, vector<1x9x128xf32>,
    %c0_65 = arith.constant 0 : index
    %c0_66 = arith.constant 0 : index
    %c0_67 = arith.constant 0 : index
    %804 = vector.load %arg7[%c0_65, %c0_66, %c0_67] : memref<4x9x128xf32, #tpu.memory_space<vmem>>, vector<1x9x128xf32>
    %805 = vector.shape_cast %804 : vector<1x9x128xf32> to vector<9x128xf32>
    %c1_68 = arith.constant 1 : index
    %c0_69 = arith.constant 0 : index
    %c0_70 = arith.constant 0 : index
    %806 = vector.load %arg7[%c1_68, %c0_69, %c0_70] : memref<4x9x128xf32, #tpu.memory_space<vmem>>, vector<1x9x128xf32>
    %807 = vector.shape_cast %806 : vector<1x9x128xf32> to vector<9x128xf32>
    %c2_71 = arith.constant 2 : index
    %c0_72 = arith.constant 0 : index
    %c0_73 = arith.constant 0 : index
    %808 = vector.load %arg7[%c2_71, %c0_72, %c0_73] : memref<4x9x128xf32, #tpu.memory_space<vmem>>, vector<1x9x128xf32>
    %809 = vector.shape_cast %808 : vector<1x9x128xf32> to vector<9x128xf32>
    %c3_74 = arith.constant 3 : index
    %c0_75 = arith.constant 0 : index
    %c0_76 = arith.constant 0 : index
    %810 = vector.load %arg7[%c3_74, %c0_75, %c0_76] : memref<4x9x128xf32, #tpu.memory_space<vmem>>, vector<1x9x128xf32>
    %811 = vector.shape_cast %810 : vector<1x9x128xf32> to vector<9x128xf32>
    %cst_77 = arith.constant 0.000000e+00 : f32
    %812 = vector.broadcast %cst_77 : f32 to vector<9x128xf32>
    %cst_78 = arith.constant 0.000000e+00 : f32
    %813 = vector.broadcast %cst_78 : f32 to vector<9x128xf32>
    %cst_79 = arith.constant 0.000000e+00 : f32
    %814 = vector.broadcast %cst_79 : f32 to vector<9x128xf32>
    %cst_80 = arith.constant 0.000000e+00 : f32
    %815 = vector.broadcast %cst_80 : f32 to vector<9x128xf32>
    %816 = vector.extract_strided_slice %805 {offsets = [0, 0], sizes = [8, 128], strides = [1, 1]} : vector<9x128xf32> to vector<8x128xf32>
    %817 = tpu.concatenate %2, %816 in 0 : vector<1x128xf32>, vector<8x128xf32> -> vector<9x128xf32>
    %818 = vector.extract_strided_slice %817 {offsets = [0, 0], sizes = [9, 127], strides = [1, 1]} : vector<9x128xf32> to vector<9x127xf32>
    %819 = tpu.concatenate %3, %818 in 1 : vector<9x1xf32>, vector<9x127xf32> -> vector<9x128xf32>
    %c0_81 = arith.constant 0 : index
    %820 = memref.load %arg3[%c0_81] : memref<144xf32, #tpu.memory_space<smem>>
    %821 = vector.broadcast %820 : f32 to vector<9x128xf32>
    %822 = arith.mulf %821, %819 : vector<9x128xf32>
    %823 = arith.addf %812, %822 : vector<9x128xf32>
    %c36_82 = arith.constant 36 : index
    %824 = memref.load %arg3[%c36_82] : memref<144xf32, #tpu.memory_space<smem>>
    %825 = vector.broadcast %824 : f32 to vector<9x128xf32>
    %826 = arith.mulf %825, %819 : vector<9x128xf32>
    %827 = arith.addf %813, %826 : vector<9x128xf32>
    %c72_83 = arith.constant 72 : index
    %828 = memref.load %arg3[%c72_83] : memref<144xf32, #tpu.memory_space<smem>>
    %829 = vector.broadcast %828 : f32 to vector<9x128xf32>
    %830 = arith.mulf %829, %819 : vector<9x128xf32>
    %831 = arith.addf %814, %830 : vector<9x128xf32>
    %c108_84 = arith.constant 108 : index
    %832 = memref.load %arg3[%c108_84] : memref<144xf32, #tpu.memory_space<smem>>
    %833 = vector.broadcast %832 : f32 to vector<9x128xf32>
    %834 = arith.mulf %833, %819 : vector<9x128xf32>
    %835 = arith.addf %815, %834 : vector<9x128xf32>
    %836 = vector.extract_strided_slice %807 {offsets = [0, 0], sizes = [8, 128], strides = [1, 1]} : vector<9x128xf32> to vector<8x128xf32>
    %837 = tpu.concatenate %2, %836 in 0 : vector<1x128xf32>, vector<8x128xf32> -> vector<9x128xf32>
    %838 = vector.extract_strided_slice %837 {offsets = [0, 0], sizes = [9, 127], strides = [1, 1]} : vector<9x128xf32> to vector<9x127xf32>
    %839 = tpu.concatenate %3, %838 in 1 : vector<9x1xf32>, vector<9x127xf32> -> vector<9x128xf32>
    %c9_85 = arith.constant 9 : index
    %840 = memref.load %arg3[%c9_85] : memref<144xf32, #tpu.memory_space<smem>>
    %841 = vector.broadcast %840 : f32 to vector<9x128xf32>
    %842 = arith.mulf %841, %839 : vector<9x128xf32>
    %843 = arith.addf %823, %842 : vector<9x128xf32>
    %c45_86 = arith.constant 45 : index
    %844 = memref.load %arg3[%c45_86] : memref<144xf32, #tpu.memory_space<smem>>
    %845 = vector.broadcast %844 : f32 to vector<9x128xf32>
    %846 = arith.mulf %845, %839 : vector<9x128xf32>
    %847 = arith.addf %827, %846 : vector<9x128xf32>
    %c81_87 = arith.constant 81 : index
    %848 = memref.load %arg3[%c81_87] : memref<144xf32, #tpu.memory_space<smem>>
    %849 = vector.broadcast %848 : f32 to vector<9x128xf32>
    %850 = arith.mulf %849, %839 : vector<9x128xf32>
    %851 = arith.addf %831, %850 : vector<9x128xf32>
    %c117_88 = arith.constant 117 : index
    %852 = memref.load %arg3[%c117_88] : memref<144xf32, #tpu.memory_space<smem>>
    %853 = vector.broadcast %852 : f32 to vector<9x128xf32>
    %854 = arith.mulf %853, %839 : vector<9x128xf32>
    %855 = arith.addf %835, %854 : vector<9x128xf32>
    %856 = vector.extract_strided_slice %809 {offsets = [0, 0], sizes = [8, 128], strides = [1, 1]} : vector<9x128xf32> to vector<8x128xf32>
    %857 = tpu.concatenate %2, %856 in 0 : vector<1x128xf32>, vector<8x128xf32> -> vector<9x128xf32>
    %858 = vector.extract_strided_slice %857 {offsets = [0, 0], sizes = [9, 127], strides = [1, 1]} : vector<9x128xf32> to vector<9x127xf32>
    %859 = tpu.concatenate %3, %858 in 1 : vector<9x1xf32>, vector<9x127xf32> -> vector<9x128xf32>
    %c18_89 = arith.constant 18 : index
    %860 = memref.load %arg3[%c18_89] : memref<144xf32, #tpu.memory_space<smem>>
    %861 = vector.broadcast %860 : f32 to vector<9x128xf32>
    %862 = arith.mulf %861, %859 : vector<9x128xf32>
    %863 = arith.addf %843, %862 : vector<9x128xf32>
    %c54_90 = arith.constant 54 : index
    %864 = memref.load %arg3[%c54_90] : memref<144xf32, #tpu.memory_space<smem>>
    %865 = vector.broadcast %864 : f32 to vector<9x128xf32>
    %866 = arith.mulf %865, %859 : vector<9x128xf32>
    %867 = arith.addf %847, %866 : vector<9x128xf32>
    %c90_91 = arith.constant 90 : index
    %868 = memref.load %arg3[%c90_91] : memref<144xf32, #tpu.memory_space<smem>>
    %869 = vector.broadcast %868 : f32 to vector<9x128xf32>
    %870 = arith.mulf %869, %859 : vector<9x128xf32>
    %871 = arith.addf %851, %870 : vector<9x128xf32>
    %c126_92 = arith.constant 126 : index
    %872 = memref.load %arg3[%c126_92] : memref<144xf32, #tpu.memory_space<smem>>
    %873 = vector.broadcast %872 : f32 to vector<9x128xf32>
    %874 = arith.mulf %873, %859 : vector<9x128xf32>
    %875 = arith.addf %855, %874 : vector<9x128xf32>
    %876 = vector.extract_strided_slice %811 {offsets = [0, 0], sizes = [8, 128], strides = [1, 1]} : vector<9x128xf32> to vector<8x128xf32>
    %877 = tpu.concatenate %2, %876 in 0 : vector<1x128xf32>, vector<8x128xf32> -> vector<9x128xf32>
    %878 = vector.extract_strided_slice %877 {offsets = [0, 0], sizes = [9, 127], strides = [1, 1]} : vector<9x128xf32> to vector<9x127xf32>
    %879 = tpu.concatenate %3, %878 in 1 : vector<9x1xf32>, vector<9x127xf32> -> vector<9x128xf32>
    %c27_93 = arith.constant 27 : index
    %880 = memref.load %arg3[%c27_93] : memref<144xf32, #tpu.memory_space<smem>>
    %881 = vector.broadcast %880 : f32 to vector<9x128xf32>
    %882 = arith.mulf %881, %879 : vector<9x128xf32>
    %883 = arith.addf %863, %882 : vector<9x128xf32>
    %c63_94 = arith.constant 63 : index
    %884 = memref.load %arg3[%c63_94] : memref<144xf32, #tpu.memory_space<smem>>
    %885 = vector.broadcast %884 : f32 to vector<9x128xf32>
    %886 = arith.mulf %885, %879 : vector<9x128xf32>
    %887 = arith.addf %867, %886 : vector<9x128xf32>
    %c99_95 = arith.constant 99 : index
    %888 = memref.load %arg3[%c99_95] : memref<144xf32, #tpu.memory_space<smem>>
    %889 = vector.broadcast %888 : f32 to vector<9x128xf32>
    %890 = arith.mulf %889, %879 : vector<9x128xf32>
    %891 = arith.addf %871, %890 : vector<9x128xf32>
    %c135_96 = arith.constant 135 : index
    %892 = memref.load %arg3[%c135_96] : memref<144xf32, #tpu.memory_space<smem>>
    %893 = vector.broadcast %892 : f32 to vector<9x128xf32>
    %894 = arith.mulf %893, %879 : vector<9x128xf32>
    %895 = arith.addf %875, %894 : vector<9x128xf32>
    %896 = vector.extract_strided_slice %805 {offsets = [0, 0], sizes = [8, 128], strides = [1, 1]} : vector<9x128xf32> to vector<8x128xf32>
    %897 = tpu.concatenate %2, %896 in 0 : vector<1x128xf32>, vector<8x128xf32> -> vector<9x128xf32>
    %c1_97 = arith.constant 1 : index
    %898 = memref.load %arg3[%c1_97] : memref<144xf32, #tpu.memory_space<smem>>
    %899 = vector.broadcast %898 : f32 to vector<9x128xf32>
    %900 = arith.mulf %899, %897 : vector<9x128xf32>
    %901 = arith.addf %883, %900 : vector<9x128xf32>
    %c37_98 = arith.constant 37 : index
    %902 = memref.load %arg3[%c37_98] : memref<144xf32, #tpu.memory_space<smem>>
    %903 = vector.broadcast %902 : f32 to vector<9x128xf32>
    %904 = arith.mulf %903, %897 : vector<9x128xf32>
    %905 = arith.addf %887, %904 : vector<9x128xf32>
    %c73_99 = arith.constant 73 : index
    %906 = memref.load %arg3[%c73_99] : memref<144xf32, #tpu.memory_space<smem>>
    %907 = vector.broadcast %906 : f32 to vector<9x128xf32>
    %908 = arith.mulf %907, %897 : vector<9x128xf32>
    %909 = arith.addf %891, %908 : vector<9x128xf32>
    %c109_100 = arith.constant 109 : index
    %910 = memref.load %arg3[%c109_100] : memref<144xf32, #tpu.memory_space<smem>>
    %911 = vector.broadcast %910 : f32 to vector<9x128xf32>
    %912 = arith.mulf %911, %897 : vector<9x128xf32>
    %913 = arith.addf %895, %912 : vector<9x128xf32>
    %914 = vector.extract_strided_slice %807 {offsets = [0, 0], sizes = [8, 128], strides = [1, 1]} : vector<9x128xf32> to vector<8x128xf32>
    %915 = tpu.concatenate %2, %914 in 0 : vector<1x128xf32>, vector<8x128xf32> -> vector<9x128xf32>
    %c10_101 = arith.constant 10 : index
    %916 = memref.load %arg3[%c10_101] : memref<144xf32, #tpu.memory_space<smem>>
    %917 = vector.broadcast %916 : f32 to vector<9x128xf32>
    %918 = arith.mulf %917, %915 : vector<9x128xf32>
    %919 = arith.addf %901, %918 : vector<9x128xf32>
    %c46_102 = arith.constant 46 : index
    %920 = memref.load %arg3[%c46_102] : memref<144xf32, #tpu.memory_space<smem>>
    %921 = vector.broadcast %920 : f32 to vector<9x128xf32>
    %922 = arith.mulf %921, %915 : vector<9x128xf32>
    %923 = arith.addf %905, %922 : vector<9x128xf32>
    %c82_103 = arith.constant 82 : index
    %924 = memref.load %arg3[%c82_103] : memref<144xf32, #tpu.memory_space<smem>>
    %925 = vector.broadcast %924 : f32 to vector<9x128xf32>
    %926 = arith.mulf %925, %915 : vector<9x128xf32>
    %927 = arith.addf %909, %926 : vector<9x128xf32>
    %c118_104 = arith.constant 118 : index
    %928 = memref.load %arg3[%c118_104] : memref<144xf32, #tpu.memory_space<smem>>
    %929 = vector.broadcast %928 : f32 to vector<9x128xf32>
    %930 = arith.mulf %929, %915 : vector<9x128xf32>
    %931 = arith.addf %913, %930 : vector<9x128xf32>
    %932 = vector.extract_strided_slice %809 {offsets = [0, 0], sizes = [8, 128], strides = [1, 1]} : vector<9x128xf32> to vector<8x128xf32>
    %933 = tpu.concatenate %2, %932 in 0 : vector<1x128xf32>, vector<8x128xf32> -> vector<9x128xf32>
    %c19_105 = arith.constant 19 : index
    %934 = memref.load %arg3[%c19_105] : memref<144xf32, #tpu.memory_space<smem>>
    %935 = vector.broadcast %934 : f32 to vector<9x128xf32>
    %936 = arith.mulf %935, %933 : vector<9x128xf32>
    %937 = arith.addf %919, %936 : vector<9x128xf32>
    %c55_106 = arith.constant 55 : index
    %938 = memref.load %arg3[%c55_106] : memref<144xf32, #tpu.memory_space<smem>>
    %939 = vector.broadcast %938 : f32 to vector<9x128xf32>
    %940 = arith.mulf %939, %933 : vector<9x128xf32>
    %941 = arith.addf %923, %940 : vector<9x128xf32>
    %c91_107 = arith.constant 91 : index
    %942 = memref.load %arg3[%c91_107] : memref<144xf32, #tpu.memory_space<smem>>
    %943 = vector.broadcast %942 : f32 to vector<9x128xf32>
    %944 = arith.mulf %943, %933 : vector<9x128xf32>
    %945 = arith.addf %927, %944 : vector<9x128xf32>
    %c127_108 = arith.constant 127 : index
    %946 = memref.load %arg3[%c127_108] : memref<144xf32, #tpu.memory_space<smem>>
    %947 = vector.broadcast %946 : f32 to vector<9x128xf32>
    %948 = arith.mulf %947, %933 : vector<9x128xf32>
    %949 = arith.addf %931, %948 : vector<9x128xf32>
    %950 = vector.extract_strided_slice %811 {offsets = [0, 0], sizes = [8, 128], strides = [1, 1]} : vector<9x128xf32> to vector<8x128xf32>
    %951 = tpu.concatenate %2, %950 in 0 : vector<1x128xf32>, vector<8x128xf32> -> vector<9x128xf32>
    %c28_109 = arith.constant 28 : index
    %952 = memref.load %arg3[%c28_109] : memref<144xf32, #tpu.memory_space<smem>>
    %953 = vector.broadcast %952 : f32 to vector<9x128xf32>
    %954 = arith.mulf %953, %951 : vector<9x128xf32>
    %955 = arith.addf %937, %954 : vector<9x128xf32>
    %c64_110 = arith.constant 64 : index
    %956 = memref.load %arg3[%c64_110] : memref<144xf32, #tpu.memory_space<smem>>
    %957 = vector.broadcast %956 : f32 to vector<9x128xf32>
    %958 = arith.mulf %957, %951 : vector<9x128xf32>
    %959 = arith.addf %941, %958 : vector<9x128xf32>
    %c100_111 = arith.constant 100 : index
    %960 = memref.load %arg3[%c100_111] : memref<144xf32, #tpu.memory_space<smem>>
    %961 = vector.broadcast %960 : f32 to vector<9x128xf32>
    %962 = arith.mulf %961, %951 : vector<9x128xf32>
    %963 = arith.addf %945, %962 : vector<9x128xf32>
    %c136_112 = arith.constant 136 : index
    %964 = memref.load %arg3[%c136_112] : memref<144xf32, #tpu.memory_space<smem>>
    %965 = vector.broadcast %964 : f32 to vector<9x128xf32>
    %966 = arith.mulf %965, %951 : vector<9x128xf32>
    %967 = arith.addf %949, %966 : vector<9x128xf32>
    %968 = vector.extract_strided_slice %805 {offsets = [0, 0], sizes = [8, 128], strides = [1, 1]} : vector<9x128xf32> to vector<8x128xf32>
    %969 = tpu.concatenate %2, %968 in 0 : vector<1x128xf32>, vector<8x128xf32> -> vector<9x128xf32>
    %970 = vector.extract_strided_slice %969 {offsets = [0, 1], sizes = [9, 127], strides = [1, 1]} : vector<9x128xf32> to vector<9x127xf32>
    %971 = tpu.concatenate %970, %3 in 1 : vector<9x127xf32>, vector<9x1xf32> -> vector<9x128xf32>
    %c2_113 = arith.constant 2 : index
    %972 = memref.load %arg3[%c2_113] : memref<144xf32, #tpu.memory_space<smem>>
    %973 = vector.broadcast %972 : f32 to vector<9x128xf32>
    %974 = arith.mulf %973, %971 : vector<9x128xf32>
    %975 = arith.addf %955, %974 : vector<9x128xf32>
    %c38_114 = arith.constant 38 : index
    %976 = memref.load %arg3[%c38_114] : memref<144xf32, #tpu.memory_space<smem>>
    %977 = vector.broadcast %976 : f32 to vector<9x128xf32>
    %978 = arith.mulf %977, %971 : vector<9x128xf32>
    %979 = arith.addf %959, %978 : vector<9x128xf32>
    %c74_115 = arith.constant 74 : index
    %980 = memref.load %arg3[%c74_115] : memref<144xf32, #tpu.memory_space<smem>>
    %981 = vector.broadcast %980 : f32 to vector<9x128xf32>
    %982 = arith.mulf %981, %971 : vector<9x128xf32>
    %983 = arith.addf %963, %982 : vector<9x128xf32>
    %c110_116 = arith.constant 110 : index
    %984 = memref.load %arg3[%c110_116] : memref<144xf32, #tpu.memory_space<smem>>
    %985 = vector.broadcast %984 : f32 to vector<9x128xf32>
    %986 = arith.mulf %985, %971 : vector<9x128xf32>
    %987 = arith.addf %967, %986 : vector<9x128xf32>
    %988 = vector.extract_strided_slice %807 {offsets = [0, 0], sizes = [8, 128], strides = [1, 1]} : vector<9x128xf32> to vector<8x128xf32>
    %989 = tpu.concatenate %2, %988 in 0 : vector<1x128xf32>, vector<8x128xf32> -> vector<9x128xf32>
    %990 = vector.extract_strided_slice %989 {offsets = [0, 1], sizes = [9, 127], strides = [1, 1]} : vector<9x128xf32> to vector<9x127xf32>
    %991 = tpu.concatenate %990, %3 in 1 : vector<9x127xf32>, vector<9x1xf32> -> vector<9x128xf32>
    %c11_117 = arith.constant 11 : index
    %992 = memref.load %arg3[%c11_117] : memref<144xf32, #tpu.memory_space<smem>>
    %993 = vector.broadcast %992 : f32 to vector<9x128xf32>
    %994 = arith.mulf %993, %991 : vector<9x128xf32>
    %995 = arith.addf %975, %994 : vector<9x128xf32>
    %c47_118 = arith.constant 47 : index
    %996 = memref.load %arg3[%c47_118] : memref<144xf32, #tpu.memory_space<smem>>
    %997 = vector.broadcast %996 : f32 to vector<9x128xf32>
    %998 = arith.mulf %997, %991 : vector<9x128xf32>
    %999 = arith.addf %979, %998 : vector<9x128xf32>
    %c83_119 = arith.constant 83 : index
    %1000 = memref.load %arg3[%c83_119] : memref<144xf32, #tpu.memory_space<smem>>
    %1001 = vector.broadcast %1000 : f32 to vector<9x128xf32>
    %1002 = arith.mulf %1001, %991 : vector<9x128xf32>
    %1003 = arith.addf %983, %1002 : vector<9x128xf32>
    %c119_120 = arith.constant 119 : index
    %1004 = memref.load %arg3[%c119_120] : memref<144xf32, #tpu.memory_space<smem>>
    %1005 = vector.broadcast %1004 : f32 to vector<9x128xf32>
    %1006 = arith.mulf %1005, %991 : vector<9x128xf32>
    %1007 = arith.addf %987, %1006 : vector<9x128xf32>
    %1008 = vector.extract_strided_slice %809 {offsets = [0, 0], sizes = [8, 128], strides = [1, 1]} : vector<9x128xf32> to vector<8x128xf32>
    %1009 = tpu.concatenate %2, %1008 in 0 : vector<1x128xf32>, vector<8x128xf32> -> vector<9x128xf32>
    %1010 = vector.extract_strided_slice %1009 {offsets = [0, 1], sizes = [9, 127], strides = [1, 1]} : vector<9x128xf32> to vector<9x127xf32>
    %1011 = tpu.concatenate %1010, %3 in 1 : vector<9x127xf32>, vector<9x1xf32> -> vector<9x128xf32>
    %c20_121 = arith.constant 20 : index
    %1012 = memref.load %arg3[%c20_121] : memref<144xf32, #tpu.memory_space<smem>>
    %1013 = vector.broadcast %1012 : f32 to vector<9x128xf32>
    %1014 = arith.mulf %1013, %1011 : vector<9x128xf32>
    %1015 = arith.addf %995, %1014 : vector<9x128xf32>
    %c56_122 = arith.constant 56 : index
    %1016 = memref.load %arg3[%c56_122] : memref<144xf32, #tpu.memory_space<smem>>
    %1017 = vector.broadcast %1016 : f32 to vector<9x128xf32>
    %1018 = arith.mulf %1017, %1011 : vector<9x128xf32>
    %1019 = arith.addf %999, %1018 : vector<9x128xf32>
    %c92_123 = arith.constant 92 : index
    %1020 = memref.load %arg3[%c92_123] : memref<144xf32, #tpu.memory_space<smem>>
    %1021 = vector.broadcast %1020 : f32 to vector<9x128xf32>
    %1022 = arith.mulf %1021, %1011 : vector<9x128xf32>
    %1023 = arith.addf %1003, %1022 : vector<9x128xf32>
    %c128_124 = arith.constant 128 : index
    %1024 = memref.load %arg3[%c128_124] : memref<144xf32, #tpu.memory_space<smem>>
    %1025 = vector.broadcast %1024 : f32 to vector<9x128xf32>
    %1026 = arith.mulf %1025, %1011 : vector<9x128xf32>
    %1027 = arith.addf %1007, %1026 : vector<9x128xf32>
    %1028 = vector.extract_strided_slice %811 {offsets = [0, 0], sizes = [8, 128], strides = [1, 1]} : vector<9x128xf32> to vector<8x128xf32>
    %1029 = tpu.concatenate %2, %1028 in 0 : vector<1x128xf32>, vector<8x128xf32> -> vector<9x128xf32>
    %1030 = vector.extract_strided_slice %1029 {offsets = [0, 1], sizes = [9, 127], strides = [1, 1]} : vector<9x128xf32> to vector<9x127xf32>
    %1031 = tpu.concatenate %1030, %3 in 1 : vector<9x127xf32>, vector<9x1xf32> -> vector<9x128xf32>
    %c29_125 = arith.constant 29 : index
    %1032 = memref.load %arg3[%c29_125] : memref<144xf32, #tpu.memory_space<smem>>
    %1033 = vector.broadcast %1032 : f32 to vector<9x128xf32>
    %1034 = arith.mulf %1033, %1031 : vector<9x128xf32>
    %1035 = arith.addf %1015, %1034 : vector<9x128xf32>
    %c65_126 = arith.constant 65 : index
    %1036 = memref.load %arg3[%c65_126] : memref<144xf32, #tpu.memory_space<smem>>
    %1037 = vector.broadcast %1036 : f32 to vector<9x128xf32>
    %1038 = arith.mulf %1037, %1031 : vector<9x128xf32>
    %1039 = arith.addf %1019, %1038 : vector<9x128xf32>
    %c101_127 = arith.constant 101 : index
    %1040 = memref.load %arg3[%c101_127] : memref<144xf32, #tpu.memory_space<smem>>
    %1041 = vector.broadcast %1040 : f32 to vector<9x128xf32>
    %1042 = arith.mulf %1041, %1031 : vector<9x128xf32>
    %1043 = arith.addf %1023, %1042 : vector<9x128xf32>
    %c137_128 = arith.constant 137 : index
    %1044 = memref.load %arg3[%c137_128] : memref<144xf32, #tpu.memory_space<smem>>
    %1045 = vector.broadcast %1044 : f32 to vector<9x128xf32>
    %1046 = arith.mulf %1045, %1031 : vector<9x128xf32>
    %1047 = arith.addf %1027, %1046 : vector<9x128xf32>
    %1048 = vector.extract_strided_slice %805 {offsets = [0, 0], sizes = [9, 127], strides = [1, 1]} : vector<9x128xf32> to vector<9x127xf32>
    %1049 = tpu.concatenate %3, %1048 in 1 : vector<9x1xf32>, vector<9x127xf32> -> vector<9x128xf32>
    %c3_129 = arith.constant 3 : index
    %1050 = memref.load %arg3[%c3_129] : memref<144xf32, #tpu.memory_space<smem>>
    %1051 = vector.broadcast %1050 : f32 to vector<9x128xf32>
    %1052 = arith.mulf %1051, %1049 : vector<9x128xf32>
    %1053 = arith.addf %1035, %1052 : vector<9x128xf32>
    %c39_130 = arith.constant 39 : index
    %1054 = memref.load %arg3[%c39_130] : memref<144xf32, #tpu.memory_space<smem>>
    %1055 = vector.broadcast %1054 : f32 to vector<9x128xf32>
    %1056 = arith.mulf %1055, %1049 : vector<9x128xf32>
    %1057 = arith.addf %1039, %1056 : vector<9x128xf32>
    %c75_131 = arith.constant 75 : index
    %1058 = memref.load %arg3[%c75_131] : memref<144xf32, #tpu.memory_space<smem>>
    %1059 = vector.broadcast %1058 : f32 to vector<9x128xf32>
    %1060 = arith.mulf %1059, %1049 : vector<9x128xf32>
    %1061 = arith.addf %1043, %1060 : vector<9x128xf32>
    %c111_132 = arith.constant 111 : index
    %1062 = memref.load %arg3[%c111_132] : memref<144xf32, #tpu.memory_space<smem>>
    %1063 = vector.broadcast %1062 : f32 to vector<9x128xf32>
    %1064 = arith.mulf %1063, %1049 : vector<9x128xf32>
    %1065 = arith.addf %1047, %1064 : vector<9x128xf32>
    %1066 = vector.extract_strided_slice %807 {offsets = [0, 0], sizes = [9, 127], strides = [1, 1]} : vector<9x128xf32> to vector<9x127xf32>
    %1067 = tpu.concatenate %3, %1066 in 1 : vector<9x1xf32>, vector<9x127xf32> -> vector<9x128xf32>
    %c12_133 = arith.constant 12 : index
    %1068 = memref.load %arg3[%c12_133] : memref<144xf32, #tpu.memory_space<smem>>
    %1069 = vector.broadcast %1068 : f32 to vector<9x128xf32>
    %1070 = arith.mulf %1069, %1067 : vector<9x128xf32>
    %1071 = arith.addf %1053, %1070 : vector<9x128xf32>
    %c48_134 = arith.constant 48 : index
    %1072 = memref.load %arg3[%c48_134] : memref<144xf32, #tpu.memory_space<smem>>
    %1073 = vector.broadcast %1072 : f32 to vector<9x128xf32>
    %1074 = arith.mulf %1073, %1067 : vector<9x128xf32>
    %1075 = arith.addf %1057, %1074 : vector<9x128xf32>
    %c84_135 = arith.constant 84 : index
    %1076 = memref.load %arg3[%c84_135] : memref<144xf32, #tpu.memory_space<smem>>
    %1077 = vector.broadcast %1076 : f32 to vector<9x128xf32>
    %1078 = arith.mulf %1077, %1067 : vector<9x128xf32>
    %1079 = arith.addf %1061, %1078 : vector<9x128xf32>
    %c120_136 = arith.constant 120 : index
    %1080 = memref.load %arg3[%c120_136] : memref<144xf32, #tpu.memory_space<smem>>
    %1081 = vector.broadcast %1080 : f32 to vector<9x128xf32>
    %1082 = arith.mulf %1081, %1067 : vector<9x128xf32>
    %1083 = arith.addf %1065, %1082 : vector<9x128xf32>
    %1084 = vector.extract_strided_slice %809 {offsets = [0, 0], sizes = [9, 127], strides = [1, 1]} : vector<9x128xf32> to vector<9x127xf32>
    %1085 = tpu.concatenate %3, %1084 in 1 : vector<9x1xf32>, vector<9x127xf32> -> vector<9x128xf32>
    %c21_137 = arith.constant 21 : index
    %1086 = memref.load %arg3[%c21_137] : memref<144xf32, #tpu.memory_space<smem>>
    %1087 = vector.broadcast %1086 : f32 to vector<9x128xf32>
    %1088 = arith.mulf %1087, %1085 : vector<9x128xf32>
    %1089 = arith.addf %1071, %1088 : vector<9x128xf32>
    %c57_138 = arith.constant 57 : index
    %1090 = memref.load %arg3[%c57_138] : memref<144xf32, #tpu.memory_space<smem>>
    %1091 = vector.broadcast %1090 : f32 to vector<9x128xf32>
    %1092 = arith.mulf %1091, %1085 : vector<9x128xf32>
    %1093 = arith.addf %1075, %1092 : vector<9x128xf32>
    %c93_139 = arith.constant 93 : index
    %1094 = memref.load %arg3[%c93_139] : memref<144xf32, #tpu.memory_space<smem>>
    %1095 = vector.broadcast %1094 : f32 to vector<9x128xf32>
    %1096 = arith.mulf %1095, %1085 : vector<9x128xf32>
    %1097 = arith.addf %1079, %1096 : vector<9x128xf32>
    %c129_140 = arith.constant 129 : index
    %1098 = memref.load %arg3[%c129_140] : memref<144xf32, #tpu.memory_space<smem>>
    %1099 = vector.broadcast %1098 : f32 to vector<9x128xf32>
    %1100 = arith.mulf %1099, %1085 : vector<9x128xf32>
    %1101 = arith.addf %1083, %1100 : vector<9x128xf32>
    %1102 = vector.extract_strided_slice %811 {offsets = [0, 0], sizes = [9, 127], strides = [1, 1]} : vector<9x128xf32> to vector<9x127xf32>
    %1103 = tpu.concatenate %3, %1102 in 1 : vector<9x1xf32>, vector<9x127xf32> -> vector<9x128xf32>
    %c30_141 = arith.constant 30 : index
    %1104 = memref.load %arg3[%c30_141] : memref<144xf32, #tpu.memory_space<smem>>
    %1105 = vector.broadcast %1104 : f32 to vector<9x128xf32>
    %1106 = arith.mulf %1105, %1103 : vector<9x128xf32>
    %1107 = arith.addf %1089, %1106 : vector<9x128xf32>
    %c66_142 = arith.constant 66 : index
    %1108 = memref.load %arg3[%c66_142] : memref<144xf32, #tpu.memory_space<smem>>
    %1109 = vector.broadcast %1108 : f32 to vector<9x128xf32>
    %1110 = arith.mulf %1109, %1103 : vector<9x128xf32>
    %1111 = arith.addf %1093, %1110 : vector<9x128xf32>
    %c102_143 = arith.constant 102 : index
    %1112 = memref.load %arg3[%c102_143] : memref<144xf32, #tpu.memory_space<smem>>
    %1113 = vector.broadcast %1112 : f32 to vector<9x128xf32>
    %1114 = arith.mulf %1113, %1103 : vector<9x128xf32>
    %1115 = arith.addf %1097, %1114 : vector<9x128xf32>
    %c138_144 = arith.constant 138 : index
    %1116 = memref.load %arg3[%c138_144] : memref<144xf32, #tpu.memory_space<smem>>
    %1117 = vector.broadcast %1116 : f32 to vector<9x128xf32>
    %1118 = arith.mulf %1117, %1103 : vector<9x128xf32>
    %1119 = arith.addf %1101, %1118 : vector<9x128xf32>
    %c4_145 = arith.constant 4 : index
    %1120 = memref.load %arg3[%c4_145] : memref<144xf32, #tpu.memory_space<smem>>
    %1121 = vector.broadcast %1120 : f32 to vector<9x128xf32>
    %1122 = arith.mulf %1121, %805 : vector<9x128xf32>
    %1123 = arith.addf %1107, %1122 : vector<9x128xf32>
    %c40_146 = arith.constant 40 : index
    %1124 = memref.load %arg3[%c40_146] : memref<144xf32, #tpu.memory_space<smem>>
    %1125 = vector.broadcast %1124 : f32 to vector<9x128xf32>
    %1126 = arith.mulf %1125, %805 : vector<9x128xf32>
    %1127 = arith.addf %1111, %1126 : vector<9x128xf32>
    %c76_147 = arith.constant 76 : index
    %1128 = memref.load %arg3[%c76_147] : memref<144xf32, #tpu.memory_space<smem>>
    %1129 = vector.broadcast %1128 : f32 to vector<9x128xf32>
    %1130 = arith.mulf %1129, %805 : vector<9x128xf32>
    %1131 = arith.addf %1115, %1130 : vector<9x128xf32>
    %c112_148 = arith.constant 112 : index
    %1132 = memref.load %arg3[%c112_148] : memref<144xf32, #tpu.memory_space<smem>>
    %1133 = vector.broadcast %1132 : f32 to vector<9x128xf32>
    %1134 = arith.mulf %1133, %805 : vector<9x128xf32>
    %1135 = arith.addf %1119, %1134 : vector<9x128xf32>
    %c13_149 = arith.constant 13 : index
    %1136 = memref.load %arg3[%c13_149] : memref<144xf32, #tpu.memory_space<smem>>
    %1137 = vector.broadcast %1136 : f32 to vector<9x128xf32>
    %1138 = arith.mulf %1137, %807 : vector<9x128xf32>
    %1139 = arith.addf %1123, %1138 : vector<9x128xf32>
    %c49_150 = arith.constant 49 : index
    %1140 = memref.load %arg3[%c49_150] : memref<144xf32, #tpu.memory_space<smem>>
    %1141 = vector.broadcast %1140 : f32 to vector<9x128xf32>
    %1142 = arith.mulf %1141, %807 : vector<9x128xf32>
    %1143 = arith.addf %1127, %1142 : vector<9x128xf32>
    %c85_151 = arith.constant 85 : index
    %1144 = memref.load %arg3[%c85_151] : memref<144xf32, #tpu.memory_space<smem>>
    %1145 = vector.broadcast %1144 : f32 to vector<9x128xf32>
    %1146 = arith.mulf %1145, %807 : vector<9x128xf32>
    %1147 = arith.addf %1131, %1146 : vector<9x128xf32>
    %c121_152 = arith.constant 121 : index
    %1148 = memref.load %arg3[%c121_152] : memref<144xf32, #tpu.memory_space<smem>>
    %1149 = vector.broadcast %1148 : f32 to vector<9x128xf32>
    %1150 = arith.mulf %1149, %807 : vector<9x128xf32>
    %1151 = arith.addf %1135, %1150 : vector<9x128xf32>
    %c22_153 = arith.constant 22 : index
    %1152 = memref.load %arg3[%c22_153] : memref<144xf32, #tpu.memory_space<smem>>
    %1153 = vector.broadcast %1152 : f32 to vector<9x128xf32>
    %1154 = arith.mulf %1153, %809 : vector<9x128xf32>
    %1155 = arith.addf %1139, %1154 : vector<9x128xf32>
    %c58_154 = arith.constant 58 : index
    %1156 = memref.load %arg3[%c58_154] : memref<144xf32, #tpu.memory_space<smem>>
    %1157 = vector.broadcast %1156 : f32 to vector<9x128xf32>
    %1158 = arith.mulf %1157, %809 : vector<9x128xf32>
    %1159 = arith.addf %1143, %1158 : vector<9x128xf32>
    %c94_155 = arith.constant 94 : index
    %1160 = memref.load %arg3[%c94_155] : memref<144xf32, #tpu.memory_space<smem>>
    %1161 = vector.broadcast %1160 : f32 to vector<9x128xf32>
    %1162 = arith.mulf %1161, %809 : vector<9x128xf32>
    %1163 = arith.addf %1147, %1162 : vector<9x128xf32>
    %c130_156 = arith.constant 130 : index
    %1164 = memref.load %arg3[%c130_156] : memref<144xf32, #tpu.memory_space<smem>>
    %1165 = vector.broadcast %1164 : f32 to vector<9x128xf32>
    %1166 = arith.mulf %1165, %809 : vector<9x128xf32>
    %1167 = arith.addf %1151, %1166 : vector<9x128xf32>
    %c31_157 = arith.constant 31 : index
    %1168 = memref.load %arg3[%c31_157] : memref<144xf32, #tpu.memory_space<smem>>
    %1169 = vector.broadcast %1168 : f32 to vector<9x128xf32>
    %1170 = arith.mulf %1169, %811 : vector<9x128xf32>
    %1171 = arith.addf %1155, %1170 : vector<9x128xf32>
    %c67_158 = arith.constant 67 : index
    %1172 = memref.load %arg3[%c67_158] : memref<144xf32, #tpu.memory_space<smem>>
    %1173 = vector.broadcast %1172 : f32 to vector<9x128xf32>
    %1174 = arith.mulf %1173, %811 : vector<9x128xf32>
    %1175 = arith.addf %1159, %1174 : vector<9x128xf32>
    %c103_159 = arith.constant 103 : index
    %1176 = memref.load %arg3[%c103_159] : memref<144xf32, #tpu.memory_space<smem>>
    %1177 = vector.broadcast %1176 : f32 to vector<9x128xf32>
    %1178 = arith.mulf %1177, %811 : vector<9x128xf32>
    %1179 = arith.addf %1163, %1178 : vector<9x128xf32>
    %c139_160 = arith.constant 139 : index
    %1180 = memref.load %arg3[%c139_160] : memref<144xf32, #tpu.memory_space<smem>>
    %1181 = vector.broadcast %1180 : f32 to vector<9x128xf32>
    %1182 = arith.mulf %1181, %811 : vector<9x128xf32>
    %1183 = arith.addf %1167, %1182 : vector<9x128xf32>
    %1184 = vector.extract_strided_slice %805 {offsets = [0, 1], sizes = [9, 127], strides = [1, 1]} : vector<9x128xf32> to vector<9x127xf32>
    %1185 = tpu.concatenate %1184, %3 in 1 : vector<9x127xf32>, vector<9x1xf32> -> vector<9x128xf32>
    %c5_161 = arith.constant 5 : index
    %1186 = memref.load %arg3[%c5_161] : memref<144xf32, #tpu.memory_space<smem>>
    %1187 = vector.broadcast %1186 : f32 to vector<9x128xf32>
    %1188 = arith.mulf %1187, %1185 : vector<9x128xf32>
    %1189 = arith.addf %1171, %1188 : vector<9x128xf32>
    %c41_162 = arith.constant 41 : index
    %1190 = memref.load %arg3[%c41_162] : memref<144xf32, #tpu.memory_space<smem>>
    %1191 = vector.broadcast %1190 : f32 to vector<9x128xf32>
    %1192 = arith.mulf %1191, %1185 : vector<9x128xf32>
    %1193 = arith.addf %1175, %1192 : vector<9x128xf32>
    %c77_163 = arith.constant 77 : index
    %1194 = memref.load %arg3[%c77_163] : memref<144xf32, #tpu.memory_space<smem>>
    %1195 = vector.broadcast %1194 : f32 to vector<9x128xf32>
    %1196 = arith.mulf %1195, %1185 : vector<9x128xf32>
    %1197 = arith.addf %1179, %1196 : vector<9x128xf32>
    %c113_164 = arith.constant 113 : index
    %1198 = memref.load %arg3[%c113_164] : memref<144xf32, #tpu.memory_space<smem>>
    %1199 = vector.broadcast %1198 : f32 to vector<9x128xf32>
    %1200 = arith.mulf %1199, %1185 : vector<9x128xf32>
    %1201 = arith.addf %1183, %1200 : vector<9x128xf32>
    %1202 = vector.extract_strided_slice %807 {offsets = [0, 1], sizes = [9, 127], strides = [1, 1]} : vector<9x128xf32> to vector<9x127xf32>
    %1203 = tpu.concatenate %1202, %3 in 1 : vector<9x127xf32>, vector<9x1xf32> -> vector<9x128xf32>
    %c14_165 = arith.constant 14 : index
    %1204 = memref.load %arg3[%c14_165] : memref<144xf32, #tpu.memory_space<smem>>
    %1205 = vector.broadcast %1204 : f32 to vector<9x128xf32>
    %1206 = arith.mulf %1205, %1203 : vector<9x128xf32>
    %1207 = arith.addf %1189, %1206 : vector<9x128xf32>
    %c50_166 = arith.constant 50 : index
    %1208 = memref.load %arg3[%c50_166] : memref<144xf32, #tpu.memory_space<smem>>
    %1209 = vector.broadcast %1208 : f32 to vector<9x128xf32>
    %1210 = arith.mulf %1209, %1203 : vector<9x128xf32>
    %1211 = arith.addf %1193, %1210 : vector<9x128xf32>
    %c86_167 = arith.constant 86 : index
    %1212 = memref.load %arg3[%c86_167] : memref<144xf32, #tpu.memory_space<smem>>
    %1213 = vector.broadcast %1212 : f32 to vector<9x128xf32>
    %1214 = arith.mulf %1213, %1203 : vector<9x128xf32>
    %1215 = arith.addf %1197, %1214 : vector<9x128xf32>
    %c122_168 = arith.constant 122 : index
    %1216 = memref.load %arg3[%c122_168] : memref<144xf32, #tpu.memory_space<smem>>
    %1217 = vector.broadcast %1216 : f32 to vector<9x128xf32>
    %1218 = arith.mulf %1217, %1203 : vector<9x128xf32>
    %1219 = arith.addf %1201, %1218 : vector<9x128xf32>
    %1220 = vector.extract_strided_slice %809 {offsets = [0, 1], sizes = [9, 127], strides = [1, 1]} : vector<9x128xf32> to vector<9x127xf32>
    %1221 = tpu.concatenate %1220, %3 in 1 : vector<9x127xf32>, vector<9x1xf32> -> vector<9x128xf32>
    %c23_169 = arith.constant 23 : index
    %1222 = memref.load %arg3[%c23_169] : memref<144xf32, #tpu.memory_space<smem>>
    %1223 = vector.broadcast %1222 : f32 to vector<9x128xf32>
    %1224 = arith.mulf %1223, %1221 : vector<9x128xf32>
    %1225 = arith.addf %1207, %1224 : vector<9x128xf32>
    %c59_170 = arith.constant 59 : index
    %1226 = memref.load %arg3[%c59_170] : memref<144xf32, #tpu.memory_space<smem>>
    %1227 = vector.broadcast %1226 : f32 to vector<9x128xf32>
    %1228 = arith.mulf %1227, %1221 : vector<9x128xf32>
    %1229 = arith.addf %1211, %1228 : vector<9x128xf32>
    %c95_171 = arith.constant 95 : index
    %1230 = memref.load %arg3[%c95_171] : memref<144xf32, #tpu.memory_space<smem>>
    %1231 = vector.broadcast %1230 : f32 to vector<9x128xf32>
    %1232 = arith.mulf %1231, %1221 : vector<9x128xf32>
    %1233 = arith.addf %1215, %1232 : vector<9x128xf32>
    %c131_172 = arith.constant 131 : index
    %1234 = memref.load %arg3[%c131_172] : memref<144xf32, #tpu.memory_space<smem>>
    %1235 = vector.broadcast %1234 : f32 to vector<9x128xf32>
    %1236 = arith.mulf %1235, %1221 : vector<9x128xf32>
    %1237 = arith.addf %1219, %1236 : vector<9x128xf32>
    %1238 = vector.extract_strided_slice %811 {offsets = [0, 1], sizes = [9, 127], strides = [1, 1]} : vector<9x128xf32> to vector<9x127xf32>
    %1239 = tpu.concatenate %1238, %3 in 1 : vector<9x127xf32>, vector<9x1xf32> -> vector<9x128xf32>
    %c32_173 = arith.constant 32 : index
    %1240 = memref.load %arg3[%c32_173] : memref<144xf32, #tpu.memory_space<smem>>
    %1241 = vector.broadcast %1240 : f32 to vector<9x128xf32>
    %1242 = arith.mulf %1241, %1239 : vector<9x128xf32>
    %1243 = arith.addf %1225, %1242 : vector<9x128xf32>
    %c68_174 = arith.constant 68 : index
    %1244 = memref.load %arg3[%c68_174] : memref<144xf32, #tpu.memory_space<smem>>
    %1245 = vector.broadcast %1244 : f32 to vector<9x128xf32>
    %1246 = arith.mulf %1245, %1239 : vector<9x128xf32>
    %1247 = arith.addf %1229, %1246 : vector<9x128xf32>
    %c104_175 = arith.constant 104 : index
    %1248 = memref.load %arg3[%c104_175] : memref<144xf32, #tpu.memory_space<smem>>
    %1249 = vector.broadcast %1248 : f32 to vector<9x128xf32>
    %1250 = arith.mulf %1249, %1239 : vector<9x128xf32>
    %1251 = arith.addf %1233, %1250 : vector<9x128xf32>
    %c140_176 = arith.constant 140 : index
    %1252 = memref.load %arg3[%c140_176] : memref<144xf32, #tpu.memory_space<smem>>
    %1253 = vector.broadcast %1252 : f32 to vector<9x128xf32>
    %1254 = arith.mulf %1253, %1239 : vector<9x128xf32>
    %1255 = arith.addf %1237, %1254 : vector<9x128xf32>
    %1256 = vector.extract_strided_slice %805 {offsets = [1, 0], sizes = [8, 128], strides = [1, 1]} : vector<9x128xf32> to vector<8x128xf32>
    %1257 = tpu.concatenate %1256, %2 in 0 : vector<8x128xf32>, vector<1x128xf32> -> vector<9x128xf32>
    %1258 = vector.extract_strided_slice %1257 {offsets = [0, 0], sizes = [9, 127], strides = [1, 1]} : vector<9x128xf32> to vector<9x127xf32>
    %1259 = tpu.concatenate %3, %1258 in 1 : vector<9x1xf32>, vector<9x127xf32> -> vector<9x128xf32>
    %c6_177 = arith.constant 6 : index
    %1260 = memref.load %arg3[%c6_177] : memref<144xf32, #tpu.memory_space<smem>>
    %1261 = vector.broadcast %1260 : f32 to vector<9x128xf32>
    %1262 = arith.mulf %1261, %1259 : vector<9x128xf32>
    %1263 = arith.addf %1243, %1262 : vector<9x128xf32>
    %c42_178 = arith.constant 42 : index
    %1264 = memref.load %arg3[%c42_178] : memref<144xf32, #tpu.memory_space<smem>>
    %1265 = vector.broadcast %1264 : f32 to vector<9x128xf32>
    %1266 = arith.mulf %1265, %1259 : vector<9x128xf32>
    %1267 = arith.addf %1247, %1266 : vector<9x128xf32>
    %c78_179 = arith.constant 78 : index
    %1268 = memref.load %arg3[%c78_179] : memref<144xf32, #tpu.memory_space<smem>>
    %1269 = vector.broadcast %1268 : f32 to vector<9x128xf32>
    %1270 = arith.mulf %1269, %1259 : vector<9x128xf32>
    %1271 = arith.addf %1251, %1270 : vector<9x128xf32>
    %c114_180 = arith.constant 114 : index
    %1272 = memref.load %arg3[%c114_180] : memref<144xf32, #tpu.memory_space<smem>>
    %1273 = vector.broadcast %1272 : f32 to vector<9x128xf32>
    %1274 = arith.mulf %1273, %1259 : vector<9x128xf32>
    %1275 = arith.addf %1255, %1274 : vector<9x128xf32>
    %1276 = vector.extract_strided_slice %807 {offsets = [1, 0], sizes = [8, 128], strides = [1, 1]} : vector<9x128xf32> to vector<8x128xf32>
    %1277 = tpu.concatenate %1276, %2 in 0 : vector<8x128xf32>, vector<1x128xf32> -> vector<9x128xf32>
    %1278 = vector.extract_strided_slice %1277 {offsets = [0, 0], sizes = [9, 127], strides = [1, 1]} : vector<9x128xf32> to vector<9x127xf32>
    %1279 = tpu.concatenate %3, %1278 in 1 : vector<9x1xf32>, vector<9x127xf32> -> vector<9x128xf32>
    %c15_181 = arith.constant 15 : index
    %1280 = memref.load %arg3[%c15_181] : memref<144xf32, #tpu.memory_space<smem>>
    %1281 = vector.broadcast %1280 : f32 to vector<9x128xf32>
    %1282 = arith.mulf %1281, %1279 : vector<9x128xf32>
    %1283 = arith.addf %1263, %1282 : vector<9x128xf32>
    %c51_182 = arith.constant 51 : index
    %1284 = memref.load %arg3[%c51_182] : memref<144xf32, #tpu.memory_space<smem>>
    %1285 = vector.broadcast %1284 : f32 to vector<9x128xf32>
    %1286 = arith.mulf %1285, %1279 : vector<9x128xf32>
    %1287 = arith.addf %1267, %1286 : vector<9x128xf32>
    %c87_183 = arith.constant 87 : index
    %1288 = memref.load %arg3[%c87_183] : memref<144xf32, #tpu.memory_space<smem>>
    %1289 = vector.broadcast %1288 : f32 to vector<9x128xf32>
    %1290 = arith.mulf %1289, %1279 : vector<9x128xf32>
    %1291 = arith.addf %1271, %1290 : vector<9x128xf32>
    %c123_184 = arith.constant 123 : index
    %1292 = memref.load %arg3[%c123_184] : memref<144xf32, #tpu.memory_space<smem>>
    %1293 = vector.broadcast %1292 : f32 to vector<9x128xf32>
    %1294 = arith.mulf %1293, %1279 : vector<9x128xf32>
    %1295 = arith.addf %1275, %1294 : vector<9x128xf32>
    %1296 = vector.extract_strided_slice %809 {offsets = [1, 0], sizes = [8, 128], strides = [1, 1]} : vector<9x128xf32> to vector<8x128xf32>
    %1297 = tpu.concatenate %1296, %2 in 0 : vector<8x128xf32>, vector<1x128xf32> -> vector<9x128xf32>
    %1298 = vector.extract_strided_slice %1297 {offsets = [0, 0], sizes = [9, 127], strides = [1, 1]} : vector<9x128xf32> to vector<9x127xf32>
    %1299 = tpu.concatenate %3, %1298 in 1 : vector<9x1xf32>, vector<9x127xf32> -> vector<9x128xf32>
    %c24_185 = arith.constant 24 : index
    %1300 = memref.load %arg3[%c24_185] : memref<144xf32, #tpu.memory_space<smem>>
    %1301 = vector.broadcast %1300 : f32 to vector<9x128xf32>
    %1302 = arith.mulf %1301, %1299 : vector<9x128xf32>
    %1303 = arith.addf %1283, %1302 : vector<9x128xf32>
    %c60_186 = arith.constant 60 : index
    %1304 = memref.load %arg3[%c60_186] : memref<144xf32, #tpu.memory_space<smem>>
    %1305 = vector.broadcast %1304 : f32 to vector<9x128xf32>
    %1306 = arith.mulf %1305, %1299 : vector<9x128xf32>
    %1307 = arith.addf %1287, %1306 : vector<9x128xf32>
    %c96_187 = arith.constant 96 : index
    %1308 = memref.load %arg3[%c96_187] : memref<144xf32, #tpu.memory_space<smem>>
    %1309 = vector.broadcast %1308 : f32 to vector<9x128xf32>
    %1310 = arith.mulf %1309, %1299 : vector<9x128xf32>
    %1311 = arith.addf %1291, %1310 : vector<9x128xf32>
    %c132_188 = arith.constant 132 : index
    %1312 = memref.load %arg3[%c132_188] : memref<144xf32, #tpu.memory_space<smem>>
    %1313 = vector.broadcast %1312 : f32 to vector<9x128xf32>
    %1314 = arith.mulf %1313, %1299 : vector<9x128xf32>
    %1315 = arith.addf %1295, %1314 : vector<9x128xf32>
    %1316 = vector.extract_strided_slice %811 {offsets = [1, 0], sizes = [8, 128], strides = [1, 1]} : vector<9x128xf32> to vector<8x128xf32>
    %1317 = tpu.concatenate %1316, %2 in 0 : vector<8x128xf32>, vector<1x128xf32> -> vector<9x128xf32>
    %1318 = vector.extract_strided_slice %1317 {offsets = [0, 0], sizes = [9, 127], strides = [1, 1]} : vector<9x128xf32> to vector<9x127xf32>
    %1319 = tpu.concatenate %3, %1318 in 1 : vector<9x1xf32>, vector<9x127xf32> -> vector<9x128xf32>
    %c33_189 = arith.constant 33 : index
    %1320 = memref.load %arg3[%c33_189] : memref<144xf32, #tpu.memory_space<smem>>
    %1321 = vector.broadcast %1320 : f32 to vector<9x128xf32>
    %1322 = arith.mulf %1321, %1319 : vector<9x128xf32>
    %1323 = arith.addf %1303, %1322 : vector<9x128xf32>
    %c69_190 = arith.constant 69 : index
    %1324 = memref.load %arg3[%c69_190] : memref<144xf32, #tpu.memory_space<smem>>
    %1325 = vector.broadcast %1324 : f32 to vector<9x128xf32>
    %1326 = arith.mulf %1325, %1319 : vector<9x128xf32>
    %1327 = arith.addf %1307, %1326 : vector<9x128xf32>
    %c105_191 = arith.constant 105 : index
    %1328 = memref.load %arg3[%c105_191] : memref<144xf32, #tpu.memory_space<smem>>
    %1329 = vector.broadcast %1328 : f32 to vector<9x128xf32>
    %1330 = arith.mulf %1329, %1319 : vector<9x128xf32>
    %1331 = arith.addf %1311, %1330 : vector<9x128xf32>
    %c141_192 = arith.constant 141 : index
    %1332 = memref.load %arg3[%c141_192] : memref<144xf32, #tpu.memory_space<smem>>
    %1333 = vector.broadcast %1332 : f32 to vector<9x128xf32>
    %1334 = arith.mulf %1333, %1319 : vector<9x128xf32>
    %1335 = arith.addf %1315, %1334 : vector<9x128xf32>
    %1336 = vector.extract_strided_slice %805 {offsets = [1, 0], sizes = [8, 128], strides = [1, 1]} : vector<9x128xf32> to vector<8x128xf32>
    %1337 = tpu.concatenate %1336, %2 in 0 : vector<8x128xf32>, vector<1x128xf32> -> vector<9x128xf32>
    %c7_193 = arith.constant 7 : index
    %1338 = memref.load %arg3[%c7_193] : memref<144xf32, #tpu.memory_space<smem>>
    %1339 = vector.broadcast %1338 : f32 to vector<9x128xf32>
    %1340 = arith.mulf %1339, %1337 : vector<9x128xf32>
    %1341 = arith.addf %1323, %1340 : vector<9x128xf32>
    %c43_194 = arith.constant 43 : index
    %1342 = memref.load %arg3[%c43_194] : memref<144xf32, #tpu.memory_space<smem>>
    %1343 = vector.broadcast %1342 : f32 to vector<9x128xf32>
    %1344 = arith.mulf %1343, %1337 : vector<9x128xf32>
    %1345 = arith.addf %1327, %1344 : vector<9x128xf32>
    %c79_195 = arith.constant 79 : index
    %1346 = memref.load %arg3[%c79_195] : memref<144xf32, #tpu.memory_space<smem>>
    %1347 = vector.broadcast %1346 : f32 to vector<9x128xf32>
    %1348 = arith.mulf %1347, %1337 : vector<9x128xf32>
    %1349 = arith.addf %1331, %1348 : vector<9x128xf32>
    %c115_196 = arith.constant 115 : index
    %1350 = memref.load %arg3[%c115_196] : memref<144xf32, #tpu.memory_space<smem>>
    %1351 = vector.broadcast %1350 : f32 to vector<9x128xf32>
    %1352 = arith.mulf %1351, %1337 : vector<9x128xf32>
    %1353 = arith.addf %1335, %1352 : vector<9x128xf32>
    %1354 = vector.extract_strided_slice %807 {offsets = [1, 0], sizes = [8, 128], strides = [1, 1]} : vector<9x128xf32> to vector<8x128xf32>
    %1355 = tpu.concatenate %1354, %2 in 0 : vector<8x128xf32>, vector<1x128xf32> -> vector<9x128xf32>
    %c16_197 = arith.constant 16 : index
    %1356 = memref.load %arg3[%c16_197] : memref<144xf32, #tpu.memory_space<smem>>
    %1357 = vector.broadcast %1356 : f32 to vector<9x128xf32>
    %1358 = arith.mulf %1357, %1355 : vector<9x128xf32>
    %1359 = arith.addf %1341, %1358 : vector<9x128xf32>
    %c52_198 = arith.constant 52 : index
    %1360 = memref.load %arg3[%c52_198] : memref<144xf32, #tpu.memory_space<smem>>
    %1361 = vector.broadcast %1360 : f32 to vector<9x128xf32>
    %1362 = arith.mulf %1361, %1355 : vector<9x128xf32>
    %1363 = arith.addf %1345, %1362 : vector<9x128xf32>
    %c88_199 = arith.constant 88 : index
    %1364 = memref.load %arg3[%c88_199] : memref<144xf32, #tpu.memory_space<smem>>
    %1365 = vector.broadcast %1364 : f32 to vector<9x128xf32>
    %1366 = arith.mulf %1365, %1355 : vector<9x128xf32>
    %1367 = arith.addf %1349, %1366 : vector<9x128xf32>
    %c124_200 = arith.constant 124 : index
    %1368 = memref.load %arg3[%c124_200] : memref<144xf32, #tpu.memory_space<smem>>
    %1369 = vector.broadcast %1368 : f32 to vector<9x128xf32>
    %1370 = arith.mulf %1369, %1355 : vector<9x128xf32>
    %1371 = arith.addf %1353, %1370 : vector<9x128xf32>
    %1372 = vector.extract_strided_slice %809 {offsets = [1, 0], sizes = [8, 128], strides = [1, 1]} : vector<9x128xf32> to vector<8x128xf32>
    %1373 = tpu.concatenate %1372, %2 in 0 : vector<8x128xf32>, vector<1x128xf32> -> vector<9x128xf32>
    %c25_201 = arith.constant 25 : index
    %1374 = memref.load %arg3[%c25_201] : memref<144xf32, #tpu.memory_space<smem>>
    %1375 = vector.broadcast %1374 : f32 to vector<9x128xf32>
    %1376 = arith.mulf %1375, %1373 : vector<9x128xf32>
    %1377 = arith.addf %1359, %1376 : vector<9x128xf32>
    %c61_202 = arith.constant 61 : index
    %1378 = memref.load %arg3[%c61_202] : memref<144xf32, #tpu.memory_space<smem>>
    %1379 = vector.broadcast %1378 : f32 to vector<9x128xf32>
    %1380 = arith.mulf %1379, %1373 : vector<9x128xf32>
    %1381 = arith.addf %1363, %1380 : vector<9x128xf32>
    %c97_203 = arith.constant 97 : index
    %1382 = memref.load %arg3[%c97_203] : memref<144xf32, #tpu.memory_space<smem>>
    %1383 = vector.broadcast %1382 : f32 to vector<9x128xf32>
    %1384 = arith.mulf %1383, %1373 : vector<9x128xf32>
    %1385 = arith.addf %1367, %1384 : vector<9x128xf32>
    %c133_204 = arith.constant 133 : index
    %1386 = memref.load %arg3[%c133_204] : memref<144xf32, #tpu.memory_space<smem>>
    %1387 = vector.broadcast %1386 : f32 to vector<9x128xf32>
    %1388 = arith.mulf %1387, %1373 : vector<9x128xf32>
    %1389 = arith.addf %1371, %1388 : vector<9x128xf32>
    %1390 = vector.extract_strided_slice %811 {offsets = [1, 0], sizes = [8, 128], strides = [1, 1]} : vector<9x128xf32> to vector<8x128xf32>
    %1391 = tpu.concatenate %1390, %2 in 0 : vector<8x128xf32>, vector<1x128xf32> -> vector<9x128xf32>
    %c34_205 = arith.constant 34 : index
    %1392 = memref.load %arg3[%c34_205] : memref<144xf32, #tpu.memory_space<smem>>
    %1393 = vector.broadcast %1392 : f32 to vector<9x128xf32>
    %1394 = arith.mulf %1393, %1391 : vector<9x128xf32>
    %1395 = arith.addf %1377, %1394 : vector<9x128xf32>
    %c70_206 = arith.constant 70 : index
    %1396 = memref.load %arg3[%c70_206] : memref<144xf32, #tpu.memory_space<smem>>
    %1397 = vector.broadcast %1396 : f32 to vector<9x128xf32>
    %1398 = arith.mulf %1397, %1391 : vector<9x128xf32>
    %1399 = arith.addf %1381, %1398 : vector<9x128xf32>
    %c106_207 = arith.constant 106 : index
    %1400 = memref.load %arg3[%c106_207] : memref<144xf32, #tpu.memory_space<smem>>
    %1401 = vector.broadcast %1400 : f32 to vector<9x128xf32>
    %1402 = arith.mulf %1401, %1391 : vector<9x128xf32>
    %1403 = arith.addf %1385, %1402 : vector<9x128xf32>
    %c142_208 = arith.constant 142 : index
    %1404 = memref.load %arg3[%c142_208] : memref<144xf32, #tpu.memory_space<smem>>
    %1405 = vector.broadcast %1404 : f32 to vector<9x128xf32>
    %1406 = arith.mulf %1405, %1391 : vector<9x128xf32>
    %1407 = arith.addf %1389, %1406 : vector<9x128xf32>
    %1408 = vector.extract_strided_slice %805 {offsets = [1, 0], sizes = [8, 128], strides = [1, 1]} : vector<9x128xf32> to vector<8x128xf32>
    %1409 = tpu.concatenate %1408, %2 in 0 : vector<8x128xf32>, vector<1x128xf32> -> vector<9x128xf32>
    %1410 = vector.extract_strided_slice %1409 {offsets = [0, 1], sizes = [9, 127], strides = [1, 1]} : vector<9x128xf32> to vector<9x127xf32>
    %1411 = tpu.concatenate %1410, %3 in 1 : vector<9x127xf32>, vector<9x1xf32> -> vector<9x128xf32>
    %c8_209 = arith.constant 8 : index
    %1412 = memref.load %arg3[%c8_209] : memref<144xf32, #tpu.memory_space<smem>>
    %1413 = vector.broadcast %1412 : f32 to vector<9x128xf32>
    %1414 = arith.mulf %1413, %1411 : vector<9x128xf32>
    %1415 = arith.addf %1395, %1414 : vector<9x128xf32>
    %c44_210 = arith.constant 44 : index
    %1416 = memref.load %arg3[%c44_210] : memref<144xf32, #tpu.memory_space<smem>>
    %1417 = vector.broadcast %1416 : f32 to vector<9x128xf32>
    %1418 = arith.mulf %1417, %1411 : vector<9x128xf32>
    %1419 = arith.addf %1399, %1418 : vector<9x128xf32>
    %c80_211 = arith.constant 80 : index
    %1420 = memref.load %arg3[%c80_211] : memref<144xf32, #tpu.memory_space<smem>>
    %1421 = vector.broadcast %1420 : f32 to vector<9x128xf32>
    %1422 = arith.mulf %1421, %1411 : vector<9x128xf32>
    %1423 = arith.addf %1403, %1422 : vector<9x128xf32>
    %c116_212 = arith.constant 116 : index
    %1424 = memref.load %arg3[%c116_212] : memref<144xf32, #tpu.memory_space<smem>>
    %1425 = vector.broadcast %1424 : f32 to vector<9x128xf32>
    %1426 = arith.mulf %1425, %1411 : vector<9x128xf32>
    %1427 = arith.addf %1407, %1426 : vector<9x128xf32>
    %1428 = vector.extract_strided_slice %807 {offsets = [1, 0], sizes = [8, 128], strides = [1, 1]} : vector<9x128xf32> to vector<8x128xf32>
    %1429 = tpu.concatenate %1428, %2 in 0 : vector<8x128xf32>, vector<1x128xf32> -> vector<9x128xf32>
    %1430 = vector.extract_strided_slice %1429 {offsets = [0, 1], sizes = [9, 127], strides = [1, 1]} : vector<9x128xf32> to vector<9x127xf32>
    %1431 = tpu.concatenate %1430, %3 in 1 : vector<9x127xf32>, vector<9x1xf32> -> vector<9x128xf32>
    %c17_213 = arith.constant 17 : index
    %1432 = memref.load %arg3[%c17_213] : memref<144xf32, #tpu.memory_space<smem>>
    %1433 = vector.broadcast %1432 : f32 to vector<9x128xf32>
    %1434 = arith.mulf %1433, %1431 : vector<9x128xf32>
    %1435 = arith.addf %1415, %1434 : vector<9x128xf32>
    %c53_214 = arith.constant 53 : index
    %1436 = memref.load %arg3[%c53_214] : memref<144xf32, #tpu.memory_space<smem>>
    %1437 = vector.broadcast %1436 : f32 to vector<9x128xf32>
    %1438 = arith.mulf %1437, %1431 : vector<9x128xf32>
    %1439 = arith.addf %1419, %1438 : vector<9x128xf32>
    %c89_215 = arith.constant 89 : index
    %1440 = memref.load %arg3[%c89_215] : memref<144xf32, #tpu.memory_space<smem>>
    %1441 = vector.broadcast %1440 : f32 to vector<9x128xf32>
    %1442 = arith.mulf %1441, %1431 : vector<9x128xf32>
    %1443 = arith.addf %1423, %1442 : vector<9x128xf32>
    %c125_216 = arith.constant 125 : index
    %1444 = memref.load %arg3[%c125_216] : memref<144xf32, #tpu.memory_space<smem>>
    %1445 = vector.broadcast %1444 : f32 to vector<9x128xf32>
    %1446 = arith.mulf %1445, %1431 : vector<9x128xf32>
    %1447 = arith.addf %1427, %1446 : vector<9x128xf32>
    %1448 = vector.extract_strided_slice %809 {offsets = [1, 0], sizes = [8, 128], strides = [1, 1]} : vector<9x128xf32> to vector<8x128xf32>
    %1449 = tpu.concatenate %1448, %2 in 0 : vector<8x128xf32>, vector<1x128xf32> -> vector<9x128xf32>
    %1450 = vector.extract_strided_slice %1449 {offsets = [0, 1], sizes = [9, 127], strides = [1, 1]} : vector<9x128xf32> to vector<9x127xf32>
    %1451 = tpu.concatenate %1450, %3 in 1 : vector<9x127xf32>, vector<9x1xf32> -> vector<9x128xf32>
    %c26_217 = arith.constant 26 : index
    %1452 = memref.load %arg3[%c26_217] : memref<144xf32, #tpu.memory_space<smem>>
    %1453 = vector.broadcast %1452 : f32 to vector<9x128xf32>
    %1454 = arith.mulf %1453, %1451 : vector<9x128xf32>
    %1455 = arith.addf %1435, %1454 : vector<9x128xf32>
    %c62_218 = arith.constant 62 : index
    %1456 = memref.load %arg3[%c62_218] : memref<144xf32, #tpu.memory_space<smem>>
    %1457 = vector.broadcast %1456 : f32 to vector<9x128xf32>
    %1458 = arith.mulf %1457, %1451 : vector<9x128xf32>
    %1459 = arith.addf %1439, %1458 : vector<9x128xf32>
    %c98_219 = arith.constant 98 : index
    %1460 = memref.load %arg3[%c98_219] : memref<144xf32, #tpu.memory_space<smem>>
    %1461 = vector.broadcast %1460 : f32 to vector<9x128xf32>
    %1462 = arith.mulf %1461, %1451 : vector<9x128xf32>
    %1463 = arith.addf %1443, %1462 : vector<9x128xf32>
    %c134_220 = arith.constant 134 : index
    %1464 = memref.load %arg3[%c134_220] : memref<144xf32, #tpu.memory_space<smem>>
    %1465 = vector.broadcast %1464 : f32 to vector<9x128xf32>
    %1466 = arith.mulf %1465, %1451 : vector<9x128xf32>
    %1467 = arith.addf %1447, %1466 : vector<9x128xf32>
    %1468 = vector.extract_strided_slice %811 {offsets = [1, 0], sizes = [8, 128], strides = [1, 1]} : vector<9x128xf32> to vector<8x128xf32>
    %1469 = tpu.concatenate %1468, %2 in 0 : vector<8x128xf32>, vector<1x128xf32> -> vector<9x128xf32>
    %1470 = vector.extract_strided_slice %1469 {offsets = [0, 1], sizes = [9, 127], strides = [1, 1]} : vector<9x128xf32> to vector<9x127xf32>
    %1471 = tpu.concatenate %1470, %3 in 1 : vector<9x127xf32>, vector<9x1xf32> -> vector<9x128xf32>
    %c35_221 = arith.constant 35 : index
    %1472 = memref.load %arg3[%c35_221] : memref<144xf32, #tpu.memory_space<smem>>
    %1473 = vector.broadcast %1472 : f32 to vector<9x128xf32>
    %1474 = arith.mulf %1473, %1471 : vector<9x128xf32>
    %1475 = arith.addf %1455, %1474 : vector<9x128xf32>
    %c71_222 = arith.constant 71 : index
    %1476 = memref.load %arg3[%c71_222] : memref<144xf32, #tpu.memory_space<smem>>
    %1477 = vector.broadcast %1476 : f32 to vector<9x128xf32>
    %1478 = arith.mulf %1477, %1471 : vector<9x128xf32>
    %1479 = arith.addf %1459, %1478 : vector<9x128xf32>
    %c107_223 = arith.constant 107 : index
    %1480 = memref.load %arg3[%c107_223] : memref<144xf32, #tpu.memory_space<smem>>
    %1481 = vector.broadcast %1480 : f32 to vector<9x128xf32>
    %1482 = arith.mulf %1481, %1471 : vector<9x128xf32>
    %1483 = arith.addf %1463, %1482 : vector<9x128xf32>
    %c143_224 = arith.constant 143 : index
    %1484 = memref.load %arg3[%c143_224] : memref<144xf32, #tpu.memory_space<smem>>
    %1485 = vector.broadcast %1484 : f32 to vector<9x128xf32>
    %1486 = arith.mulf %1485, %1471 : vector<9x128xf32>
    %1487 = arith.addf %1467, %1486 : vector<9x128xf32>
    %cst_225 = arith.constant dense<0.000000e+00> : vector<128xf32>
    %1488 = vector.multi_reduction <add>, %1475, %cst_225 [0] : vector<9x128xf32> to vector<128xf32>
    %1489 = vector.shape_cast %1488 : vector<128xf32> to vector<1x128xf32>
    %1490 = arith.mulf %1475, %1475 : vector<9x128xf32>
    %cst_226 = arith.constant dense<0.000000e+00> : vector<128xf32>
    %1491 = vector.multi_reduction <add>, %1490, %cst_226 [0] : vector<9x128xf32> to vector<128xf32>
    %1492 = vector.shape_cast %1491 : vector<128xf32> to vector<1x128xf32>
    %cst_227 = arith.constant 0.111111112 : f32
    %1493 = vector.broadcast %cst_227 : f32 to vector<1x128xf32>
    %1494 = arith.mulf %1489, %1493 : vector<1x128xf32>
    %cst_228 = arith.constant 0.111111112 : f32
    %1495 = vector.broadcast %cst_228 : f32 to vector<1x128xf32>
    %1496 = arith.mulf %1492, %1495 : vector<1x128xf32>
    %1497 = arith.mulf %1494, %1494 : vector<1x128xf32>
    %1498 = arith.subf %1496, %1497 : vector<1x128xf32>
    %cst_229 = arith.constant 0.000000e+00 : f32
    %1499 = vector.broadcast %cst_229 : f32 to vector<1x128xf32>
    %1500 = arith.maximumf %1498, %1499 : vector<1x128xf32>
    %cst_230 = arith.constant 9.99999974E-6 : f32
    %1501 = vector.broadcast %cst_230 : f32 to vector<1x128xf32>
    %1502 = arith.addf %1500, %1501 : vector<1x128xf32>
    %1503 = math.rsqrt %1502 : vector<1x128xf32>
    %1504 = vector.broadcast %1494 : vector<1x128xf32> to vector<9x128xf32>
    %1505 = arith.subf %1475, %1504 : vector<9x128xf32>
    %1506 = vector.broadcast %1503 : vector<1x128xf32> to vector<9x128xf32>
    %1507 = arith.mulf %1505, %1506 : vector<9x128xf32>
    %1508 = vector.broadcast %0 : vector<9x1xf32> to vector<9x128xf32>
    %1509 = arith.mulf %1507, %1508 : vector<9x128xf32>
    %1510 = vector.broadcast %1 : vector<9x1xf32> to vector<9x128xf32>
    %1511 = arith.addf %1509, %1510 : vector<9x128xf32>
    %cst_231 = arith.constant 0.000000e+00 : f32
    %1512 = vector.broadcast %cst_231 : f32 to vector<9x128xf32>
    %1513 = arith.maximumf %1511, %1512 : vector<9x128xf32>
    %c0_232 = arith.constant 0 : index
    %c0_233 = arith.constant 0 : index
    %c0_234 = arith.constant 0 : index
    %c0_235 = arith.constant 0 : index
    %1514 = vector.load %arg1[%c0_232, %c0_233, %c0_234, %c0_235] : memref<1x4x9x128xf32, #tpu.memory_space<vmem>>, vector<1x1x9x128xf32>
    %1515 = vector.shape_cast %1514 : vector<1x1x9x128xf32> to vector<9x128xf32>
    %1516 = arith.addf %1513, %1515 : vector<9x128xf32>
    %c0_236 = arith.constant 0 : index
    %c0_237 = arith.constant 0 : index
    %c0_238 = arith.constant 0 : index
    %c0_239 = arith.constant 0 : index
    %1517 = vector.load %arg6[%c0_236, %c0_237, %c0_238, %c0_239] : memref<1x4x9x128xf32, #tpu.memory_space<vmem>>, vector<1x1x9x128xf32>
    %1518 = vector.shape_cast %1517 : vector<1x1x9x128xf32> to vector<9x128xf32>
    %1519 = vector.shape_cast %1516 : vector<9x128xf32> to vector<1x1x9x128xf32>
    tpu.vector_store %arg6[%c0_236, %c0_237, %c0_238, %c0_239], %1519 {strides = array<i32>} : memref<1x4x9x128xf32, #tpu.memory_space<vmem>>, vector<1x1x9x128xf32>,
    %cst_240 = arith.constant dense<0.000000e+00> : vector<128xf32>
    %1520 = vector.multi_reduction <add>, %1479, %cst_240 [0] : vector<9x128xf32> to vector<128xf32>
    %1521 = vector.shape_cast %1520 : vector<128xf32> to vector<1x128xf32>
    %1522 = arith.mulf %1479, %1479 : vector<9x128xf32>
    %cst_241 = arith.constant dense<0.000000e+00> : vector<128xf32>
    %1523 = vector.multi_reduction <add>, %1522, %cst_241 [0] : vector<9x128xf32> to vector<128xf32>
    %1524 = vector.shape_cast %1523 : vector<128xf32> to vector<1x128xf32>
    %cst_242 = arith.constant 0.111111112 : f32
    %1525 = vector.broadcast %cst_242 : f32 to vector<1x128xf32>
    %1526 = arith.mulf %1521, %1525 : vector<1x128xf32>
    %cst_243 = arith.constant 0.111111112 : f32
    %1527 = vector.broadcast %cst_243 : f32 to vector<1x128xf32>
    %1528 = arith.mulf %1524, %1527 : vector<1x128xf32>
    %1529 = arith.mulf %1526, %1526 : vector<1x128xf32>
    %1530 = arith.subf %1528, %1529 : vector<1x128xf32>
    %cst_244 = arith.constant 0.000000e+00 : f32
    %1531 = vector.broadcast %cst_244 : f32 to vector<1x128xf32>
    %1532 = arith.maximumf %1530, %1531 : vector<1x128xf32>
    %cst_245 = arith.constant 9.99999974E-6 : f32
    %1533 = vector.broadcast %cst_245 : f32 to vector<1x128xf32>
    %1534 = arith.addf %1532, %1533 : vector<1x128xf32>
    %1535 = math.rsqrt %1534 : vector<1x128xf32>
    %1536 = vector.broadcast %1526 : vector<1x128xf32> to vector<9x128xf32>
    %1537 = arith.subf %1479, %1536 : vector<9x128xf32>
    %1538 = vector.broadcast %1535 : vector<1x128xf32> to vector<9x128xf32>
    %1539 = arith.mulf %1537, %1538 : vector<9x128xf32>
    %1540 = vector.broadcast %0 : vector<9x1xf32> to vector<9x128xf32>
    %1541 = arith.mulf %1539, %1540 : vector<9x128xf32>
    %1542 = vector.broadcast %1 : vector<9x1xf32> to vector<9x128xf32>
    %1543 = arith.addf %1541, %1542 : vector<9x128xf32>
    %cst_246 = arith.constant 0.000000e+00 : f32
    %1544 = vector.broadcast %cst_246 : f32 to vector<9x128xf32>
    %1545 = arith.maximumf %1543, %1544 : vector<9x128xf32>
    %c0_247 = arith.constant 0 : index
    %c1_248 = arith.constant 1 : index
    %c0_249 = arith.constant 0 : index
    %c0_250 = arith.constant 0 : index
    %1546 = vector.load %arg1[%c0_247, %c1_248, %c0_249, %c0_250] : memref<1x4x9x128xf32, #tpu.memory_space<vmem>>, vector<1x1x9x128xf32>
    %1547 = vector.shape_cast %1546 : vector<1x1x9x128xf32> to vector<9x128xf32>
    %1548 = arith.addf %1545, %1547 : vector<9x128xf32>
    %c0_251 = arith.constant 0 : index
    %c1_252 = arith.constant 1 : index
    %c0_253 = arith.constant 0 : index
    %c0_254 = arith.constant 0 : index
    %1549 = vector.load %arg6[%c0_251, %c1_252, %c0_253, %c0_254] : memref<1x4x9x128xf32, #tpu.memory_space<vmem>>, vector<1x1x9x128xf32>
    %1550 = vector.shape_cast %1549 : vector<1x1x9x128xf32> to vector<9x128xf32>
    %1551 = vector.shape_cast %1548 : vector<9x128xf32> to vector<1x1x9x128xf32>
    tpu.vector_store %arg6[%c0_251, %c1_252, %c0_253, %c0_254], %1551 {strides = array<i32>} : memref<1x4x9x128xf32, #tpu.memory_space<vmem>>, vector<1x1x9x128xf32>,
    %cst_255 = arith.constant dense<0.000000e+00> : vector<128xf32>
    %1552 = vector.multi_reduction <add>, %1483, %cst_255 [0] : vector<9x128xf32> to vector<128xf32>
    %1553 = vector.shape_cast %1552 : vector<128xf32> to vector<1x128xf32>
    %1554 = arith.mulf %1483, %1483 : vector<9x128xf32>
    %cst_256 = arith.constant dense<0.000000e+00> : vector<128xf32>
    %1555 = vector.multi_reduction <add>, %1554, %cst_256 [0] : vector<9x128xf32> to vector<128xf32>
    %1556 = vector.shape_cast %1555 : vector<128xf32> to vector<1x128xf32>
    %cst_257 = arith.constant 0.111111112 : f32
    %1557 = vector.broadcast %cst_257 : f32 to vector<1x128xf32>
    %1558 = arith.mulf %1553, %1557 : vector<1x128xf32>
    %cst_258 = arith.constant 0.111111112 : f32
    %1559 = vector.broadcast %cst_258 : f32 to vector<1x128xf32>
    %1560 = arith.mulf %1556, %1559 : vector<1x128xf32>
    %1561 = arith.mulf %1558, %1558 : vector<1x128xf32>
    %1562 = arith.subf %1560, %1561 : vector<1x128xf32>
    %cst_259 = arith.constant 0.000000e+00 : f32
    %1563 = vector.broadcast %cst_259 : f32 to vector<1x128xf32>
    %1564 = arith.maximumf %1562, %1563 : vector<1x128xf32>
    %cst_260 = arith.constant 9.99999974E-6 : f32
    %1565 = vector.broadcast %cst_260 : f32 to vector<1x128xf32>
    %1566 = arith.addf %1564, %1565 : vector<1x128xf32>
    %1567 = math.rsqrt %1566 : vector<1x128xf32>
    %1568 = vector.broadcast %1558 : vector<1x128xf32> to vector<9x128xf32>
    %1569 = arith.subf %1483, %1568 : vector<9x128xf32>
    %1570 = vector.broadcast %1567 : vector<1x128xf32> to vector<9x128xf32>
    %1571 = arith.mulf %1569, %1570 : vector<9x128xf32>
    %1572 = vector.broadcast %0 : vector<9x1xf32> to vector<9x128xf32>
    %1573 = arith.mulf %1571, %1572 : vector<9x128xf32>
    %1574 = vector.broadcast %1 : vector<9x1xf32> to vector<9x128xf32>
    %1575 = arith.addf %1573, %1574 : vector<9x128xf32>
    %cst_261 = arith.constant 0.000000e+00 : f32
    %1576 = vector.broadcast %cst_261 : f32 to vector<9x128xf32>
    %1577 = arith.maximumf %1575, %1576 : vector<9x128xf32>
    %c0_262 = arith.constant 0 : index
    %c2_263 = arith.constant 2 : index
    %c0_264 = arith.constant 0 : index
    %c0_265 = arith.constant 0 : index
    %1578 = vector.load %arg1[%c0_262, %c2_263, %c0_264, %c0_265] : memref<1x4x9x128xf32, #tpu.memory_space<vmem>>, vector<1x1x9x128xf32>
    %1579 = vector.shape_cast %1578 : vector<1x1x9x128xf32> to vector<9x128xf32>
    %1580 = arith.addf %1577, %1579 : vector<9x128xf32>
    %c0_266 = arith.constant 0 : index
    %c2_267 = arith.constant 2 : index
    %c0_268 = arith.constant 0 : index
    %c0_269 = arith.constant 0 : index
    %1581 = vector.load %arg6[%c0_266, %c2_267, %c0_268, %c0_269] : memref<1x4x9x128xf32, #tpu.memory_space<vmem>>, vector<1x1x9x128xf32>
    %1582 = vector.shape_cast %1581 : vector<1x1x9x128xf32> to vector<9x128xf32>
    %1583 = vector.shape_cast %1580 : vector<9x128xf32> to vector<1x1x9x128xf32>
    tpu.vector_store %arg6[%c0_266, %c2_267, %c0_268, %c0_269], %1583 {strides = array<i32>} : memref<1x4x9x128xf32, #tpu.memory_space<vmem>>, vector<1x1x9x128xf32>,
    %cst_270 = arith.constant dense<0.000000e+00> : vector<128xf32>
    %1584 = vector.multi_reduction <add>, %1487, %cst_270 [0] : vector<9x128xf32> to vector<128xf32>
    %1585 = vector.shape_cast %1584 : vector<128xf32> to vector<1x128xf32>
    %1586 = arith.mulf %1487, %1487 : vector<9x128xf32>
    %cst_271 = arith.constant dense<0.000000e+00> : vector<128xf32>
    %1587 = vector.multi_reduction <add>, %1586, %cst_271 [0] : vector<9x128xf32> to vector<128xf32>
    %1588 = vector.shape_cast %1587 : vector<128xf32> to vector<1x128xf32>
    %cst_272 = arith.constant 0.111111112 : f32
    %1589 = vector.broadcast %cst_272 : f32 to vector<1x128xf32>
    %1590 = arith.mulf %1585, %1589 : vector<1x128xf32>
    %cst_273 = arith.constant 0.111111112 : f32
    %1591 = vector.broadcast %cst_273 : f32 to vector<1x128xf32>
    %1592 = arith.mulf %1588, %1591 : vector<1x128xf32>
    %1593 = arith.mulf %1590, %1590 : vector<1x128xf32>
    %1594 = arith.subf %1592, %1593 : vector<1x128xf32>
    %cst_274 = arith.constant 0.000000e+00 : f32
    %1595 = vector.broadcast %cst_274 : f32 to vector<1x128xf32>
    %1596 = arith.maximumf %1594, %1595 : vector<1x128xf32>
    %cst_275 = arith.constant 9.99999974E-6 : f32
    %1597 = vector.broadcast %cst_275 : f32 to vector<1x128xf32>
    %1598 = arith.addf %1596, %1597 : vector<1x128xf32>
    %1599 = math.rsqrt %1598 : vector<1x128xf32>
    %1600 = vector.broadcast %1590 : vector<1x128xf32> to vector<9x128xf32>
    %1601 = arith.subf %1487, %1600 : vector<9x128xf32>
    %1602 = vector.broadcast %1599 : vector<1x128xf32> to vector<9x128xf32>
    %1603 = arith.mulf %1601, %1602 : vector<9x128xf32>
    %1604 = vector.broadcast %0 : vector<9x1xf32> to vector<9x128xf32>
    %1605 = arith.mulf %1603, %1604 : vector<9x128xf32>
    %1606 = vector.broadcast %1 : vector<9x1xf32> to vector<9x128xf32>
    %1607 = arith.addf %1605, %1606 : vector<9x128xf32>
    %cst_276 = arith.constant 0.000000e+00 : f32
    %1608 = vector.broadcast %cst_276 : f32 to vector<9x128xf32>
    %1609 = arith.maximumf %1607, %1608 : vector<9x128xf32>
    %c0_277 = arith.constant 0 : index
    %c3_278 = arith.constant 3 : index
    %c0_279 = arith.constant 0 : index
    %c0_280 = arith.constant 0 : index
    %1610 = vector.load %arg1[%c0_277, %c3_278, %c0_279, %c0_280] : memref<1x4x9x128xf32, #tpu.memory_space<vmem>>, vector<1x1x9x128xf32>
    %1611 = vector.shape_cast %1610 : vector<1x1x9x128xf32> to vector<9x128xf32>
    %1612 = arith.addf %1609, %1611 : vector<9x128xf32>
    %c0_281 = arith.constant 0 : index
    %c3_282 = arith.constant 3 : index
    %c0_283 = arith.constant 0 : index
    %c0_284 = arith.constant 0 : index
    %1613 = vector.load %arg6[%c0_281, %c3_282, %c0_283, %c0_284] : memref<1x4x9x128xf32, #tpu.memory_space<vmem>>, vector<1x1x9x128xf32>
    %1614 = vector.shape_cast %1613 : vector<1x1x9x128xf32> to vector<9x128xf32>
    %1615 = vector.shape_cast %1612 : vector<9x128xf32> to vector<1x1x9x128xf32>
    tpu.vector_store %arg6[%c0_281, %c3_282, %c0_283, %c0_284], %1615 {strides = array<i32>} : memref<1x4x9x128xf32, #tpu.memory_space<vmem>>, vector<1x1x9x128xf32>,
    return
  }
  func.func @transform_0(%arg0: i32) -> (i32, i32, i32, i32) {
    %c0_i32 = arith.constant 0 : i32
    %c0_i32_0 = arith.constant 0 : i32
    %c0_i32_1 = arith.constant 0 : i32
    %c0_i32_2 = arith.constant 0 : i32
    return %arg0, %c0_i32, %c0_i32_0, %c0_i32_1 : i32, i32, i32, i32
  }
  func.func @transform_1(%arg0: i32) -> i32 {
    %c0_i32 = arith.constant 0 : i32
    %c0_i32_0 = arith.constant 0 : i32
    return %c0_i32 : i32
  }
  func.func @transform_2(%arg0: i32) -> i32 {
    %c0_i32 = arith.constant 0 : i32
    %c0_i32_0 = arith.constant 0 : i32
    return %c0_i32 : i32
  }
  func.func @transform_3(%arg0: i32) -> (i32, i32) {
    %c0_i32 = arith.constant 0 : i32
    %c0_i32_0 = arith.constant 0 : i32
    %c0_i32_1 = arith.constant 0 : i32
    return %c0_i32, %c0_i32_0 : i32, i32
  }
  func.func @transform_4(%arg0: i32) -> (i32, i32) {
    %c0_i32 = arith.constant 0 : i32
    %c0_i32_0 = arith.constant 0 : i32
    %c0_i32_1 = arith.constant 0 : i32
    return %c0_i32, %c0_i32_0 : i32, i32
  }
  func.func @transform_5(%arg0: i32) -> (i32, i32, i32, i32) {
    %c0_i32 = arith.constant 0 : i32
    %c0_i32_0 = arith.constant 0 : i32
    %c0_i32_1 = arith.constant 0 : i32
    %c0_i32_2 = arith.constant 0 : i32
    return %arg0, %c0_i32, %c0_i32_0, %c0_i32_1 : i32, i32, i32, i32
  }
}

</mosaic_0001>

<llo_original>
// kernel: residual_forward.1
$region0: #{residual_forward.1}
  #allocation0 [shape = 'u32[]', space=smem, size = 0x4, offset = 0x4, fixed_abs, tag = 'smem constant byte address 0x4 - core index']
  #allocation1 [shape = 'u32[144,128]{1,0:T(1,128)}', space=vmem, size = 0x12000, scoped, tag = 'internal scratch']
  #allocation2 [shape = 'f32[4,9,128]{2,1,0:T(8,128)}', space=vmem, size = 0x8000, scoped, tag = 'scratch operand']
  %s0 = inlined_call_operand.vmem [shape: f32[2,4,9,128], index: 0, kind: input, shape index: {}]
  %s1 = inlined_call_operand.vmem [shape: f32[144], index: 1, kind: input, shape index: {}]
  %s2 = inlined_call_operand.vmem [shape: f32[144], index: 2, kind: input, shape index: {}]
  %s3 = inlined_call_operand.vmem [shape: f32[9,1], index: 3, kind: input, shape index: {}]
  %s4 = inlined_call_operand.vmem [shape: f32[9,1], index: 4, kind: input, shape index: {}]
  %s5 = inlined_call_operand.vmem [shape: f32[2,4,9,128], index: 5, kind: output, shape index: {}]
  %s6 = sld [smem:[#allocation0]]
  $region61: #{residual_forward.1} parent=0
    _
  %s8 = ssub.s32 1, %s6
  %s9 = scalar_select 0, %s8, %s6
  $region1: #{residual_forward.1} parent=0
    #allocation3 [shape = 'u8[1024]{0}', space=smem, size = 0x400, scoped, tag = 'input window, operand 1, single buffered']
    #allocation4 [shape = 's32[2]{0}', space=sflag, size = 0x8, scoped, tag = 'scoped memory for residual_forward.1']
    #allocation5 [shape = 'u8[1024]{0}', space=smem, size = 0x400, scoped, tag = 'input window, operand 2, single buffered']
    #allocation6 [shape = 's32[1]{0}', space=sflag, size = 0x4, scoped, tag = 'scoped memory for residual_forward.1']
    %10 = vsyncpa [#allocation4], 0
    %11 = vsyncpa [#allocation6], 0
    loop: start=0, step=1, limit=4
    $region2: #{residual_forward.1} parent=1 // loop_pre_header
      _
    $region3: #{residual_forward.1} parent=1 // loop_header
      %s13 = sphi 0, %s17
      %p14 = scmp.ge.s32.totalorder %s13, 4
      %s23 = sphi 0, %s25
      %s26 = sphi 0, %s23
      %s27 = sphi 0, %s26
      %s43 = sphi 0, %s27
      %s47 = sphi 0, %s47
      %s49 = sphi 0, %s47
      %s50 = sphi 0, %s49
      %s64 = sphi 0, %s50
      %s68 = sphi 0, %s68
      %s70 = sphi 0, %s68
      %s71 = sphi 0, %s70
      %s85 = sphi 0, %s71
      %s89 = sphi 0, %s89
      %s91 = sphi 0, %s89
      %s92 = sphi 0, %s91
      %s106 = sphi 0, %s92
      %s110 = sphi 0, %s110
      %s112 = sphi 0, %s110
      %s113 = sphi 0, %s112
      %s127 = sphi 0, %s113
      %s133 = sphi 0, %s135
      %s136 = sphi 0, %s133
      %s137 = sphi 0, %s136
      %s153 = sphi 0, %s137
    $region4: #{residual_forward.1} parent=1 // loop_header_branch
      %16 = sbr.rel (%p14) target = $region8
    $region5: #{residual_forward.1} parent=1 // loop_body
      %s18 = ssub.s32 %s13, 1
      %s19 = ssub.s32 %s13, 2
      %s20 = sadd.s32 %s13, 1
      %s21 = ssub.s32 %s13, %s20
      %p22 = scmp.eq.s32.totalorder %s21, 0
      %s24 = sadd.s32 %s23, 1
      %s25 = scalar_select %p22, %s23, %s24
      %p28 = pneg %p22
      %p29 = scmp.eq.s32.totalorder %s13, 1
      %p30 = por %p28, %p29
      %p31 = scmp.ne.s32.totalorder %s23, %s26
      %p32 = scmp.eq.s32.totalorder %s13, 0
      %p33 = por %p31, %p32
      %p34 = scmp.ne.s32.totalorder %s23, %s26
      %p35 = scmp.eq.s32.totalorder %s18, 1
      %p36 = por %p34, %p35
      %p37 = scmp.ne.s32.totalorder %s26, %s27
      %p38 = scmp.eq.s32.totalorder %s18, 0
      %p39 = por %p37, %p38
      %p40 = scmp.ne.s32.totalorder %s26, %s27
      %p41 = scmp.eq.s32.totalorder %s19, 1
      %p42 = por %p40, %p41
      %p44 = scmp.ne.s32.totalorder %s27, %s43
      %p45 = scmp.eq.s32.totalorder %s19, 0
      %p46 = por %p44, %p45
      %s48 = sadd.s32 %s47, 1
      %p51 = scmp.eq.s32.totalorder %s13, 1
      %p52 = scmp.ne.s32.totalorder %s47, %s49
      %p53 = scmp.eq.s32.totalorder %s13, 0
      %p54 = por %p52, %p53
      %p55 = scmp.ne.s32.totalorder %s47, %s49
      %p56 = scmp.eq.s32.totalorder %s18, 1
      %p57 = por %p55, %p56
      %p58 = scmp.ne.s32.totalorder %s49, %s50
      %p59 = scmp.eq.s32.totalorder %s18, 0
      %p60 = por %p58, %p59
      %p61 = scmp.ne.s32.totalorder %s49, %s50
      %p62 = scmp.eq.s32.totalorder %s19, 1
      %p63 = por %p61, %p62
      %p65 = scmp.ne.s32.totalorder %s50, %s64
      %p66 = scmp.eq.s32.totalorder %s19, 0
      %p67 = por %p65, %p66
      %s69 = sadd.s32 %s68, 1
      %p72 = scmp.eq.s32.totalorder %s13, 1
      %p73 = scmp.ne.s32.totalorder %s68, %s70
      %p74 = scmp.eq.s32.totalorder %s13, 0
      %p75 = por %p73, %p74
      %p76 = scmp.ne.s32.totalorder %s68, %s70
      %p77 = scmp.eq.s32.totalorder %s18, 1
      %p78 = por %p76, %p77
      %p79 = scmp.ne.s32.totalorder %s70, %s71
      %p80 = scmp.eq.s32.totalorder %s18, 0
      %p81 = por %p79, %p80
      %p82 = scmp.ne.s32.totalorder %s70, %s71
      %p83 = scmp.eq.s32.totalorder %s19, 1
      %p84 = por %p82, %p83
      %p86 = scmp.ne.s32.totalorder %s71, %s85
      %p87 = scmp.eq.s32.totalorder %s19, 0
      %p88 = por %p86, %p87
      %s90 = sadd.s32 %s89, 1
      %p93 = scmp.eq.s32.totalorder %s13, 1
      %p94 = scmp.ne.s32.totalorder %s89, %s91
      %p95 = scmp.eq.s32.totalorder %s13, 0
      %p96 = por %p94, %p95
      %p97 = scmp.ne.s32.totalorder %s89, %s91
      %p98 = scmp.eq.s32.totalorder %s18, 1
      %p99 = por %p97, %p98
      %p100 = scmp.ne.s32.totalorder %s91, %s92
      %p101 = scmp.eq.s32.totalorder %s18, 0
      %p102 = por %p100, %p101
      %p103 = scmp.ne.s32.totalorder %s91, %s92
      %p104 = scmp.eq.s32.totalorder %s19, 1
      %p105 = por %p103, %p104
      %p107 = scmp.ne.s32.totalorder %s92, %s106
      %p108 = scmp.eq.s32.totalorder %s19, 0
      %p109 = por %p107, %p108
      %s111 = sadd.s32 %s110, 1
      %p114 = scmp.eq.s32.totalorder %s13, 1
      %p115 = scmp.ne.s32.totalorder %s110, %s112
      %p116 = scmp.eq.s32.totalorder %s13, 0
      %p117 = por %p115, %p116
      %p118 = scmp.ne.s32.totalorder %s110, %s112
      %p119 = scmp.eq.s32.totalorder %s18, 1
      %p120 = por %p118, %p119
      %p121 = scmp.ne.s32.totalorder %s112, %s113
      %p122 = scmp.eq.s32.totalorder %s18, 0
      %p123 = por %p121, %p122
      %p124 = scmp.ne.s32.totalorder %s112, %s113
      %p125 = scmp.eq.s32.totalorder %s19, 1
      %p126 = por %p124, %p125
      %p128 = scmp.ne.s32.totalorder %s113, %s127
      %p129 = scmp.eq.s32.totalorder %s19, 0
      %p130 = por %p128, %p129
      %s131 = ssub.s32 %s13, %s20
      %p132 = scmp.eq.s32.totalorder %s131, 0
      %s134 = sadd.s32 %s133, 1
      %s135 = scalar_select %p132, %s133, %s134
      %p138 = pneg %p132
      %p139 = scmp.eq.s32.totalorder %s13, 1
      %p140 = por %p138, %p139
      %p141 = scmp.ne.s32.totalorder %s133, %s136
      %p142 = scmp.eq.s32.totalorder %s13, 0
      %p143 = por %p141, %p142
      %p144 = scmp.ne.s32.totalorder %s133, %s136
      %p145 = scmp.eq.s32.totalorder %s18, 1
      %p146 = por %p144, %p145
      %p147 = scmp.ne.s32.totalorder %s136, %s137
      %p148 = scmp.eq.s32.totalorder %s18, 0
      %p149 = por %p147, %p148
      %p150 = scmp.ne.s32.totalorder %s136, %s137
      %p151 = scmp.eq.s32.totalorder %s19, 1
      %p152 = por %p150, %p151
      %p154 = scmp.ne.s32.totalorder %s137, %s153
      %p155 = scmp.eq.s32.totalorder %s19, 0
      %p156 = por %p154, %p155
      %p157 = scmp.le.s32.totalorder 1, %s13
      %p158 = scmp.lt.s32.totalorder %s13, 3
      %p159 = pnand %p157, %p158
      %p160 = pneg %p159
      // Predicated region
      $region9: #{residual_forward.1} parent=5 // pred_check
        _
      $region10: #{residual_forward.1} parent=5 // pred_check_branch
        %162 = sbr.rel (%p159) target = $region12
      $region11: #{residual_forward.1} parent=5 // pred_region
        %s163 = ssub.s32 %s13, 1
        // Predicated region
        $region13: #{residual_forward.1} parent=11 // pred_check
          %p164 = pneg %p60
        $region14: #{residual_forward.1} parent=11 // pred_check_branch
          %166 = sbr.rel (%p164) target = $region16
        $region15: #{residual_forward.1} parent=11 // pred_region
          %s168 = ssub.s32 32, 32
          %169 = vsyncadd [#allocation4], %s168
          %s171 = sshll.u32 %s1, 4
          %s172 = int_to_ptr.vmem [resolvable:$true] %s171
          %174 = dma.vmem_to_smem %s172, 32, [#allocation3], [#allocation4]
        $region16: #{residual_forward.1} parent=11 // pred_fallthru
          _
        // Predicated region
        $region17: #{residual_forward.1} parent=11 // pred_check
          %p175 = pneg %p81
        $region18: #{residual_forward.1} parent=11 // pred_check_branch
          %177 = sbr.rel (%p175) target = $region20
        $region19: #{residual_forward.1} parent=11 // pred_region
          %s179 = ssub.s32 32, 32
          %180 = vsyncadd [#allocation6], %s179
          %s182 = sshll.u32 %s2, 4
          %s183 = int_to_ptr.vmem [resolvable:$true] %s182
          %185 = dma.vmem_to_smem %s183, 32, [#allocation5], [#allocation6]
        $region20: #{residual_forward.1} parent=11 // pred_fallthru
          _
        // Predicated region
        $region21: #{residual_forward.1} parent=11 // pred_check
          %p186 = pneg %p102
        $region22: #{residual_forward.1} parent=11 // pred_check_branch
          %188 = sbr.rel (%p186) target = $region24
        $region23: #{residual_forward.1} parent=11 // pred_region
          _
        $region24: #{residual_forward.1} parent=11 // pred_fallthru
          _
        // Predicated region
        $region25: #{residual_forward.1} parent=11 // pred_check
          %p189 = pneg %p123
        $region26: #{residual_forward.1} parent=11 // pred_check_branch
          %191 = sbr.rel (%p189) target = $region28
        $region27: #{residual_forward.1} parent=11 // pred_region
          _
        $region28: #{residual_forward.1} parent=11 // pred_fallthru
          _
      $region12: #{residual_forward.1} parent=5 // pred_fallthru
        _
      %p192 = scmp.lt.s32.totalorder %s13, 2
      // Predicated region
      $region29: #{residual_forward.1} parent=5 // pred_check
        %p193 = pneg %p192
      $region30: #{residual_forward.1} parent=5 // pred_check_branch
        %195 = sbr.rel (%p193) target = $region32
      $region31: #{residual_forward.1} parent=5 // pred_region
        // Predicated region
        $region33: #{residual_forward.1} parent=31 // pred_check
          %p196 = pneg %p33
        $region34: #{residual_forward.1} parent=31 // pred_check_branch
          %198 = sbr.rel (%p196) target = $region36
        $region35: #{residual_forward.1} parent=31 // pred_region
          %p199 = scmp.lt.s32.totalorder %s13, 1
          %s200 = scalar_select %p199, %s13, 1
          %s201 = smul.addr %s200, 8
          %s202 = smul.addr %s201, 8
          %s203 = scalar_lea.vmem %s0, %s202
        $region36: #{residual_forward.1} parent=31 // pred_fallthru
          _
      $region32: #{residual_forward.1} parent=5 // pred_fallthru
        _
      %p204 = scmp.le.s32.totalorder 1, %s13
      %p205 = scmp.lt.s32.totalorder %s13, 3
      %p206 = pnand %p204, %p205
      %p207 = pneg %p206
      // Predicated region
      $region37: #{residual_forward.1} parent=5 // pred_check
        _
      $region38: #{residual_forward.1} parent=5 // pred_check_branch
        %209 = sbr.rel (%p206) target = $region40
      $region39: #{residual_forward.1} parent=5 // pred_region
        %s210 = ssub.s32 %s13, 1
        // Predicated region
        $region41: #{residual_forward.1} parent=39 // pred_check
          %p211 = pneg %p60
        $region42: #{residual_forward.1} parent=39 // pred_check_branch
          %213 = sbr.rel (%p211) target = $region44
        $region43: #{residual_forward.1} parent=39 // pred_region
          %214 = dma.done [#allocation4], 32
        $region44: #{residual_forward.1} parent=39 // pred_fallthru
          _
        // Predicated region
        $region45: #{residual_forward.1} parent=39 // pred_check
          %p215 = pneg %p81
        $region46: #{residual_forward.1} parent=39 // pred_check_branch
          %217 = sbr.rel (%p215) target = $region48
        $region47: #{residual_forward.1} parent=39 // pred_region
          %218 = dma.done [#allocation6], 32
        $region48: #{residual_forward.1} parent=39 // pred_fallthru
          _
        %219 = sfence
        %p220 = scmp.lt.s32.totalorder %s18, 1
        %s221 = scalar_select %p220, %s18, 1
        %s222 = smul.addr %s221, 8
        %s223 = smul.addr %s222, 8
        %s224 = scalar_lea.vmem %s0, %s223
        %p225 = pneg %p39
        %p226 = pneg %p36
        %p227 = pneg %p60
        %p228 = pneg %p57
        %p229 = pneg %p81
        %p230 = pneg %p78
        %p231 = pneg %p102
        %p232 = pneg %p99
        %p233 = pneg %p123
        %p234 = pneg %p120
        %p235 = pneg %p149
        %p236 = pneg %p146
        %p237 = scmp.lt.s32.totalorder %s18, 1
        %s238 = scalar_select %p237, %s18, 1
        %s239 = smul.addr %s238, 8
        %s240 = smul.addr %s239, 8
        %s241 = scalar_lea.vmem %s5, %s240
        %p242 = scmp.lt.s32.totalorder %s18, 1
        %s243 = scalar_select %p242, %s18, 1
        %s244 = smul.addr %s243, 8
        %s245 = smul.addr %s244, 8
        %s246 = scalar_lea.vmem %s0, %s245
        %p247 = scmp.lt.s32.totalorder %s18, 1
        %s248 = scalar_select %p247, %s18, 1
        %s249 = smul.addr %s248, 8
        %s250 = smul.addr %s249, 8
        %s251 = scalar_lea.vmem %s5, %s250
        %v252 = vld [vmem:[%s3] sm:$0xff]
        %v253 = vld [vmem:[%s3 + $0x8] sm:$0x1]
        %v254 = vld [vmem:[%s4] sm:$0xff]
        %v255 = vld [vmem:[%s4 + $0x8] sm:$0x1]
        %v256 = vld [vmem:[%s246] sm:$0xff]
        %v257 = vld [vmem:[%s246 + $0x8] sm:$0x1]
        %s258 = scalar_lea.vmem %s246, 16
        %v259 = vld [vmem:[%s258] sm:$0xff]
        %v260 = vld [vmem:[%s258 + $0x8] sm:$0x1]
        %s261 = scalar_lea.vmem %s246, 32
        %v262 = vld [vmem:[%s261] sm:$0xff]
        %v263 = vld [vmem:[%s261 + $0x8] sm:$0x1]
        %s264 = scalar_lea.vmem %s246, 48
        %v265 = vld [vmem:[%s264] sm:$0xff]
        %v266 = vld [vmem:[%s264 + $0x8] sm:$0x1]
        %v268 = vrot.slane %v256, 7
        %vm270 = vcmask 1040384
        %v271 = vsel %vm270, 0.0, %v268
        %273 = vrot.lane.b32.xlu0 %v271, 1
        %v274 = vpop.permute.xlu0 %273
        %275 = vrot.lane.b32.xlu0 %v268, 1
        %v276 = vpop.permute.xlu0 %275
        %vm279 = vcmask 7168
        %v280 = vsel %vm279, 0.0, %v274
        %v281 = vsel %vm279, 0.0, %v276
        %s282 = sld [smem:[#allocation3]]
        %v283 = vstv %s282
        %v284 = vmul.f32 %v283, %v280
        %v285 = vmul.f32 %v283, %v281
        %v286 = vadd.f32 %v284, 0.0
        %v287 = vadd.f32 %v285, 0.0
        %s288 = sld [smem:[#allocation3 + $0x24]]
        %v289 = vstv %s288
        %v290 = vmul.f32 %v289, %v280
        %v291 = vmul.f32 %v289, %v281
        %v292 = vadd.f32 %v290, 0.0
        %v293 = vadd.f32 %v291, 0.0
        %s294 = sld [smem:[#allocation3 + $0x48]]
        %v295 = vstv %s294
        %v296 = vmul.f32 %v295, %v280
        %v297 = vmul.f32 %v295, %v281
        %v298 = vadd.f32 %v296, 0.0
        %v299 = vadd.f32 %v297, 0.0
        %s300 = sld [smem:[#allocation3 + $0x6c]]
        %v301 = vstv %s300
        %v302 = vmul.f32 %v301, %v280
        %v303 = vmul.f32 %v301, %v281
        %v304 = vadd.f32 %v302, 0.0
        %v305 = vadd.f32 %v303, 0.0
        %v307 = vrot.slane %v259, 7
        %v309 = vsel %vm270, 0.0, %v307
        %311 = vrot.lane.b32.xlu0 %v309, 1
        %v312 = vpop.permute.xlu0 %311
        %313 = vrot.lane.b32.xlu0 %v307, 1
        %v314 = vpop.permute.xlu0 %313
        %v317 = vsel %vm279, 0.0, %v312
        %v318 = vsel %vm279, 0.0, %v314
        %s319 = sld [smem:[#allocation3 + $0x9]]
        %v320 = vstv %s319
        %v321 = vmul.f32 %v320, %v317
        %v322 = vmul.f32 %v320, %v318
        %v323 = vadd.f32 %v286, %v321
        %v324 = vadd.f32 %v287, %v322
        %s325 = sld [smem:[#allocation3 + $0x2d]]
        %v326 = vstv %s325
        %v327 = vmul.f32 %v326, %v317
        %v328 = vmul.f32 %v326, %v318
        %v329 = vadd.f32 %v292, %v327
        %v330 = vadd.f32 %v293, %v328
        %s331 = sld [smem:[#allocation3 + $0x51]]
        %v332 = vstv %s331
        %v333 = vmul.f32 %v332, %v317
        %v334 = vmul.f32 %v332, %v318
        %v335 = vadd.f32 %v298, %v333
        %v336 = vadd.f32 %v299, %v334
        %s337 = sld [smem:[#allocation3 + $0x75]]
        %v338 = vstv %s337
        %v339 = vmul.f32 %v338, %v317
        %v340 = vmul.f32 %v338, %v318
        %v341 = vadd.f32 %v304, %v339
        %v342 = vadd.f32 %v305, %v340
        %v344 = vrot.slane %v262, 7
        %v346 = vsel %vm270, 0.0, %v344
        %348 = vrot.lane.b32.xlu0 %v346, 1
        %v349 = vpop.permute.xlu0 %348
        %350 = vrot.lane.b32.xlu0 %v344, 1
        %v351 = vpop.permute.xlu0 %350
        %v354 = vsel %vm279, 0.0, %v349
        %v355 = vsel %vm279, 0.0, %v351
        %s356 = sld [smem:[#allocation3 + $0x12]]
        %v357 = vstv %s356
        %v358 = vmul.f32 %v357, %v354
        %v359 = vmul.f32 %v357, %v355
        %v360 = vadd.f32 %v323, %v358
        %v361 = vadd.f32 %v324, %v359
        %s362 = sld [smem:[#allocation3 + $0x36]]
        %v363 = vstv %s362
        %v364 = vmul.f32 %v363, %v354
        %v365 = vmul.f32 %v363, %v355
        %v366 = vadd.f32 %v329, %v364
        %v367 = vadd.f32 %v330, %v365
        %s368 = sld [smem:[#allocation3 + $0x5a]]
        %v369 = vstv %s368
        %v370 = vmul.f32 %v369, %v354
        %v371 = vmul.f32 %v369, %v355
        %v372 = vadd.f32 %v335, %v370
        %v373 = vadd.f32 %v336, %v371
        %s374 = sld [smem:[#allocation3 + $0x7e]]
        %v375 = vstv %s374
        %v376 = vmul.f32 %v375, %v354
        %v377 = vmul.f32 %v375, %v355
        %v378 = vadd.f32 %v341, %v376
        %v379 = vadd.f32 %v342, %v377
        %v381 = vrot.slane %v265, 7
        %v383 = vsel %vm270, 0.0, %v381
        %385 = vrot.lane.b32.xlu0 %v383, 1
        %v386 = vpop.permute.xlu0 %385
        %387 = vrot.lane.b32.xlu0 %v381, 1
        %v388 = vpop.permute.xlu0 %387
        %v391 = vsel %vm279, 0.0, %v386
        %v392 = vsel %vm279, 0.0, %v388
        %s393 = sld [smem:[#allocation3 + $0x1b]]
        %v394 = vstv %s393
        %v395 = vmul.f32 %v394, %v391
        %v396 = vmul.f32 %v394, %v392
        %v397 = vadd.f32 %v360, %v395
        %v398 = vadd.f32 %v361, %v396
        %s399 = sld [smem:[#allocation3 + $0x3f]]
        %v400 = vstv %s399
        %v401 = vmul.f32 %v400, %v391
        %v402 = vmul.f32 %v400, %v392
        %v403 = vadd.f32 %v366, %v401
        %v404 = vadd.f32 %v367, %v402
        %s405 = sld [smem:[#allocation3 + $0x63]]
        %v406 = vstv %s405
        %v407 = vmul.f32 %v406, %v391
        %v408 = vmul.f32 %v406, %v392
        %v409 = vadd.f32 %v372, %v407
        %v410 = vadd.f32 %v373, %v408
        %s411 = sld [smem:[#allocation3 + $0x87]]
        %v412 = vstv %s411
        %v413 = vmul.f32 %v412, %v391
        %v414 = vmul.f32 %v412, %v392
        %v415 = vadd.f32 %v378, %v413
        %v416 = vadd.f32 %v379, %v414
        %s417 = sld [smem:[#allocation3 + $0x1]]
        %v418 = vstv %s417
        %v419 = vmul.f32 %v418, %v271
        %v420 = vmul.f32 %v418, %v268
        %v421 = vadd.f32 %v397, %v419
        %v422 = vadd.f32 %v398, %v420
        %s423 = sld [smem:[#allocation3 + $0x25]]
        %v424 = vstv %s423
        %v425 = vmul.f32 %v424, %v271
        %v426 = vmul.f32 %v424, %v268
        %v427 = vadd.f32 %v403, %v425
        %v428 = vadd.f32 %v404, %v426
        %s429 = sld [smem:[#allocation3 + $0x49]]
        %v430 = vstv %s429
        %v431 = vmul.f32 %v430, %v271
        %v432 = vmul.f32 %v430, %v268
        %v433 = vadd.f32 %v409, %v431
        %v434 = vadd.f32 %v410, %v432
        %s435 = sld [smem:[#allocation3 + $0x6d]]
        %v436 = vstv %s435
        %v437 = vmul.f32 %v436, %v271
        %v438 = vmul.f32 %v436, %v268
        %v439 = vadd.f32 %v415, %v437
        %v440 = vadd.f32 %v416, %v438
        %s441 = sld [smem:[#allocation3 + $0xa]]
        %v442 = vstv %s441
        %v443 = vmul.f32 %v442, %v309
        %v444 = vmul.f32 %v442, %v307
        %v445 = vadd.f32 %v421, %v443
        %v446 = vadd.f32 %v422, %v444
        %s447 = sld [smem:[#allocation3 + $0x2e]]
        %v448 = vstv %s447
        %v449 = vmul.f32 %v448, %v309
        %v450 = vmul.f32 %v448, %v307
        %v451 = vadd.f32 %v427, %v449
        %v452 = vadd.f32 %v428, %v450
        %s453 = sld [smem:[#allocation3 + $0x52]]
        %v454 = vstv %s453
        %v455 = vmul.f32 %v454, %v309
        %v456 = vmul.f32 %v454, %v307
        %v457 = vadd.f32 %v433, %v455
        %v458 = vadd.f32 %v434, %v456
        %s459 = sld [smem:[#allocation3 + $0x76]]
        %v460 = vstv %s459
        %v461 = vmul.f32 %v460, %v309
        %v462 = vmul.f32 %v460, %v307
        %v463 = vadd.f32 %v439, %v461
        %v464 = vadd.f32 %v440, %v462
        %s465 = sld [smem:[#allocation3 + $0x13]]
        %v466 = vstv %s465
        %v467 = vmul.f32 %v466, %v346
        %v468 = vmul.f32 %v466, %v344
        %v469 = vadd.f32 %v445, %v467
        %v470 = vadd.f32 %v446, %v468
        %s471 = sld [smem:[#allocation3 + $0x37]]
        %v472 = vstv %s471
        %v473 = vmul.f32 %v472, %v346
        %v474 = vmul.f32 %v472, %v344
        %v475 = vadd.f32 %v451, %v473
        %v476 = vadd.f32 %v452, %v474
        %s477 = sld [smem:[#allocation3 + $0x5b]]
        %v478 = vstv %s477
        %v479 = vmul.f32 %v478, %v346
        %v480 = vmul.f32 %v478, %v344
        %v481 = vadd.f32 %v457, %v479
        %v482 = vadd.f32 %v458, %v480
        %s483 = sld [smem:[#allocation3 + $0x7f]]
        %v484 = vstv %s483
        %v485 = vmul.f32 %v484, %v346
        %v486 = vmul.f32 %v484, %v344
        %v487 = vadd.f32 %v463, %v485
        %v488 = vadd.f32 %v464, %v486
        %s489 = sld [smem:[#allocation3 + $0x1c]]
        %v490 = vstv %s489
        %v491 = vmul.f32 %v490, %v383
        %v492 = vmul.f32 %v490, %v381
        %v493 = vadd.f32 %v469, %v491
        %v494 = vadd.f32 %v470, %v492
        %s495 = sld [smem:[#allocation3 + $0x40]]
        %v496 = vstv %s495
        %v497 = vmul.f32 %v496, %v383
        %v498 = vmul.f32 %v496, %v381
        %v499 = vadd.f32 %v475, %v497
        %v500 = vadd.f32 %v476, %v498
        %s501 = sld [smem:[#allocation3 + $0x64]]
        %v502 = vstv %s501
        %v503 = vmul.f32 %v502, %v383
        %v504 = vmul.f32 %v502, %v381
        %v505 = vadd.f32 %v481, %v503
        %v506 = vadd.f32 %v482, %v504
        %s507 = sld [smem:[#allocation3 + $0x88]]
        %v508 = vstv %s507
        %v509 = vmul.f32 %v508, %v383
        %v510 = vmul.f32 %v508, %v381
        %v511 = vadd.f32 %v487, %v509
        %v512 = vadd.f32 %v488, %v510
        %513 = vrot.lane.b32.xlu0 %v271, 127
        %v514 = vpop.permute.xlu0 %513
        %515 = vrot.lane.b32.xlu0 %v268, 127
        %v516 = vpop.permute.xlu0 %515
        %vm519 = vcmask 1039360
        %v520 = vsel %vm519, %v514, 0.0
        %v521 = vsel %vm519, %v516, 0.0
        %s522 = sld [smem:[#allocation3 + $0x2]]
        %v523 = vstv %s522
        %v524 = vmul.f32 %v523, %v520
        %v525 = vmul.f32 %v523, %v521
        %v526 = vadd.f32 %v493, %v524
        %v527 = vadd.f32 %v494, %v525
        %s528 = sld [smem:[#allocation3 + $0x26]]
        %v529 = vstv %s528
        %v530 = vmul.f32 %v529, %v520
        %v531 = vmul.f32 %v529, %v521
        %v532 = vadd.f32 %v499, %v530
        %v533 = vadd.f32 %v500, %v531
        %s534 = sld [smem:[#allocation3 + $0x4a]]
        %v535 = vstv %s534
        %v536 = vmul.f32 %v535, %v520
        %v537 = vmul.f32 %v535, %v521
        %v538 = vadd.f32 %v505, %v536
        %v539 = vadd.f32 %v506, %v537
        %s540 = sld [smem:[#allocation3 + $0x6e]]
        %v541 = vstv %s540
        %v542 = vmul.f32 %v541, %v520
        %v543 = vmul.f32 %v541, %v521
        %v544 = vadd.f32 %v511, %v542
        %v545 = vadd.f32 %v512, %v543
        %546 = vrot.lane.b32.xlu0 %v309, 127
        %v547 = vpop.permute.xlu0 %546
        %548 = vrot.lane.b32.xlu0 %v307, 127
        %v549 = vpop.permute.xlu0 %548
        %v552 = vsel %vm519, %v547, 0.0
        %v553 = vsel %vm519, %v549, 0.0
        %s554 = sld [smem:[#allocation3 + $0xb]]
        %v555 = vstv %s554
        %v556 = vmul.f32 %v555, %v552
        %v557 = vmul.f32 %v555, %v553
        %v558 = vadd.f32 %v526, %v556
        %v559 = vadd.f32 %v527, %v557
        %s560 = sld [smem:[#allocation3 + $0x2f]]
        %v561 = vstv %s560
        %v562 = vmul.f32 %v561, %v552
        %v563 = vmul.f32 %v561, %v553
        %v564 = vadd.f32 %v532, %v562
        %v565 = vadd.f32 %v533, %v563
        %s566 = sld [smem:[#allocation3 + $0x53]]
        %v567 = vstv %s566
        %v568 = vmul.f32 %v567, %v552
        %v569 = vmul.f32 %v567, %v553
        %v570 = vadd.f32 %v538, %v568
        %v571 = vadd.f32 %v539, %v569
        %s572 = sld [smem:[#allocation3 + $0x77]]
        %v573 = vstv %s572
        %v574 = vmul.f32 %v573, %v552
        %v575 = vmul.f32 %v573, %v553
        %v576 = vadd.f32 %v544, %v574
        %v577 = vadd.f32 %v545, %v575
        %578 = vrot.lane.b32.xlu0 %v346, 127
        %v579 = vpop.permute.xlu0 %578
        %580 = vrot.lane.b32.xlu0 %v344, 127
        %v581 = vpop.permute.xlu0 %580
        %v584 = vsel %vm519, %v579, 0.0
        %v585 = vsel %vm519, %v581, 0.0
        %s586 = sld [smem:[#allocation3 + $0x14]]
        %v587 = vstv %s586
        %v588 = vmul.f32 %v587, %v584
        %v589 = vmul.f32 %v587, %v585
        %v590 = vadd.f32 %v558, %v588
        %v591 = vadd.f32 %v559, %v589
        %s592 = sld [smem:[#allocation3 + $0x38]]
        %v593 = vstv %s592
        %v594 = vmul.f32 %v593, %v584
        %v595 = vmul.f32 %v593, %v585
        %v596 = vadd.f32 %v564, %v594
        %v597 = vadd.f32 %v565, %v595
        %s598 = sld [smem:[#allocation3 + $0x5c]]
        %v599 = vstv %s598
        %v600 = vmul.f32 %v599, %v584
        %v601 = vmul.f32 %v599, %v585
        %v602 = vadd.f32 %v570, %v600
        %v603 = vadd.f32 %v571, %v601
        %s604 = sld [smem:[#allocation3 + $0x80]]
        %v605 = vstv %s604
        %v606 = vmul.f32 %v605, %v584
        %v607 = vmul.f32 %v605, %v585
        %v608 = vadd.f32 %v576, %v606
        %v609 = vadd.f32 %v577, %v607
        %610 = vrot.lane.b32.xlu0 %v383, 127
        %v611 = vpop.permute.xlu0 %610
        %612 = vrot.lane.b32.xlu0 %v381, 127
        %v613 = vpop.permute.xlu0 %612
        %v616 = vsel %vm519, %v611, 0.0
        %v617 = vsel %vm519, %v613, 0.0
        %s618 = sld [smem:[#allocation3 + $0x1d]]
        %v619 = vstv %s618
        %v620 = vmul.f32 %v619, %v616
        %v621 = vmul.f32 %v619, %v617
        %v622 = vadd.f32 %v590, %v620
        %v623 = vadd.f32 %v591, %v621
        %s624 = sld [smem:[#allocation3 + $0x41]]
        %v625 = vstv %s624
        %v626 = vmul.f32 %v625, %v616
        %v627 = vmul.f32 %v625, %v617
        %v628 = vadd.f32 %v596, %v626
        %v629 = vadd.f32 %v597, %v627
        %s630 = sld [smem:[#allocation3 + $0x65]]
        %v631 = vstv %s630
        %v632 = vmul.f32 %v631, %v616
        %v633 = vmul.f32 %v631, %v617
        %v634 = vadd.f32 %v602, %v632
        %v635 = vadd.f32 %v603, %v633
        %s636 = sld [smem:[#allocation3 + $0x89]]
        %v637 = vstv %s636
        %v638 = vmul.f32 %v637, %v616
        %v639 = vmul.f32 %v637, %v617
        %v640 = vadd.f32 %v608, %v638
        %v641 = vadd.f32 %v609, %v639
        %643 = vrot.lane.b32.xlu0 %v256, 1
        %v644 = vpop.permute.xlu0 %643
        %645 = vrot.lane.b32.xlu0 %v257, 1
        %v646 = vpop.permute.xlu0 %645
        %v649 = vsel %vm279, 0.0, %v644
        %v650 = vsel %vm279, 0.0, %v646
        %s651 = sld [smem:[#allocation3 + $0x3]]
        %v652 = vstv %s651
        %v653 = vmul.f32 %v652, %v649
        %v654 = vmul.f32 %v652, %v650
        %v655 = vadd.f32 %v622, %v653
        %v656 = vadd.f32 %v623, %v654
        %s657 = sld [smem:[#allocation3 + $0x27]]
        %v658 = vstv %s657
        %v659 = vmul.f32 %v658, %v649
        %v660 = vmul.f32 %v658, %v650
        %v661 = vadd.f32 %v628, %v659
        %v662 = vadd.f32 %v629, %v660
        %s663 = sld [smem:[#allocation3 + $0x4b]]
        %v664 = vstv %s663
        %v665 = vmul.f32 %v664, %v649
        %v666 = vmul.f32 %v664, %v650
        %v667 = vadd.f32 %v634, %v665
        %v668 = vadd.f32 %v635, %v666
        %s669 = sld [smem:[#allocation3 + $0x6f]]
        %v670 = vstv %s669
        %v671 = vmul.f32 %v670, %v649
        %v672 = vmul.f32 %v670, %v650
        %v673 = vadd.f32 %v640, %v671
        %v674 = vadd.f32 %v641, %v672
        %676 = vrot.lane.b32.xlu0 %v259, 1
        %v677 = vpop.permute.xlu0 %676
        %678 = vrot.lane.b32.xlu0 %v260, 1
        %v679 = vpop.permute.xlu0 %678
        %v682 = vsel %vm279, 0.0, %v677
        %v683 = vsel %vm279, 0.0, %v679
        %s684 = sld [smem:[#allocation3 + $0xc]]
        %v685 = vstv %s684
        %v686 = vmul.f32 %v685, %v682
        %v687 = vmul.f32 %v685, %v683
        %v688 = vadd.f32 %v655, %v686
        %v689 = vadd.f32 %v656, %v687
        %s690 = sld [smem:[#allocation3 + $0x30]]
        %v691 = vstv %s690
        %v692 = vmul.f32 %v691, %v682
        %v693 = vmul.f32 %v691, %v683
        %v694 = vadd.f32 %v661, %v692
        %v695 = vadd.f32 %v662, %v693
        %s696 = sld [smem:[#allocation3 + $0x54]]
        %v697 = vstv %s696
        %v698 = vmul.f32 %v697, %v682
        %v699 = vmul.f32 %v697, %v683
        %v700 = vadd.f32 %v667, %v698
        %v701 = vadd.f32 %v668, %v699
        %s702 = sld [smem:[#allocation3 + $0x78]]
        %v703 = vstv %s702
        %v704 = vmul.f32 %v703, %v682
        %v705 = vmul.f32 %v703, %v683
        %v706 = vadd.f32 %v673, %v704
        %v707 = vadd.f32 %v674, %v705
        %709 = vrot.lane.b32.xlu0 %v262, 1
        %v710 = vpop.permute.xlu0 %709
        %711 = vrot.lane.b32.xlu0 %v263, 1
        %v712 = vpop.permute.xlu0 %711
        %v715 = vsel %vm279, 0.0, %v710
        %v716 = vsel %vm279, 0.0, %v712
        %s717 = sld [smem:[#allocation3 + $0x15]]
        %v718 = vstv %s717
        %v719 = vmul.f32 %v718, %v715
        %v720 = vmul.f32 %v718, %v716
        %v721 = vadd.f32 %v688, %v719
        %v722 = vadd.f32 %v689, %v720
        %s723 = sld [smem:[#allocation3 + $0x39]]
        %v724 = vstv %s723
        %v725 = vmul.f32 %v724, %v715
        %v726 = vmul.f32 %v724, %v716
        %v727 = vadd.f32 %v694, %v725
        %v728 = vadd.f32 %v695, %v726
        %s729 = sld [smem:[#allocation3 + $0x5d]]
        %v730 = vstv %s729
        %v731 = vmul.f32 %v730, %v715
        %v732 = vmul.f32 %v730, %v716
        %v733 = vadd.f32 %v700, %v731
        %v734 = vadd.f32 %v701, %v732
        %s735 = sld [smem:[#allocation3 + $0x81]]
        %v736 = vstv %s735
        %v737 = vmul.f32 %v736, %v715
        %v738 = vmul.f32 %v736, %v716
        %v739 = vadd.f32 %v706, %v737
        %v740 = vadd.f32 %v707, %v738
        %742 = vrot.lane.b32.xlu0 %v265, 1
        %v743 = vpop.permute.xlu0 %742
        %744 = vrot.lane.b32.xlu0 %v266, 1
        %v745 = vpop.permute.xlu0 %744
        %v748 = vsel %vm279, 0.0, %v743
        %v749 = vsel %vm279, 0.0, %v745
        %s750 = sld [smem:[#allocation3 + $0x1e]]
        %v751 = vstv %s750
        %v752 = vmul.f32 %v751, %v748
        %v753 = vmul.f32 %v751, %v749
        %v754 = vadd.f32 %v721, %v752
        %v755 = vadd.f32 %v722, %v753
        %s756 = sld [smem:[#allocation3 + $0x42]]
        %v757 = vstv %s756
        %v758 = vmul.f32 %v757, %v748
        %v759 = vmul.f32 %v757, %v749
        %v760 = vadd.f32 %v727, %v758
        %v761 = vadd.f32 %v728, %v759
        %s762 = sld [smem:[#allocation3 + $0x66]]
        %v763 = vstv %s762
        %v764 = vmul.f32 %v763, %v748
        %v765 = vmul.f32 %v763, %v749
        %v766 = vadd.f32 %v733, %v764
        %v767 = vadd.f32 %v734, %v765
        %s768 = sld [smem:[#allocation3 + $0x8a]]
        %v769 = vstv %s768
        %v770 = vmul.f32 %v769, %v748
        %v771 = vmul.f32 %v769, %v749
        %v772 = vadd.f32 %v739, %v770
        %v773 = vadd.f32 %v740, %v771
        %s774 = sld [smem:[#allocation3 + $0x4]]
        %v775 = vstv %s774
        %v776 = vmul.f32 %v775, %v256
        %v777 = vmul.f32 %v775, %v257
        %v778 = vadd.f32 %v754, %v776
        %v779 = vadd.f32 %v755, %v777
        %s780 = sld [smem:[#allocation3 + $0x28]]
        %v781 = vstv %s780
        %v782 = vmul.f32 %v781, %v256
        %v783 = vmul.f32 %v781, %v257
        %v784 = vadd.f32 %v760, %v782
        %v785 = vadd.f32 %v761, %v783
        %s786 = sld [smem:[#allocation3 + $0x4c]]
        %v787 = vstv %s786
        %v788 = vmul.f32 %v787, %v256
        %v789 = vmul.f32 %v787, %v257
        %v790 = vadd.f32 %v766, %v788
        %v791 = vadd.f32 %v767, %v789
        %s792 = sld [smem:[#allocation3 + $0x70]]
        %v793 = vstv %s792
        %v794 = vmul.f32 %v793, %v256
        %v795 = vmul.f32 %v793, %v257
        %v796 = vadd.f32 %v772, %v794
        %v797 = vadd.f32 %v773, %v795
        %s798 = sld [smem:[#allocation3 + $0xd]]
        %v799 = vstv %s798
        %v800 = vmul.f32 %v799, %v259
        %v801 = vmul.f32 %v799, %v260
        %v802 = vadd.f32 %v778, %v800
        %v803 = vadd.f32 %v779, %v801
        %s804 = sld [smem:[#allocation3 + $0x31]]
        %v805 = vstv %s804
        %v806 = vmul.f32 %v805, %v259
        %v807 = vmul.f32 %v805, %v260
        %v808 = vadd.f32 %v784, %v806
        %v809 = vadd.f32 %v785, %v807
        %s810 = sld [smem:[#allocation3 + $0x55]]
        %v811 = vstv %s810
        %v812 = vmul.f32 %v811, %v259
        %v813 = vmul.f32 %v811, %v260
        %v814 = vadd.f32 %v790, %v812
        %v815 = vadd.f32 %v791, %v813
        %s816 = sld [smem:[#allocation3 + $0x79]]
        %v817 = vstv %s816
        %v818 = vmul.f32 %v817, %v259
        %v819 = vmul.f32 %v817, %v260
        %v820 = vadd.f32 %v796, %v818
        %v821 = vadd.f32 %v797, %v819
        %s822 = sld [smem:[#allocation3 + $0x16]]
        %v823 = vstv %s822
        %v824 = vmul.f32 %v823, %v262
        %v825 = vmul.f32 %v823, %v263
        %v826 = vadd.f32 %v802, %v824
        %v827 = vadd.f32 %v803, %v825
        %s828 = sld [smem:[#allocation3 + $0x3a]]
        %v829 = vstv %s828
        %v830 = vmul.f32 %v829, %v262
        %v831 = vmul.f32 %v829, %v263
        %v832 = vadd.f32 %v808, %v830
        %v833 = vadd.f32 %v809, %v831
        %s834 = sld [smem:[#allocation3 + $0x5e]]
        %v835 = vstv %s834
        %v836 = vmul.f32 %v835, %v262
        %v837 = vmul.f32 %v835, %v263
        %v838 = vadd.f32 %v814, %v836
        %v839 = vadd.f32 %v815, %v837
        %s840 = sld [smem:[#allocation3 + $0x82]]
        %v841 = vstv %s840
        %v842 = vmul.f32 %v841, %v262
        %v843 = vmul.f32 %v841, %v263
        %v844 = vadd.f32 %v820, %v842
        %v845 = vadd.f32 %v821, %v843
        %s846 = sld [smem:[#allocation3 + $0x1f]]
        %v847 = vstv %s846
        %v848 = vmul.f32 %v847, %v265
        %v849 = vmul.f32 %v847, %v266
        %v850 = vadd.f32 %v826, %v848
        %v851 = vadd.f32 %v827, %v849
        %s852 = sld [smem:[#allocation3 + $0x43]]
        %v853 = vstv %s852
        %v854 = vmul.f32 %v853, %v265
        %v855 = vmul.f32 %v853, %v266
        %v856 = vadd.f32 %v832, %v854
        %v857 = vadd.f32 %v833, %v855
        %s858 = sld [smem:[#allocation3 + $0x67]]
        %v859 = vstv %s858
        %v860 = vmul.f32 %v859, %v265
        %v861 = vmul.f32 %v859, %v266
        %v862 = vadd.f32 %v838, %v860
        %v863 = vadd.f32 %v839, %v861
        %s864 = sld [smem:[#allocation3 + $0x8b]]
        %v865 = vstv %s864
        %v866 = vmul.f32 %v865, %v265
        %v867 = vmul.f32 %v865, %v266
        %v868 = vadd.f32 %v844, %v866
        %v869 = vadd.f32 %v845, %v867
        %870 = vrot.lane.b32.xlu0 %v256, 127
        %v871 = vpop.permute.xlu0 %870
        %872 = vrot.lane.b32.xlu0 %v257, 127
        %v873 = vpop.permute.xlu0 %872
        %v876 = vsel %vm519, %v871, 0.0
        %v877 = vsel %vm519, %v873, 0.0
        %s878 = sld [smem:[#allocation3 + $0x5]]
        %v879 = vstv %s878
        %v880 = vmul.f32 %v879, %v876
        %v881 = vmul.f32 %v879, %v877
        %v882 = vadd.f32 %v850, %v880
        %v883 = vadd.f32 %v851, %v881
        %s884 = sld [smem:[#allocation3 + $0x29]]
        %v885 = vstv %s884
        %v886 = vmul.f32 %v885, %v876
        %v887 = vmul.f32 %v885, %v877
        %v888 = vadd.f32 %v856, %v886
        %v889 = vadd.f32 %v857, %v887
        %s890 = sld [smem:[#allocation3 + $0x4d]]
        %v891 = vstv %s890
        %v892 = vmul.f32 %v891, %v876
        %v893 = vmul.f32 %v891, %v877
        %v894 = vadd.f32 %v862, %v892
        %v895 = vadd.f32 %v863, %v893
        %s896 = sld [smem:[#allocation3 + $0x71]]
        %v897 = vstv %s896
        %v898 = vmul.f32 %v897, %v876
        %v899 = vmul.f32 %v897, %v877
        %v900 = vadd.f32 %v868, %v898
        %v901 = vadd.f32 %v869, %v899
        %902 = vrot.lane.b32.xlu0 %v259, 127
        %v903 = vpop.permute.xlu0 %902
        %904 = vrot.lane.b32.xlu0 %v260, 127
        %v905 = vpop.permute.xlu0 %904
        %v908 = vsel %vm519, %v903, 0.0
        %v909 = vsel %vm519, %v905, 0.0
        %s910 = sld [smem:[#allocation3 + $0xe]]
        %v911 = vstv %s910
        %v912 = vmul.f32 %v911, %v908
        %v913 = vmul.f32 %v911, %v909
        %v914 = vadd.f32 %v882, %v912
        %v915 = vadd.f32 %v883, %v913
        %s916 = sld [smem:[#allocation3 + $0x32]]
        %v917 = vstv %s916
        %v918 = vmul.f32 %v917, %v908
        %v919 = vmul.f32 %v917, %v909
        %v920 = vadd.f32 %v888, %v918
        %v921 = vadd.f32 %v889, %v919
        %s922 = sld [smem:[#allocation3 + $0x56]]
        %v923 = vstv %s922
        %v924 = vmul.f32 %v923, %v908
        %v925 = vmul.f32 %v923, %v909
        %v926 = vadd.f32 %v894, %v924
        %v927 = vadd.f32 %v895, %v925
        %s928 = sld [smem:[#allocation3 + $0x7a]]
        %v929 = vstv %s928
        %v930 = vmul.f32 %v929, %v908
        %v931 = vmul.f32 %v929, %v909
        %v932 = vadd.f32 %v900, %v930
        %v933 = vadd.f32 %v901, %v931
        %934 = vrot.lane.b32.xlu0 %v262, 127
        %v935 = vpop.permute.xlu0 %934
        %936 = vrot.lane.b32.xlu0 %v263, 127
        %v937 = vpop.permute.xlu0 %936
        %v940 = vsel %vm519, %v935, 0.0
        %v941 = vsel %vm519, %v937, 0.0
        %s942 = sld [smem:[#allocation3 + $0x17]]
        %v943 = vstv %s942
        %v944 = vmul.f32 %v943, %v940
        %v945 = vmul.f32 %v943, %v941
        %v946 = vadd.f32 %v914, %v944
        %v947 = vadd.f32 %v915, %v945
        %s948 = sld [smem:[#allocation3 + $0x3b]]
        %v949 = vstv %s948
        %v950 = vmul.f32 %v949, %v940
        %v951 = vmul.f32 %v949, %v941
        %v952 = vadd.f32 %v920, %v950
        %v953 = vadd.f32 %v921, %v951
        %s954 = sld [smem:[#allocation3 + $0x5f]]
        %v955 = vstv %s954
        %v956 = vmul.f32 %v955, %v940
        %v957 = vmul.f32 %v955, %v941
        %v958 = vadd.f32 %v926, %v956
        %v959 = vadd.f32 %v927, %v957
        %s960 = sld [smem:[#allocation3 + $0x83]]
        %v961 = vstv %s960
        %v962 = vmul.f32 %v961, %v940
        %v963 = vmul.f32 %v961, %v941
        %v964 = vadd.f32 %v932, %v962
        %v965 = vadd.f32 %v933, %v963
        %966 = vrot.lane.b32.xlu0 %v265, 127
        %v967 = vpop.permute.xlu0 %966
        %968 = vrot.lane.b32.xlu0 %v266, 127
        %v969 = vpop.permute.xlu0 %968
        %v972 = vsel %vm519, %v967, 0.0
        %v973 = vsel %vm519, %v969, 0.0
        %s974 = sld [smem:[#allocation3 + $0x20]]
        %v975 = vstv %s974
        %v976 = vmul.f32 %v975, %v972
        %v977 = vmul.f32 %v975, %v973
        %v978 = vadd.f32 %v946, %v976
        %v979 = vadd.f32 %v947, %v977
        %s980 = sld [smem:[#allocation3 + $0x44]]
        %v981 = vstv %s980
        %v982 = vmul.f32 %v981, %v972
        %v983 = vmul.f32 %v981, %v973
        %v984 = vadd.f32 %v952, %v982
        %v985 = vadd.f32 %v953, %v983
        %s986 = sld [smem:[#allocation3 + $0x68]]
        %v987 = vstv %s986
        %v988 = vmul.f32 %v987, %v972
        %v989 = vmul.f32 %v987, %v973
        %v990 = vadd.f32 %v958, %v988
        %v991 = vadd.f32 %v959, %v989
        %s992 = sld [smem:[#allocation3 + $0x8c]]
        %v993 = vstv %s992
        %v994 = vmul.f32 %v993, %v972
        %v995 = vmul.f32 %v993, %v973
        %v996 = vadd.f32 %v964, %v994
        %v997 = vadd.f32 %v965, %v995
        %vm998 = vcmask 1046528
        %v999 = vrot.slane %v256, 1
        %v1000 = vrot.slane %v257, 1
        %v1001 = vsel %vm998, %v999, %v1000
        %1004 = vrot.lane.b32.xlu0 %v1001, 1
        %v1005 = vpop.permute.xlu0 %1004
        %1006 = vrot.lane.b32.xlu0 0.0, 1
        %v1007 = vpop.permute.xlu0 %1006
        %v1010 = vsel %vm279, 0.0, %v1005
        %v1011 = vsel %vm279, 0.0, %v1007
        %s1012 = sld [smem:[#allocation3 + $0x6]]
        %v1013 = vstv %s1012
        %v1014 = vmul.f32 %v1013, %v1010
        %v1015 = vmul.f32 %v1013, %v1011
        %v1016 = vadd.f32 %v978, %v1014
        %v1017 = vadd.f32 %v979, %v1015
        %s1018 = sld [smem:[#allocation3 + $0x2a]]
        %v1019 = vstv %s1018
        %v1020 = vmul.f32 %v1019, %v1010
        %v1021 = vmul.f32 %v1019, %v1011
        %v1022 = vadd.f32 %v984, %v1020
        %v1023 = vadd.f32 %v985, %v1021
        %s1024 = sld [smem:[#allocation3 + $0x4e]]
        %v1025 = vstv %s1024
        %v1026 = vmul.f32 %v1025, %v1010
        %v1027 = vmul.f32 %v1025, %v1011
        %v1028 = vadd.f32 %v990, %v1026
        %v1029 = vadd.f32 %v991, %v1027
        %s1030 = sld [smem:[#allocation3 + $0x72]]
        %v1031 = vstv %s1030
        %v1032 = vmul.f32 %v1031, %v1010
        %v1033 = vmul.f32 %v1031, %v1011
        %v1034 = vadd.f32 %v996, %v1032
        %v1035 = vadd.f32 %v997, %v1033
        %v1036 = vrot.slane %v259, 1
        %v1037 = vrot.slane %v260, 1
        %v1038 = vsel %vm998, %v1036, %v1037
        %1040 = vrot.lane.b32.xlu0 %v1038, 1
        %v1041 = vpop.permute.xlu0 %1040
        %v1043 = vsel %vm279, 0.0, %v1041
        %s1044 = sld [smem:[#allocation3 + $0xf]]
        %v1045 = vstv %s1044
        %v1046 = vmul.f32 %v1045, %v1043
        %v1047 = vmul.f32 %v1045, %v1011
        %v1048 = vadd.f32 %v1016, %v1046
        %v1049 = vadd.f32 %v1017, %v1047
        %s1050 = sld [smem:[#allocation3 + $0x33]]
        %v1051 = vstv %s1050
        %v1052 = vmul.f32 %v1051, %v1043
        %v1053 = vmul.f32 %v1051, %v1011
        %v1054 = vadd.f32 %v1022, %v1052
        %v1055 = vadd.f32 %v1023, %v1053
        %s1056 = sld [smem:[#allocation3 + $0x57]]
        %v1057 = vstv %s1056
        %v1058 = vmul.f32 %v1057, %v1043
        %v1059 = vmul.f32 %v1057, %v1011
        %v1060 = vadd.f32 %v1028, %v1058
        %v1061 = vadd.f32 %v1029, %v1059
        %s1062 = sld [smem:[#allocation3 + $0x7b]]
        %v1063 = vstv %s1062
        %v1064 = vmul.f32 %v1063, %v1043
        %v1065 = vmul.f32 %v1063, %v1011
        %v1066 = vadd.f32 %v1034, %v1064
        %v1067 = vadd.f32 %v1035, %v1065
        %v1068 = vrot.slane %v262, 1
        %v1069 = vrot.slane %v263, 1
        %v1070 = vsel %vm998, %v1068, %v1069
        %1072 = vrot.lane.b32.xlu0 %v1070, 1
        %v1073 = vpop.permute.xlu0 %1072
        %v1075 = vsel %vm279, 0.0, %v1073
        %s1076 = sld [smem:[#allocation3 + $0x18]]
        %v1077 = vstv %s1076
        %v1078 = vmul.f32 %v1077, %v1075
        %v1079 = vmul.f32 %v1077, %v1011
        %v1080 = vadd.f32 %v1048, %v1078
        %v1081 = vadd.f32 %v1049, %v1079
        %s1082 = sld [smem:[#allocation3 + $0x3c]]
        %v1083 = vstv %s1082
        %v1084 = vmul.f32 %v1083, %v1075
        %v1085 = vmul.f32 %v1083, %v1011
        %v1086 = vadd.f32 %v1054, %v1084
        %v1087 = vadd.f32 %v1055, %v1085
        %s1088 = sld [smem:[#allocation3 + $0x60]]
        %v1089 = vstv %s1088
        %v1090 = vmul.f32 %v1089, %v1075
        %v1091 = vmul.f32 %v1089, %v1011
        %v1092 = vadd.f32 %v1060, %v1090
        %v1093 = vadd.f32 %v1061, %v1091
        %s1094 = sld [smem:[#allocation3 + $0x84]]
        %v1095 = vstv %s1094
        %v1096 = vmul.f32 %v1095, %v1075
        %v1097 = vmul.f32 %v1095, %v1011
        %v1098 = vadd.f32 %v1066, %v1096
        %v1099 = vadd.f32 %v1067, %v1097
        %v1100 = vrot.slane %v265, 1
        %v1101 = vrot.slane %v266, 1
        %v1102 = vsel %vm998, %v1100, %v1101
        %1104 = vrot.lane.b32.xlu0 %v1102, 1
        %v1105 = vpop.permute.xlu0 %1104
        %v1107 = vsel %vm279, 0.0, %v1105
        %s1108 = sld [smem:[#allocation3 + $0x21]]
        %v1109 = vstv %s1108
        %v1110 = vmul.f32 %v1109, %v1107
        %v1111 = vmul.f32 %v1109, %v1011
        %v1112 = vadd.f32 %v1080, %v1110
        %v1113 = vadd.f32 %v1081, %v1111
        %s1114 = sld [smem:[#allocation3 + $0x45]]
        %v1115 = vstv %s1114
        %v1116 = vmul.f32 %v1115, %v1107
        %v1117 = vmul.f32 %v1115, %v1011
        %v1118 = vadd.f32 %v1086, %v1116
        %v1119 = vadd.f32 %v1087, %v1117
        %s1120 = sld [smem:[#allocation3 + $0x69]]
        %v1121 = vstv %s1120
        %v1122 = vmul.f32 %v1121, %v1107
        %v1123 = vmul.f32 %v1121, %v1011
        %v1124 = vadd.f32 %v1092, %v1122
        %v1125 = vadd.f32 %v1093, %v1123
        %s1126 = sld [smem:[#allocation3 + $0x8d]]
        %v1127 = vstv %s1126
        %v1128 = vmul.f32 %v1127, %v1107
        %v1129 = vmul.f32 %v1127, %v1011
        %v1130 = vadd.f32 %v1098, %v1128
        %v1131 = vadd.f32 %v1099, %v1129
        %s1132 = sld [smem:[#allocation3 + $0x7]]
        %v1133 = vstv %s1132
        %v1134 = vmul.f32 %v1133, %v1001
        %v1135 = vmul.f32 %v1133, 0.0
        %v1136 = vadd.f32 %v1112, %v1134
        %v1137 = vadd.f32 %v1113, %v1135
        %s1138 = sld [smem:[#allocation3 + $0x2b]]
        %v1139 = vstv %s1138
        %v1140 = vmul.f32 %v1139, %v1001
        %v1141 = vmul.f32 %v1139, 0.0
        %v1142 = vadd.f32 %v1118, %v1140
        %v1143 = vadd.f32 %v1119, %v1141
        %s1144 = sld [smem:[#allocation3 + $0x4f]]
        %v1145 = vstv %s1144
        %v1146 = vmul.f32 %v1145, %v1001
        %v1147 = vmul.f32 %v1145, 0.0
        %v1148 = vadd.f32 %v1124, %v1146
        %v1149 = vadd.f32 %v1125, %v1147
        %s1150 = sld [smem:[#allocation3 + $0x73]]
        %v1151 = vstv %s1150
        %v1152 = vmul.f32 %v1151, %v1001
        %v1153 = vmul.f32 %v1151, 0.0
        %v1154 = vadd.f32 %v1130, %v1152
        %v1155 = vadd.f32 %v1131, %v1153
        %s1156 = sld [smem:[#allocation3 + $0x10]]
        %v1157 = vstv %s1156
        %v1158 = vmul.f32 %v1157, %v1038
        %v1159 = vmul.f32 %v1157, 0.0
        %v1160 = vadd.f32 %v1136, %v1158
        %v1161 = vadd.f32 %v1137, %v1159
        %s1162 = sld [smem:[#allocation3 + $0x34]]
        %v1163 = vstv %s1162
        %v1164 = vmul.f32 %v1163, %v1038
        %v1165 = vmul.f32 %v1163, 0.0
        %v1166 = vadd.f32 %v1142, %v1164
        %v1167 = vadd.f32 %v1143, %v1165
        %s1168 = sld [smem:[#allocation3 + $0x58]]
        %v1169 = vstv %s1168
        %v1170 = vmul.f32 %v1169, %v1038
        %v1171 = vmul.f32 %v1169, 0.0
        %v1172 = vadd.f32 %v1148, %v1170
        %v1173 = vadd.f32 %v1149, %v1171
        %s1174 = sld [smem:[#allocation3 + $0x7c]]
        %v1175 = vstv %s1174
        %v1176 = vmul.f32 %v1175, %v1038
        %v1177 = vmul.f32 %v1175, 0.0
        %v1178 = vadd.f32 %v1154, %v1176
        %v1179 = vadd.f32 %v1155, %v1177
        %s1180 = sld [smem:[#allocation3 + $0x19]]
        %v1181 = vstv %s1180
        %v1182 = vmul.f32 %v1181, %v1070
        %v1183 = vmul.f32 %v1181, 0.0
        %v1184 = vadd.f32 %v1160, %v1182
        %v1185 = vadd.f32 %v1161, %v1183
        %s1186 = sld [smem:[#allocation3 + $0x3d]]
        %v1187 = vstv %s1186
        %v1188 = vmul.f32 %v1187, %v1070
        %v1189 = vmul.f32 %v1187, 0.0
        %v1190 = vadd.f32 %v1166, %v1188
        %v1191 = vadd.f32 %v1167, %v1189
        %s1192 = sld [smem:[#allocation3 + $0x61]]
        %v1193 = vstv %s1192
        %v1194 = vmul.f32 %v1193, %v1070
        %v1195 = vmul.f32 %v1193, 0.0
        %v1196 = vadd.f32 %v1172, %v1194
        %v1197 = vadd.f32 %v1173, %v1195
        %s1198 = sld [smem:[#allocation3 + $0x85]]
        %v1199 = vstv %s1198
        %v1200 = vmul.f32 %v1199, %v1070
        %v1201 = vmul.f32 %v1199, 0.0
        %v1202 = vadd.f32 %v1178, %v1200
        %v1203 = vadd.f32 %v1179, %v1201
        %s1204 = sld [smem:[#allocation3 + $0x22]]
        %v1205 = vstv %s1204
        %v1206 = vmul.f32 %v1205, %v1102
        %v1207 = vmul.f32 %v1205, 0.0
        %v1208 = vadd.f32 %v1184, %v1206
        %v1209 = vadd.f32 %v1185, %v1207
        %s1210 = sld [smem:[#allocation3 + $0x46]]
        %v1211 = vstv %s1210
        %v1212 = vmul.f32 %v1211, %v1102
        %v1213 = vmul.f32 %v1211, 0.0
        %v1214 = vadd.f32 %v1190, %v1212
        %v1215 = vadd.f32 %v1191, %v1213
        %s1216 = sld [smem:[#allocation3 + $0x6a]]
        %v1217 = vstv %s1216
        %v1218 = vmul.f32 %v1217, %v1102
        %v1219 = vmul.f32 %v1217, 0.0
        %v1220 = vadd.f32 %v1196, %v1218
        %v1221 = vadd.f32 %v1197, %v1219
        %s1222 = sld [smem:[#allocation3 + $0x8e]]
        %v1223 = vstv %s1222
        %v1224 = vmul.f32 %v1223, %v1102
        %v1225 = vmul.f32 %v1223, 0.0
        %v1226 = vadd.f32 %v1202, %v1224
        %v1227 = vadd.f32 %v1203, %v1225
        %1228 = vrot.lane.b32.xlu0 %v1001, 127
        %v1229 = vpop.permute.xlu0 %1228
        %1230 = vrot.lane.b32.xlu0 0.0, 127
        %v1231 = vpop.permute.xlu0 %1230
        %v1234 = vsel %vm519, %v1229, 0.0
        %v1235 = vsel %vm519, %v1231, 0.0
        %s1236 = sld [smem:[#allocation3 + $0x8]]
        %v1237 = vstv %s1236
        %v1238 = vmul.f32 %v1237, %v1234
        %v1239 = vmul.f32 %v1237, %v1235
        %v1240 = vadd.f32 %v1208, %v1238
        %v1241 = vadd.f32 %v1209, %v1239
        %s1242 = sld [smem:[#allocation3 + $0x2c]]
        %v1243 = vstv %s1242
        %v1244 = vmul.f32 %v1243, %v1234
        %v1245 = vmul.f32 %v1243, %v1235
        %v1246 = vadd.f32 %v1214, %v1244
        %v1247 = vadd.f32 %v1215, %v1245
        %s1248 = sld [smem:[#allocation3 + $0x50]]
        %v1249 = vstv %s1248
        %v1250 = vmul.f32 %v1249, %v1234
        %v1251 = vmul.f32 %v1249, %v1235
        %v1252 = vadd.f32 %v1220, %v1250
        %v1253 = vadd.f32 %v1221, %v1251
        %s1254 = sld [smem:[#allocation3 + $0x74]]
        %v1255 = vstv %s1254
        %v1256 = vmul.f32 %v1255, %v1234
        %v1257 = vmul.f32 %v1255, %v1235
        %v1258 = vadd.f32 %v1226, %v1256
        %v1259 = vadd.f32 %v1227, %v1257
        %1260 = vrot.lane.b32.xlu0 %v1038, 127
        %v1261 = vpop.permute.xlu0 %1260
        %v1263 = vsel %vm519, %v1261, 0.0
        %s1264 = sld [smem:[#allocation3 + $0x11]]
        %v1265 = vstv %s1264
        %v1266 = vmul.f32 %v1265, %v1263
        %v1267 = vmul.f32 %v1265, %v1235
        %v1268 = vadd.f32 %v1240, %v1266
        %v1269 = vadd.f32 %v1241, %v1267
        %s1270 = sld [smem:[#allocation3 + $0x35]]
        %v1271 = vstv %s1270
        %v1272 = vmul.f32 %v1271, %v1263
        %v1273 = vmul.f32 %v1271, %v1235
        %v1274 = vadd.f32 %v1246, %v1272
        %v1275 = vadd.f32 %v1247, %v1273
        %s1276 = sld [smem:[#allocation3 + $0x59]]
        %v1277 = vstv %s1276
        %v1278 = vmul.f32 %v1277, %v1263
        %v1279 = vmul.f32 %v1277, %v1235
        %v1280 = vadd.f32 %v1252, %v1278
        %v1281 = vadd.f32 %v1253, %v1279
        %s1282 = sld [smem:[#allocation3 + $0x7d]]
        %v1283 = vstv %s1282
        %v1284 = vmul.f32 %v1283, %v1263
        %v1285 = vmul.f32 %v1283, %v1235
        %v1286 = vadd.f32 %v1258, %v1284
        %v1287 = vadd.f32 %v1259, %v1285
        %1288 = vrot.lane.b32.xlu0 %v1070, 127
        %v1289 = vpop.permute.xlu0 %1288
        %v1291 = vsel %vm519, %v1289, 0.0
        %s1292 = sld [smem:[#allocation3 + $0x1a]]
        %v1293 = vstv %s1292
        %v1294 = vmul.f32 %v1293, %v1291
        %v1295 = vmul.f32 %v1293, %v1235
        %v1296 = vadd.f32 %v1268, %v1294
        %v1297 = vadd.f32 %v1269, %v1295
        %s1298 = sld [smem:[#allocation3 + $0x3e]]
        %v1299 = vstv %s1298
        %v1300 = vmul.f32 %v1299, %v1291
        %v1301 = vmul.f32 %v1299, %v1235
        %v1302 = vadd.f32 %v1274, %v1300
        %v1303 = vadd.f32 %v1275, %v1301
        %s1304 = sld [smem:[#allocation3 + $0x62]]
        %v1305 = vstv %s1304
        %v1306 = vmul.f32 %v1305, %v1291
        %v1307 = vmul.f32 %v1305, %v1235
        %v1308 = vadd.f32 %v1280, %v1306
        %v1309 = vadd.f32 %v1281, %v1307
        %s1310 = sld [smem:[#allocation3 + $0x86]]
        %v1311 = vstv %s1310
        %v1312 = vmul.f32 %v1311, %v1291
        %v1313 = vmul.f32 %v1311, %v1235
        %v1314 = vadd.f32 %v1286, %v1312
        %v1315 = vadd.f32 %v1287, %v1313
        %1316 = vrot.lane.b32.xlu0 %v1102, 127
        %v1317 = vpop.permute.xlu0 %1316
        %v1319 = vsel %vm519, %v1317, 0.0
        %s1320 = sld [smem:[#allocation3 + $0x23]]
        %v1321 = vstv %s1320
        %v1322 = vmul.f32 %v1321, %v1319
        %v1323 = vmul.f32 %v1321, %v1235
        %v1324 = vadd.f32 %v1296, %v1322
        %v1325 = vadd.f32 %v1297, %v1323
        %s1326 = sld [smem:[#allocation3 + $0x47]]
        %v1327 = vstv %s1326
        %v1328 = vmul.f32 %v1327, %v1319
        %v1329 = vmul.f32 %v1327, %v1235
        %v1330 = vadd.f32 %v1302, %v1328
        %v1331 = vadd.f32 %v1303, %v1329
        %s1332 = sld [smem:[#allocation3 + $0x6b]]
        %v1333 = vstv %s1332
        %v1334 = vmul.f32 %v1333, %v1319
        %v1335 = vmul.f32 %v1333, %v1235
        %v1336 = vadd.f32 %v1308, %v1334
        %v1337 = vadd.f32 %v1309, %v1335
        %s1338 = sld [smem:[#allocation3 + $0x8f]]
        %v1339 = vstv %s1338
        %v1340 = vmul.f32 %v1339, %v1319
        %v1341 = vmul.f32 %v1339, %v1235
        %v1342 = vadd.f32 %v1314, %v1340
        %v1343 = vadd.f32 %v1315, %v1341
        %v1344 = vsel %vm270, %v1325, 0.0
        %v1345 = vadd.f32 %v1324, %v1344
        %v1346 = vrot.slane %v1345, 4
        %v1347 = vadd.f32 %v1345, %v1346
        %v1348 = vrot.slane %v1347, 2
        %v1349 = vadd.f32 %v1347, %v1348
        %v1350 = vrot.slane %v1349, 1
        %v1351 = vadd.f32 %v1349, %v1350
        %v1352 = vmul.f32 %v1324, %v1324
        %v1353 = vmul.f32 %v1325, %v1325
        %v1354 = vsel %vm270, %v1353, 0.0
        %v1355 = vadd.f32 %v1352, %v1354
        %v1356 = vrot.slane %v1355, 4
        %v1357 = vadd.f32 %v1355, %v1356
        %v1358 = vrot.slane %v1357, 2
        %v1359 = vadd.f32 %v1357, %v1358
        %v1360 = vrot.slane %v1359, 1
        %v1361 = vadd.f32 %v1359, %v1360
        %v1362 = vmul.f32 %v1351, 0.11111111
        %v1363 = vmul.f32 %v1361, 0.11111111
        %v1364 = vmul.f32 %v1362, %v1362
        %v1365 = vsub.f32 %v1363, %v1364
        %v1366 = vmax.f32 %v1365, 0.0
        %v1367 = vadd.f32 %v1366, 1e-05
        %v1368 = vrsqrt.pop %v1367
        %v1369 = vsub.f32 %v1324, %v1362
        %v1370 = vsub.f32 %v1325, %v1362
        %v1371 = vmul.f32 %v1369, %v1368
        %v1372 = vmul.f32 %v1370, %v1368
        %1374 = vset.pattern.permute.xlu0 0
        %1375 = vperm.xlu0 %1374, %v252
        %v1376 = vpop.permute.xlu0 %1375
        %1379 = vset.pattern.permute.xlu0 0
        %1380 = vperm.xlu0 %1379, %v253
        %v1381 = vpop.permute.xlu0 %1380
        %v1383 = vmul.f32 %v1371, %v1376
        %v1384 = vmul.f32 %v1372, %v1381
        %1386 = vset.pattern.permute.xlu0 0
        %1387 = vperm.xlu0 %1386, %v254
        %v1388 = vpop.permute.xlu0 %1387
        %1391 = vset.pattern.permute.xlu0 0
        %1392 = vperm.xlu0 %1391, %v255
        %v1393 = vpop.permute.xlu0 %1392
        %v1395 = vadd.f32 %v1383, %v1388
        %v1396 = vadd.f32 %v1384, %v1393
        %v1397 = vmax.f32 %v1395, 0.0
        %v1398 = vmax.f32 %v1396, 0.0
        %1399 = vst [vmem:[#allocation2] sm:$0xff] %v1397
        %1400 = vst [vmem:[#allocation2 + $0x8] sm:$0x1] %v1398
        %v1401 = vsel %vm270, %v1331, 0.0
        %v1402 = vadd.f32 %v1330, %v1401
        %v1403 = vrot.slane %v1402, 4
        %v1404 = vadd.f32 %v1402, %v1403
        %v1405 = vrot.slane %v1404, 2
        %v1406 = vadd.f32 %v1404, %v1405
        %v1407 = vrot.slane %v1406, 1
        %v1408 = vadd.f32 %v1406, %v1407
        %v1409 = vmul.f32 %v1330, %v1330
        %v1410 = vmul.f32 %v1331, %v1331
        %v1411 = vsel %vm270, %v1410, 0.0
        %v1412 = vadd.f32 %v1409, %v1411
        %v1413 = vrot.slane %v1412, 4
        %v1414 = vadd.f32 %v1412, %v1413
        %v1415 = vrot.slane %v1414, 2
        %v1416 = vadd.f32 %v1414, %v1415
        %v1417 = vrot.slane %v1416, 1
        %v1418 = vadd.f32 %v1416, %v1417
        %v1419 = vmul.f32 %v1408, 0.11111111
        %v1420 = vmul.f32 %v1418, 0.11111111
        %v1421 = vmul.f32 %v1419, %v1419
        %v1422 = vsub.f32 %v1420, %v1421
        %v1423 = vmax.f32 %v1422, 0.0
        %v1424 = vadd.f32 %v1423, 1e-05
        %v1425 = vrsqrt.pop %v1424
        %v1426 = vsub.f32 %v1330, %v1419
        %v1427 = vsub.f32 %v1331, %v1419
        %v1428 = vmul.f32 %v1426, %v1425
        %v1429 = vmul.f32 %v1427, %v1425
        %v1430 = vmul.f32 %v1428, %v1376
        %v1431 = vmul.f32 %v1429, %v1381
        %v1432 = vadd.f32 %v1430, %v1388
        %v1433 = vadd.f32 %v1431, %v1393
        %v1434 = vmax.f32 %v1432, 0.0
        %v1435 = vmax.f32 %v1433, 0.0
        %s1436 = scalar_lea.vmem [#allocation2], 16
        %1437 = vst [vmem:[%s1436] sm:$0xff] %v1434
        %1438 = vst [vmem:[%s1436 + $0x8] sm:$0x1] %v1435
        %v1439 = vsel %vm270, %v1337, 0.0
        %v1440 = vadd.f32 %v1336, %v1439
        %v1441 = vrot.slane %v1440, 4
        %v1442 = vadd.f32 %v1440, %v1441
        %v1443 = vrot.slane %v1442, 2
        %v1444 = vadd.f32 %v1442, %v1443
        %v1445 = vrot.slane %v1444, 1
        %v1446 = vadd.f32 %v1444, %v1445
        %v1447 = vmul.f32 %v1336, %v1336
        %v1448 = vmul.f32 %v1337, %v1337
        %v1449 = vsel %vm270, %v1448, 0.0
        %v1450 = vadd.f32 %v1447, %v1449
        %v1451 = vrot.slane %v1450, 4
        %v1452 = vadd.f32 %v1450, %v1451
        %v1453 = vrot.slane %v1452, 2
        %v1454 = vadd.f32 %v1452, %v1453
        %v1455 = vrot.slane %v1454, 1
        %v1456 = vadd.f32 %v1454, %v1455
        %v1457 = vmul.f32 %v1446, 0.11111111
        %v1458 = vmul.f32 %v1456, 0.11111111
        %v1459 = vmul.f32 %v1457, %v1457
        %v1460 = vsub.f32 %v1458, %v1459
        %v1461 = vmax.f32 %v1460, 0.0
        %v1462 = vadd.f32 %v1461, 1e-05
        %v1463 = vrsqrt.pop %v1462
        %v1464 = vsub.f32 %v1336, %v1457
        %v1465 = vsub.f32 %v1337, %v1457
        %v1466 = vmul.f32 %v1464, %v1463
        %v1467 = vmul.f32 %v1465, %v1463
        %v1468 = vmul.f32 %v1466, %v1376
        %v1469 = vmul.f32 %v1467, %v1381
        %v1470 = vadd.f32 %v1468, %v1388
        %v1471 = vadd.f32 %v1469, %v1393
        %v1472 = vmax.f32 %v1470, 0.0
        %v1473 = vmax.f32 %v1471, 0.0
        %s1474 = scalar_lea.vmem [#allocation2], 32
        %1475 = vst [vmem:[%s1474] sm:$0xff] %v1472
        %1476 = vst [vmem:[%s1474 + $0x8] sm:$0x1] %v1473
        %v1477 = vsel %vm270, %v1343, 0.0
        %v1478 = vadd.f32 %v1342, %v1477
        %v1479 = vrot.slane %v1478, 4
        %v1480 = vadd.f32 %v1478, %v1479
        %v1481 = vrot.slane %v1480, 2
        %v1482 = vadd.f32 %v1480, %v1481
        %v1483 = vrot.slane %v1482, 1
        %v1484 = vadd.f32 %v1482, %v1483
        %v1485 = vmul.f32 %v1342, %v1342
        %v1486 = vmul.f32 %v1343, %v1343
        %v1487 = vsel %vm270, %v1486, 0.0
        %v1488 = vadd.f32 %v1485, %v1487
        %v1489 = vrot.slane %v1488, 4
        %v1490 = vadd.f32 %v1488, %v1489
        %v1491 = vrot.slane %v1490, 2
        %v1492 = vadd.f32 %v1490, %v1491
        %v1493 = vrot.slane %v1492, 1
        %v1494 = vadd.f32 %v1492, %v1493
        %v1495 = vmul.f32 %v1484, 0.11111111
        %v1496 = vmul.f32 %v1494, 0.11111111
        %v1497 = vmul.f32 %v1495, %v1495
        %v1498 = vsub.f32 %v1496, %v1497
        %v1499 = vmax.f32 %v1498, 0.0
        %v1500 = vadd.f32 %v1499, 1e-05
        %v1501 = vrsqrt.pop %v1500
        %v1502 = vsub.f32 %v1342, %v1495
        %v1503 = vsub.f32 %v1343, %v1495
        %v1504 = vmul.f32 %v1502, %v1501
        %v1505 = vmul.f32 %v1503, %v1501
        %v1506 = vmul.f32 %v1504, %v1376
        %v1507 = vmul.f32 %v1505, %v1381
        %v1508 = vadd.f32 %v1506, %v1388
        %v1509 = vadd.f32 %v1507, %v1393
        %v1510 = vmax.f32 %v1508, 0.0
        %v1511 = vmax.f32 %v1509, 0.0
        %s1512 = scalar_lea.vmem [#allocation2], 48
        %1513 = vst [vmem:[%s1512] sm:$0xff] %v1510
        %1514 = vst [vmem:[%s1512 + $0x8] sm:$0x1] %v1511
        %v1515 = vld [vmem:[#allocation2] sm:$0xff]
        %v1516 = vld [vmem:[#allocation2 + $0x8] sm:$0x1]
        %v1517 = vld [vmem:[%s1436] sm:$0xff]
        %v1518 = vld [vmem:[%s1436 + $0x8] sm:$0x1]
        %v1519 = vld [vmem:[%s1474] sm:$0xff]
        %v1520 = vld [vmem:[%s1474 + $0x8] sm:$0x1]
        %v1521 = vld [vmem:[%s1512] sm:$0xff]
        %v1522 = vld [vmem:[%s1512 + $0x8] sm:$0x1]
        %v1524 = vrot.slane %v1515, 7
        %v1526 = vsel %vm270, 0.0, %v1524
        %1528 = vrot.lane.b32.xlu0 %v1526, 1
        %v1529 = vpop.permute.xlu0 %1528
        %1530 = vrot.lane.b32.xlu0 %v1524, 1
        %v1531 = vpop.permute.xlu0 %1530
        %v1534 = vsel %vm279, 0.0, %v1529
        %v1535 = vsel %vm279, 0.0, %v1531
        %s1536 = sld [smem:[#allocation5]]
        %v1537 = vstv %s1536
        %v1538 = vmul.f32 %v1537, %v1534
        %v1539 = vmul.f32 %v1537, %v1535
        %v1540 = vadd.f32 %v1538, 0.0
        %v1541 = vadd.f32 %v1539, 0.0
        %s1542 = sld [smem:[#allocation5 + $0x24]]
        %v1543 = vstv %s1542
        %v1544 = vmul.f32 %v1543, %v1534
        %v1545 = vmul.f32 %v1543, %v1535
        %v1546 = vadd.f32 %v1544, 0.0
        %v1547 = vadd.f32 %v1545, 0.0
        %s1548 = sld [smem:[#allocation5 + $0x48]]
        %v1549 = vstv %s1548
        %v1550 = vmul.f32 %v1549, %v1534
        %v1551 = vmul.f32 %v1549, %v1535
        %v1552 = vadd.f32 %v1550, 0.0
        %v1553 = vadd.f32 %v1551, 0.0
        %s1554 = sld [smem:[#allocation5 + $0x6c]]
        %v1555 = vstv %s1554
        %v1556 = vmul.f32 %v1555, %v1534
        %v1557 = vmul.f32 %v1555, %v1535
        %v1558 = vadd.f32 %v1556, 0.0
        %v1559 = vadd.f32 %v1557, 0.0
        %v1561 = vrot.slane %v1517, 7
        %v1563 = vsel %vm270, 0.0, %v1561
        %1565 = vrot.lane.b32.xlu0 %v1563, 1
        %v1566 = vpop.permute.xlu0 %1565
        %1567 = vrot.lane.b32.xlu0 %v1561, 1
        %v1568 = vpop.permute.xlu0 %1567
        %v1571 = vsel %vm279, 0.0, %v1566
        %v1572 = vsel %vm279, 0.0, %v1568
        %s1573 = sld [smem:[#allocation5 + $0x9]]
        %v1574 = vstv %s1573
        %v1575 = vmul.f32 %v1574, %v1571
        %v1576 = vmul.f32 %v1574, %v1572
        %v1577 = vadd.f32 %v1540, %v1575
        %v1578 = vadd.f32 %v1541, %v1576
        %s1579 = sld [smem:[#allocation5 + $0x2d]]
        %v1580 = vstv %s1579
        %v1581 = vmul.f32 %v1580, %v1571
        %v1582 = vmul.f32 %v1580, %v1572
        %v1583 = vadd.f32 %v1546, %v1581
        %v1584 = vadd.f32 %v1547, %v1582
        %s1585 = sld [smem:[#allocation5 + $0x51]]
        %v1586 = vstv %s1585
        %v1587 = vmul.f32 %v1586, %v1571
        %v1588 = vmul.f32 %v1586, %v1572
        %v1589 = vadd.f32 %v1552, %v1587
        %v1590 = vadd.f32 %v1553, %v1588
        %s1591 = sld [smem:[#allocation5 + $0x75]]
        %v1592 = vstv %s1591
        %v1593 = vmul.f32 %v1592, %v1571
        %v1594 = vmul.f32 %v1592, %v1572
        %v1595 = vadd.f32 %v1558, %v1593
        %v1596 = vadd.f32 %v1559, %v1594
        %v1598 = vrot.slane %v1519, 7
        %v1600 = vsel %vm270, 0.0, %v1598
        %1602 = vrot.lane.b32.xlu0 %v1600, 1
        %v1603 = vpop.permute.xlu0 %1602
        %1604 = vrot.lane.b32.xlu0 %v1598, 1
        %v1605 = vpop.permute.xlu0 %1604
        %v1608 = vsel %vm279, 0.0, %v1603
        %v1609 = vsel %vm279, 0.0, %v1605
        %s1610 = sld [smem:[#allocation5 + $0x12]]
        %v1611 = vstv %s1610
        %v1612 = vmul.f32 %v1611, %v1608
        %v1613 = vmul.f32 %v1611, %v1609
        %v1614 = vadd.f32 %v1577, %v1612
        %v1615 = vadd.f32 %v1578, %v1613
        %s1616 = sld [smem:[#allocation5 + $0x36]]
        %v1617 = vstv %s1616
        %v1618 = vmul.f32 %v1617, %v1608
        %v1619 = vmul.f32 %v1617, %v1609
        %v1620 = vadd.f32 %v1583, %v1618
        %v1621 = vadd.f32 %v1584, %v1619
        %s1622 = sld [smem:[#allocation5 + $0x5a]]
        %v1623 = vstv %s1622
        %v1624 = vmul.f32 %v1623, %v1608
        %v1625 = vmul.f32 %v1623, %v1609
        %v1626 = vadd.f32 %v1589, %v1624
        %v1627 = vadd.f32 %v1590, %v1625
        %s1628 = sld [smem:[#allocation5 + $0x7e]]
        %v1629 = vstv %s1628
        %v1630 = vmul.f32 %v1629, %v1608
        %v1631 = vmul.f32 %v1629, %v1609
        %v1632 = vadd.f32 %v1595, %v1630
        %v1633 = vadd.f32 %v1596, %v1631
        %v1635 = vrot.slane %v1521, 7
        %v1637 = vsel %vm270, 0.0, %v1635
        %1639 = vrot.lane.b32.xlu0 %v1637, 1
        %v1640 = vpop.permute.xlu0 %1639
        %1641 = vrot.lane.b32.xlu0 %v1635, 1
        %v1642 = vpop.permute.xlu0 %1641
        %v1645 = vsel %vm279, 0.0, %v1640
        %v1646 = vsel %vm279, 0.0, %v1642
        %s1647 = sld [smem:[#allocation5 + $0x1b]]
        %v1648 = vstv %s1647
        %v1649 = vmul.f32 %v1648, %v1645
        %v1650 = vmul.f32 %v1648, %v1646
        %v1651 = vadd.f32 %v1614, %v1649
        %v1652 = vadd.f32 %v1615, %v1650
        %s1653 = sld [smem:[#allocation5 + $0x3f]]
        %v1654 = vstv %s1653
        %v1655 = vmul.f32 %v1654, %v1645
        %v1656 = vmul.f32 %v1654, %v1646
        %v1657 = vadd.f32 %v1620, %v1655
        %v1658 = vadd.f32 %v1621, %v1656
        %s1659 = sld [smem:[#allocation5 + $0x63]]
        %v1660 = vstv %s1659
        %v1661 = vmul.f32 %v1660, %v1645
        %v1662 = vmul.f32 %v1660, %v1646
        %v1663 = vadd.f32 %v1626, %v1661
        %v1664 = vadd.f32 %v1627, %v1662
        %s1665 = sld [smem:[#allocation5 + $0x87]]
        %v1666 = vstv %s1665
        %v1667 = vmul.f32 %v1666, %v1645
        %v1668 = vmul.f32 %v1666, %v1646
        %v1669 = vadd.f32 %v1632, %v1667
        %v1670 = vadd.f32 %v1633, %v1668
        %s1671 = sld [smem:[#allocation5 + $0x1]]
        %v1672 = vstv %s1671
        %v1673 = vmul.f32 %v1672, %v1526
        %v1674 = vmul.f32 %v1672, %v1524
        %v1675 = vadd.f32 %v1651, %v1673
        %v1676 = vadd.f32 %v1652, %v1674
        %s1677 = sld [smem:[#allocation5 + $0x25]]
        %v1678 = vstv %s1677
        %v1679 = vmul.f32 %v1678, %v1526
        %v1680 = vmul.f32 %v1678, %v1524
        %v1681 = vadd.f32 %v1657, %v1679
        %v1682 = vadd.f32 %v1658, %v1680
        %s1683 = sld [smem:[#allocation5 + $0x49]]
        %v1684 = vstv %s1683
        %v1685 = vmul.f32 %v1684, %v1526
        %v1686 = vmul.f32 %v1684, %v1524
        %v1687 = vadd.f32 %v1663, %v1685
        %v1688 = vadd.f32 %v1664, %v1686
        %s1689 = sld [smem:[#allocation5 + $0x6d]]
        %v1690 = vstv %s1689
        %v1691 = vmul.f32 %v1690, %v1526
        %v1692 = vmul.f32 %v1690, %v1524
        %v1693 = vadd.f32 %v1669, %v1691
        %v1694 = vadd.f32 %v1670, %v1692
        %s1695 = sld [smem:[#allocation5 + $0xa]]
        %v1696 = vstv %s1695
        %v1697 = vmul.f32 %v1696, %v1563
        %v1698 = vmul.f32 %v1696, %v1561
        %v1699 = vadd.f32 %v1675, %v1697
        %v1700 = vadd.f32 %v1676, %v1698
        %s1701 = sld [smem:[#allocation5 + $0x2e]]
        %v1702 = vstv %s1701
        %v1703 = vmul.f32 %v1702, %v1563
        %v1704 = vmul.f32 %v1702, %v1561
        %v1705 = vadd.f32 %v1681, %v1703
        %v1706 = vadd.f32 %v1682, %v1704
        %s1707 = sld [smem:[#allocation5 + $0x52]]
        %v1708 = vstv %s1707
        %v1709 = vmul.f32 %v1708, %v1563
        %v1710 = vmul.f32 %v1708, %v1561
        %v1711 = vadd.f32 %v1687, %v1709
        %v1712 = vadd.f32 %v1688, %v1710
        %s1713 = sld [smem:[#allocation5 + $0x76]]
        %v1714 = vstv %s1713
        %v1715 = vmul.f32 %v1714, %v1563
        %v1716 = vmul.f32 %v1714, %v1561
        %v1717 = vadd.f32 %v1693, %v1715
        %v1718 = vadd.f32 %v1694, %v1716
        %s1719 = sld [smem:[#allocation5 + $0x13]]
        %v1720 = vstv %s1719
        %v1721 = vmul.f32 %v1720, %v1600
        %v1722 = vmul.f32 %v1720, %v1598
        %v1723 = vadd.f32 %v1699, %v1721
        %v1724 = vadd.f32 %v1700, %v1722
        %s1725 = sld [smem:[#allocation5 + $0x37]]
        %v1726 = vstv %s1725
        %v1727 = vmul.f32 %v1726, %v1600
        %v1728 = vmul.f32 %v1726, %v1598
        %v1729 = vadd.f32 %v1705, %v1727
        %v1730 = vadd.f32 %v1706, %v1728
        %s1731 = sld [smem:[#allocation5 + $0x5b]]
        %v1732 = vstv %s1731
        %v1733 = vmul.f32 %v1732, %v1600
        %v1734 = vmul.f32 %v1732, %v1598
        %v1735 = vadd.f32 %v1711, %v1733
        %v1736 = vadd.f32 %v1712, %v1734
        %s1737 = sld [smem:[#allocation5 + $0x7f]]
        %v1738 = vstv %s1737
        %v1739 = vmul.f32 %v1738, %v1600
        %v1740 = vmul.f32 %v1738, %v1598
        %v1741 = vadd.f32 %v1717, %v1739
        %v1742 = vadd.f32 %v1718, %v1740
        %s1743 = sld [smem:[#allocation5 + $0x1c]]
        %v1744 = vstv %s1743
        %v1745 = vmul.f32 %v1744, %v1637
        %v1746 = vmul.f32 %v1744, %v1635
        %v1747 = vadd.f32 %v1723, %v1745
        %v1748 = vadd.f32 %v1724, %v1746
        %s1749 = sld [smem:[#allocation5 + $0x40]]
        %v1750 = vstv %s1749
        %v1751 = vmul.f32 %v1750, %v1637
        %v1752 = vmul.f32 %v1750, %v1635
        %v1753 = vadd.f32 %v1729, %v1751
        %v1754 = vadd.f32 %v1730, %v1752
        %s1755 = sld [smem:[#allocation5 + $0x64]]
        %v1756 = vstv %s1755
        %v1757 = vmul.f32 %v1756, %v1637
        %v1758 = vmul.f32 %v1756, %v1635
        %v1759 = vadd.f32 %v1735, %v1757
        %v1760 = vadd.f32 %v1736, %v1758
        %s1761 = sld [smem:[#allocation5 + $0x88]]
        %v1762 = vstv %s1761
        %v1763 = vmul.f32 %v1762, %v1637
        %v1764 = vmul.f32 %v1762, %v1635
        %v1765 = vadd.f32 %v1741, %v1763
        %v1766 = vadd.f32 %v1742, %v1764
        %1767 = vrot.lane.b32.xlu0 %v1526, 127
        %v1768 = vpop.permute.xlu0 %1767
        %1769 = vrot.lane.b32.xlu0 %v1524, 127
        %v1770 = vpop.permute.xlu0 %1769
        %v1773 = vsel %vm519, %v1768, 0.0
        %v1774 = vsel %vm519, %v1770, 0.0
        %s1775 = sld [smem:[#allocation5 + $0x2]]
        %v1776 = vstv %s1775
        %v1777 = vmul.f32 %v1776, %v1773
        %v1778 = vmul.f32 %v1776, %v1774
        %v1779 = vadd.f32 %v1747, %v1777
        %v1780 = vadd.f32 %v1748, %v1778
        %s1781 = sld [smem:[#allocation5 + $0x26]]
        %v1782 = vstv %s1781
        %v1783 = vmul.f32 %v1782, %v1773
        %v1784 = vmul.f32 %v1782, %v1774
        %v1785 = vadd.f32 %v1753, %v1783
        %v1786 = vadd.f32 %v1754, %v1784
        %s1787 = sld [smem:[#allocation5 + $0x4a]]
        %v1788 = vstv %s1787
        %v1789 = vmul.f32 %v1788, %v1773
        %v1790 = vmul.f32 %v1788, %v1774
        %v1791 = vadd.f32 %v1759, %v1789
        %v1792 = vadd.f32 %v1760, %v1790
        %s1793 = sld [smem:[#allocation5 + $0x6e]]
        %v1794 = vstv %s1793
        %v1795 = vmul.f32 %v1794, %v1773
        %v1796 = vmul.f32 %v1794, %v1774
        %v1797 = vadd.f32 %v1765, %v1795
        %v1798 = vadd.f32 %v1766, %v1796
        %1799 = vrot.lane.b32.xlu0 %v1563, 127
        %v1800 = vpop.permute.xlu0 %1799
        %1801 = vrot.lane.b32.xlu0 %v1561, 127
        %v1802 = vpop.permute.xlu0 %1801
        %v1805 = vsel %vm519, %v1800, 0.0
        %v1806 = vsel %vm519, %v1802, 0.0
        %s1807 = sld [smem:[#allocation5 + $0xb]]
        %v1808 = vstv %s1807
        %v1809 = vmul.f32 %v1808, %v1805
        %v1810 = vmul.f32 %v1808, %v1806
        %v1811 = vadd.f32 %v1779, %v1809
        %v1812 = vadd.f32 %v1780, %v1810
        %s1813 = sld [smem:[#allocation5 + $0x2f]]
        %v1814 = vstv %s1813
        %v1815 = vmul.f32 %v1814, %v1805
        %v1816 = vmul.f32 %v1814, %v1806
        %v1817 = vadd.f32 %v1785, %v1815
        %v1818 = vadd.f32 %v1786, %v1816
        %s1819 = sld [smem:[#allocation5 + $0x53]]
        %v1820 = vstv %s1819
        %v1821 = vmul.f32 %v1820, %v1805
        %v1822 = vmul.f32 %v1820, %v1806
        %v1823 = vadd.f32 %v1791, %v1821
        %v1824 = vadd.f32 %v1792, %v1822
        %s1825 = sld [smem:[#allocation5 + $0x77]]
        %v1826 = vstv %s1825
        %v1827 = vmul.f32 %v1826, %v1805
        %v1828 = vmul.f32 %v1826, %v1806
        %v1829 = vadd.f32 %v1797, %v1827
        %v1830 = vadd.f32 %v1798, %v1828
        %1831 = vrot.lane.b32.xlu0 %v1600, 127
        %v1832 = vpop.permute.xlu0 %1831
        %1833 = vrot.lane.b32.xlu0 %v1598, 127
        %v1834 = vpop.permute.xlu0 %1833
        %v1837 = vsel %vm519, %v1832, 0.0
        %v1838 = vsel %vm519, %v1834, 0.0
        %s1839 = sld [smem:[#allocation5 + $0x14]]
        %v1840 = vstv %s1839
        %v1841 = vmul.f32 %v1840, %v1837
        %v1842 = vmul.f32 %v1840, %v1838
        %v1843 = vadd.f32 %v1811, %v1841
        %v1844 = vadd.f32 %v1812, %v1842
        %s1845 = sld [smem:[#allocation5 + $0x38]]
        %v1846 = vstv %s1845
        %v1847 = vmul.f32 %v1846, %v1837
        %v1848 = vmul.f32 %v1846, %v1838
        %v1849 = vadd.f32 %v1817, %v1847
        %v1850 = vadd.f32 %v1818, %v1848
        %s1851 = sld [smem:[#allocation5 + $0x5c]]
        %v1852 = vstv %s1851
        %v1853 = vmul.f32 %v1852, %v1837
        %v1854 = vmul.f32 %v1852, %v1838
        %v1855 = vadd.f32 %v1823, %v1853
        %v1856 = vadd.f32 %v1824, %v1854
        %s1857 = sld [smem:[#allocation5 + $0x80]]
        %v1858 = vstv %s1857
        %v1859 = vmul.f32 %v1858, %v1837
        %v1860 = vmul.f32 %v1858, %v1838
        %v1861 = vadd.f32 %v1829, %v1859
        %v1862 = vadd.f32 %v1830, %v1860
        %1863 = vrot.lane.b32.xlu0 %v1637, 127
        %v1864 = vpop.permute.xlu0 %1863
        %1865 = vrot.lane.b32.xlu0 %v1635, 127
        %v1866 = vpop.permute.xlu0 %1865
        %v1869 = vsel %vm519, %v1864, 0.0
        %v1870 = vsel %vm519, %v1866, 0.0
        %s1871 = sld [smem:[#allocation5 + $0x1d]]
        %v1872 = vstv %s1871
        %v1873 = vmul.f32 %v1872, %v1869
        %v1874 = vmul.f32 %v1872, %v1870
        %v1875 = vadd.f32 %v1843, %v1873
        %v1876 = vadd.f32 %v1844, %v1874
        %s1877 = sld [smem:[#allocation5 + $0x41]]
        %v1878 = vstv %s1877
        %v1879 = vmul.f32 %v1878, %v1869
        %v1880 = vmul.f32 %v1878, %v1870
        %v1881 = vadd.f32 %v1849, %v1879
        %v1882 = vadd.f32 %v1850, %v1880
        %s1883 = sld [smem:[#allocation5 + $0x65]]
        %v1884 = vstv %s1883
        %v1885 = vmul.f32 %v1884, %v1869
        %v1886 = vmul.f32 %v1884, %v1870
        %v1887 = vadd.f32 %v1855, %v1885
        %v1888 = vadd.f32 %v1856, %v1886
        %s1889 = sld [smem:[#allocation5 + $0x89]]
        %v1890 = vstv %s1889
        %v1891 = vmul.f32 %v1890, %v1869
        %v1892 = vmul.f32 %v1890, %v1870
        %v1893 = vadd.f32 %v1861, %v1891
        %v1894 = vadd.f32 %v1862, %v1892
        %1896 = vrot.lane.b32.xlu0 %v1515, 1
        %v1897 = vpop.permute.xlu0 %1896
        %1898 = vrot.lane.b32.xlu0 %v1516, 1
        %v1899 = vpop.permute.xlu0 %1898
        %v1902 = vsel %vm279, 0.0, %v1897
        %v1903 = vsel %vm279, 0.0, %v1899
        %s1904 = sld [smem:[#allocation5 + $0x3]]
        %v1905 = vstv %s1904
        %v1906 = vmul.f32 %v1905, %v1902
        %v1907 = vmul.f32 %v1905, %v1903
        %v1908 = vadd.f32 %v1875, %v1906
        %v1909 = vadd.f32 %v1876, %v1907
        %s1910 = sld [smem:[#allocation5 + $0x27]]
        %v1911 = vstv %s1910
        %v1912 = vmul.f32 %v1911, %v1902
        %v1913 = vmul.f32 %v1911, %v1903
        %v1914 = vadd.f32 %v1881, %v1912
        %v1915 = vadd.f32 %v1882, %v1913
        %s1916 = sld [smem:[#allocation5 + $0x4b]]
        %v1917 = vstv %s1916
        %v1918 = vmul.f32 %v1917, %v1902
        %v1919 = vmul.f32 %v1917, %v1903
        %v1920 = vadd.f32 %v1887, %v1918
        %v1921 = vadd.f32 %v1888, %v1919
        %s1922 = sld [smem:[#allocation5 + $0x6f]]
        %v1923 = vstv %s1922
        %v1924 = vmul.f32 %v1923, %v1902
        %v1925 = vmul.f32 %v1923, %v1903
        %v1926 = vadd.f32 %v1893, %v1924
        %v1927 = vadd.f32 %v1894, %v1925
        %1929 = vrot.lane.b32.xlu0 %v1517, 1
        %v1930 = vpop.permute.xlu0 %1929
        %1931 = vrot.lane.b32.xlu0 %v1518, 1
        %v1932 = vpop.permute.xlu0 %1931
        %v1935 = vsel %vm279, 0.0, %v1930
        %v1936 = vsel %vm279, 0.0, %v1932
        %s1937 = sld [smem:[#allocation5 + $0xc]]
        %v1938 = vstv %s1937
        %v1939 = vmul.f32 %v1938, %v1935
        %v1940 = vmul.f32 %v1938, %v1936
        %v1941 = vadd.f32 %v1908, %v1939
        %v1942 = vadd.f32 %v1909, %v1940
        %s1943 = sld [smem:[#allocation5 + $0x30]]
        %v1944 = vstv %s1943
        %v1945 = vmul.f32 %v1944, %v1935
        %v1946 = vmul.f32 %v1944, %v1936
        %v1947 = vadd.f32 %v1914, %v1945
        %v1948 = vadd.f32 %v1915, %v1946
        %s1949 = sld [smem:[#allocation5 + $0x54]]
        %v1950 = vstv %s1949
        %v1951 = vmul.f32 %v1950, %v1935
        %v1952 = vmul.f32 %v1950, %v1936
        %v1953 = vadd.f32 %v1920, %v1951
        %v1954 = vadd.f32 %v1921, %v1952
        %s1955 = sld [smem:[#allocation5 + $0x78]]
        %v1956 = vstv %s1955
        %v1957 = vmul.f32 %v1956, %v1935
        %v1958 = vmul.f32 %v1956, %v1936
        %v1959 = vadd.f32 %v1926, %v1957
        %v1960 = vadd.f32 %v1927, %v1958
        %1962 = vrot.lane.b32.xlu0 %v1519, 1
        %v1963 = vpop.permute.xlu0 %1962
        %1964 = vrot.lane.b32.xlu0 %v1520, 1
        %v1965 = vpop.permute.xlu0 %1964
        %v1968 = vsel %vm279, 0.0, %v1963
        %v1969 = vsel %vm279, 0.0, %v1965
        %s1970 = sld [smem:[#allocation5 + $0x15]]
        %v1971 = vstv %s1970
        %v1972 = vmul.f32 %v1971, %v1968
        %v1973 = vmul.f32 %v1971, %v1969
        %v1974 = vadd.f32 %v1941, %v1972
        %v1975 = vadd.f32 %v1942, %v1973
        %s1976 = sld [smem:[#allocation5 + $0x39]]
        %v1977 = vstv %s1976
        %v1978 = vmul.f32 %v1977, %v1968
        %v1979 = vmul.f32 %v1977, %v1969
        %v1980 = vadd.f32 %v1947, %v1978
        %v1981 = vadd.f32 %v1948, %v1979
        %s1982 = sld [smem:[#allocation5 + $0x5d]]
        %v1983 = vstv %s1982
        %v1984 = vmul.f32 %v1983, %v1968
        %v1985 = vmul.f32 %v1983, %v1969
        %v1986 = vadd.f32 %v1953, %v1984
        %v1987 = vadd.f32 %v1954, %v1985
        %s1988 = sld [smem:[#allocation5 + $0x81]]
        %v1989 = vstv %s1988
        %v1990 = vmul.f32 %v1989, %v1968
        %v1991 = vmul.f32 %v1989, %v1969
        %v1992 = vadd.f32 %v1959, %v1990
        %v1993 = vadd.f32 %v1960, %v1991
        %1995 = vrot.lane.b32.xlu0 %v1521, 1
        %v1996 = vpop.permute.xlu0 %1995
        %1997 = vrot.lane.b32.xlu0 %v1522, 1
        %v1998 = vpop.permute.xlu0 %1997
        %v2001 = vsel %vm279, 0.0, %v1996
        %v2002 = vsel %vm279, 0.0, %v1998
        %s2003 = sld [smem:[#allocation5 + $0x1e]]
        %v2004 = vstv %s2003
        %v2005 = vmul.f32 %v2004, %v2001
        %v2006 = vmul.f32 %v2004, %v2002
        %v2007 = vadd.f32 %v1974, %v2005
        %v2008 = vadd.f32 %v1975, %v2006
        %s2009 = sld [smem:[#allocation5 + $0x42]]
        %v2010 = vstv %s2009
        %v2011 = vmul.f32 %v2010, %v2001
        %v2012 = vmul.f32 %v2010, %v2002
        %v2013 = vadd.f32 %v1980, %v2011
        %v2014 = vadd.f32 %v1981, %v2012
        %s2015 = sld [smem:[#allocation5 + $0x66]]
        %v2016 = vstv %s2015
        %v2017 = vmul.f32 %v2016, %v2001
        %v2018 = vmul.f32 %v2016, %v2002
        %v2019 = vadd.f32 %v1986, %v2017
        %v2020 = vadd.f32 %v1987, %v2018
        %s2021 = sld [smem:[#allocation5 + $0x8a]]
        %v2022 = vstv %s2021
        %v2023 = vmul.f32 %v2022, %v2001
        %v2024 = vmul.f32 %v2022, %v2002
        %v2025 = vadd.f32 %v1992, %v2023
        %v2026 = vadd.f32 %v1993, %v2024
        %s2027 = sld [smem:[#allocation5 + $0x4]]
        %v2028 = vstv %s2027
        %v2029 = vmul.f32 %v2028, %v1515
        %v2030 = vmul.f32 %v2028, %v1516
        %v2031 = vadd.f32 %v2007, %v2029
        %v2032 = vadd.f32 %v2008, %v2030
        %s2033 = sld [smem:[#allocation5 + $0x28]]
        %v2034 = vstv %s2033
        %v2035 = vmul.f32 %v2034, %v1515
        %v2036 = vmul.f32 %v2034, %v1516
        %v2037 = vadd.f32 %v2013, %v2035
        %v2038 = vadd.f32 %v2014, %v2036
        %s2039 = sld [smem:[#allocation5 + $0x4c]]
        %v2040 = vstv %s2039
        %v2041 = vmul.f32 %v2040, %v1515
        %v2042 = vmul.f32 %v2040, %v1516
        %v2043 = vadd.f32 %v2019, %v2041
        %v2044 = vadd.f32 %v2020, %v2042
        %s2045 = sld [smem:[#allocation5 + $0x70]]
        %v2046 = vstv %s2045
        %v2047 = vmul.f32 %v2046, %v1515
        %v2048 = vmul.f32 %v2046, %v1516
        %v2049 = vadd.f32 %v2025, %v2047
        %v2050 = vadd.f32 %v2026, %v2048
        %s2051 = sld [smem:[#allocation5 + $0xd]]
        %v2052 = vstv %s2051
        %v2053 = vmul.f32 %v2052, %v1517
        %v2054 = vmul.f32 %v2052, %v1518
        %v2055 = vadd.f32 %v2031, %v2053
        %v2056 = vadd.f32 %v2032, %v2054
        %s2057 = sld [smem:[#allocation5 + $0x31]]
        %v2058 = vstv %s2057
        %v2059 = vmul.f32 %v2058, %v1517
        %v2060 = vmul.f32 %v2058, %v1518
        %v2061 = vadd.f32 %v2037, %v2059
        %v2062 = vadd.f32 %v2038, %v2060
        %s2063 = sld [smem:[#allocation5 + $0x55]]
        %v2064 = vstv %s2063
        %v2065 = vmul.f32 %v2064, %v1517
        %v2066 = vmul.f32 %v2064, %v1518
        %v2067 = vadd.f32 %v2043, %v2065
        %v2068 = vadd.f32 %v2044, %v2066
        %s2069 = sld [smem:[#allocation5 + $0x79]]
        %v2070 = vstv %s2069
        %v2071 = vmul.f32 %v2070, %v1517
        %v2072 = vmul.f32 %v2070, %v1518
        %v2073 = vadd.f32 %v2049, %v2071
        %v2074 = vadd.f32 %v2050, %v2072
        %s2075 = sld [smem:[#allocation5 + $0x16]]
        %v2076 = vstv %s2075
        %v2077 = vmul.f32 %v2076, %v1519
        %v2078 = vmul.f32 %v2076, %v1520
        %v2079 = vadd.f32 %v2055, %v2077
        %v2080 = vadd.f32 %v2056, %v2078
        %s2081 = sld [smem:[#allocation5 + $0x3a]]
        %v2082 = vstv %s2081
        %v2083 = vmul.f32 %v2082, %v1519
        %v2084 = vmul.f32 %v2082, %v1520
        %v2085 = vadd.f32 %v2061, %v2083
        %v2086 = vadd.f32 %v2062, %v2084
        %s2087 = sld [smem:[#allocation5 + $0x5e]]
        %v2088 = vstv %s2087
        %v2089 = vmul.f32 %v2088, %v1519
        %v2090 = vmul.f32 %v2088, %v1520
        %v2091 = vadd.f32 %v2067, %v2089
        %v2092 = vadd.f32 %v2068, %v2090
        %s2093 = sld [smem:[#allocation5 + $0x82]]
        %v2094 = vstv %s2093
        %v2095 = vmul.f32 %v2094, %v1519
        %v2096 = vmul.f32 %v2094, %v1520
        %v2097 = vadd.f32 %v2073, %v2095
        %v2098 = vadd.f32 %v2074, %v2096
        %s2099 = sld [smem:[#allocation5 + $0x1f]]
        %v2100 = vstv %s2099
        %v2101 = vmul.f32 %v2100, %v1521
        %v2102 = vmul.f32 %v2100, %v1522
        %v2103 = vadd.f32 %v2079, %v2101
        %v2104 = vadd.f32 %v2080, %v2102
        %s2105 = sld [smem:[#allocation5 + $0x43]]
        %v2106 = vstv %s2105
        %v2107 = vmul.f32 %v2106, %v1521
        %v2108 = vmul.f32 %v2106, %v1522
        %v2109 = vadd.f32 %v2085, %v2107
        %v2110 = vadd.f32 %v2086, %v2108
        %s2111 = sld [smem:[#allocation5 + $0x67]]
        %v2112 = vstv %s2111
        %v2113 = vmul.f32 %v2112, %v1521
        %v2114 = vmul.f32 %v2112, %v1522
        %v2115 = vadd.f32 %v2091, %v2113
        %v2116 = vadd.f32 %v2092, %v2114
        %s2117 = sld [smem:[#allocation5 + $0x8b]]
        %v2118 = vstv %s2117
        %v2119 = vmul.f32 %v2118, %v1521
        %v2120 = vmul.f32 %v2118, %v1522
        %v2121 = vadd.f32 %v2097, %v2119
        %v2122 = vadd.f32 %v2098, %v2120
        %2123 = vrot.lane.b32.xlu0 %v1515, 127
        %v2124 = vpop.permute.xlu0 %2123
        %2125 = vrot.lane.b32.xlu0 %v1516, 127
        %v2126 = vpop.permute.xlu0 %2125
        %v2129 = vsel %vm519, %v2124, 0.0
        %v2130 = vsel %vm519, %v2126, 0.0
        %s2131 = sld [smem:[#allocation5 + $0x5]]
        %v2132 = vstv %s2131
        %v2133 = vmul.f32 %v2132, %v2129
        %v2134 = vmul.f32 %v2132, %v2130
        %v2135 = vadd.f32 %v2103, %v2133
        %v2136 = vadd.f32 %v2104, %v2134
        %s2137 = sld [smem:[#allocation5 + $0x29]]
        %v2138 = vstv %s2137
        %v2139 = vmul.f32 %v2138, %v2129
        %v2140 = vmul.f32 %v2138, %v2130
        %v2141 = vadd.f32 %v2109, %v2139
        %v2142 = vadd.f32 %v2110, %v2140
        %s2143 = sld [smem:[#allocation5 + $0x4d]]
        %v2144 = vstv %s2143
        %v2145 = vmul.f32 %v2144, %v2129
        %v2146 = vmul.f32 %v2144, %v2130
        %v2147 = vadd.f32 %v2115, %v2145
        %v2148 = vadd.f32 %v2116, %v2146
        %s2149 = sld [smem:[#allocation5 + $0x71]]
        %v2150 = vstv %s2149
        %v2151 = vmul.f32 %v2150, %v2129
        %v2152 = vmul.f32 %v2150, %v2130
        %v2153 = vadd.f32 %v2121, %v2151
        %v2154 = vadd.f32 %v2122, %v2152
        %2155 = vrot.lane.b32.xlu0 %v1517, 127
        %v2156 = vpop.permute.xlu0 %2155
        %2157 = vrot.lane.b32.xlu0 %v1518, 127
        %v2158 = vpop.permute.xlu0 %2157
        %v2161 = vsel %vm519, %v2156, 0.0
        %v2162 = vsel %vm519, %v2158, 0.0
        %s2163 = sld [smem:[#allocation5 + $0xe]]
        %v2164 = vstv %s2163
        %v2165 = vmul.f32 %v2164, %v2161
        %v2166 = vmul.f32 %v2164, %v2162
        %v2167 = vadd.f32 %v2135, %v2165
        %v2168 = vadd.f32 %v2136, %v2166
        %s2169 = sld [smem:[#allocation5 + $0x32]]
        %v2170 = vstv %s2169
        %v2171 = vmul.f32 %v2170, %v2161
        %v2172 = vmul.f32 %v2170, %v2162
        %v2173 = vadd.f32 %v2141, %v2171
        %v2174 = vadd.f32 %v2142, %v2172
        %s2175 = sld [smem:[#allocation5 + $0x56]]
        %v2176 = vstv %s2175
        %v2177 = vmul.f32 %v2176, %v2161
        %v2178 = vmul.f32 %v2176, %v2162
        %v2179 = vadd.f32 %v2147, %v2177
        %v2180 = vadd.f32 %v2148, %v2178
        %s2181 = sld [smem:[#allocation5 + $0x7a]]
        %v2182 = vstv %s2181
        %v2183 = vmul.f32 %v2182, %v2161
        %v2184 = vmul.f32 %v2182, %v2162
        %v2185 = vadd.f32 %v2153, %v2183
        %v2186 = vadd.f32 %v2154, %v2184
        %2187 = vrot.lane.b32.xlu0 %v1519, 127
        %v2188 = vpop.permute.xlu0 %2187
        %2189 = vrot.lane.b32.xlu0 %v1520, 127
        %v2190 = vpop.permute.xlu0 %2189
        %v2193 = vsel %vm519, %v2188, 0.0
        %v2194 = vsel %vm519, %v2190, 0.0
        %s2195 = sld [smem:[#allocation5 + $0x17]]
        %v2196 = vstv %s2195
        %v2197 = vmul.f32 %v2196, %v2193
        %v2198 = vmul.f32 %v2196, %v2194
        %v2199 = vadd.f32 %v2167, %v2197
        %v2200 = vadd.f32 %v2168, %v2198
        %s2201 = sld [smem:[#allocation5 + $0x3b]]
        %v2202 = vstv %s2201
        %v2203 = vmul.f32 %v2202, %v2193
        %v2204 = vmul.f32 %v2202, %v2194
        %v2205 = vadd.f32 %v2173, %v2203
        %v2206 = vadd.f32 %v2174, %v2204
        %s2207 = sld [smem:[#allocation5 + $0x5f]]
        %v2208 = vstv %s2207
        %v2209 = vmul.f32 %v2208, %v2193
        %v2210 = vmul.f32 %v2208, %v2194
        %v2211 = vadd.f32 %v2179, %v2209
        %v2212 = vadd.f32 %v2180, %v2210
        %s2213 = sld [smem:[#allocation5 + $0x83]]
        %v2214 = vstv %s2213
        %v2215 = vmul.f32 %v2214, %v2193
        %v2216 = vmul.f32 %v2214, %v2194
        %v2217 = vadd.f32 %v2185, %v2215
        %v2218 = vadd.f32 %v2186, %v2216
        %2219 = vrot.lane.b32.xlu0 %v1521, 127
        %v2220 = vpop.permute.xlu0 %2219
        %2221 = vrot.lane.b32.xlu0 %v1522, 127
        %v2222 = vpop.permute.xlu0 %2221
        %v2225 = vsel %vm519, %v2220, 0.0
        %v2226 = vsel %vm519, %v2222, 0.0
        %s2227 = sld [smem:[#allocation5 + $0x20]]
        %v2228 = vstv %s2227
        %v2229 = vmul.f32 %v2228, %v2225
        %v2230 = vmul.f32 %v2228, %v2226
        %v2231 = vadd.f32 %v2199, %v2229
        %v2232 = vadd.f32 %v2200, %v2230
        %s2233 = sld [smem:[#allocation5 + $0x44]]
        %v2234 = vstv %s2233
        %v2235 = vmul.f32 %v2234, %v2225
        %v2236 = vmul.f32 %v2234, %v2226
        %v2237 = vadd.f32 %v2205, %v2235
        %v2238 = vadd.f32 %v2206, %v2236
        %s2239 = sld [smem:[#allocation5 + $0x68]]
        %v2240 = vstv %s2239
        %v2241 = vmul.f32 %v2240, %v2225
        %v2242 = vmul.f32 %v2240, %v2226
        %v2243 = vadd.f32 %v2211, %v2241
        %v2244 = vadd.f32 %v2212, %v2242
        %s2245 = sld [smem:[#allocation5 + $0x8c]]
        %v2246 = vstv %s2245
        %v2247 = vmul.f32 %v2246, %v2225
        %v2248 = vmul.f32 %v2246, %v2226
        %v2249 = vadd.f32 %v2217, %v2247
        %v2250 = vadd.f32 %v2218, %v2248
        %v2251 = vrot.slane %v1515, 1
        %v2252 = vrot.slane %v1516, 1
        %v2253 = vsel %vm998, %v2251, %v2252
        %2255 = vrot.lane.b32.xlu0 %v2253, 1
        %v2256 = vpop.permute.xlu0 %2255
        %v2258 = vsel %vm279, 0.0, %v2256
        %s2259 = sld [smem:[#allocation5 + $0x6]]
        %v2260 = vstv %s2259
        %v2261 = vmul.f32 %v2260, %v2258
        %v2262 = vmul.f32 %v2260, %v1011
        %v2263 = vadd.f32 %v2231, %v2261
        %v2264 = vadd.f32 %v2232, %v2262
        %s2265 = sld [smem:[#allocation5 + $0x2a]]
        %v2266 = vstv %s2265
        %v2267 = vmul.f32 %v2266, %v2258
        %v2268 = vmul.f32 %v2266, %v1011
        %v2269 = vadd.f32 %v2237, %v2267
        %v2270 = vadd.f32 %v2238, %v2268
        %s2271 = sld [smem:[#allocation5 + $0x4e]]
        %v2272 = vstv %s2271
        %v2273 = vmul.f32 %v2272, %v2258
        %v2274 = vmul.f32 %v2272, %v1011
        %v2275 = vadd.f32 %v2243, %v2273
        %v2276 = vadd.f32 %v2244, %v2274
        %s2277 = sld [smem:[#allocation5 + $0x72]]
        %v2278 = vstv %s2277
        %v2279 = vmul.f32 %v2278, %v2258
        %v2280 = vmul.f32 %v2278, %v1011
        %v2281 = vadd.f32 %v2249, %v2279
        %v2282 = vadd.f32 %v2250, %v2280
        %v2283 = vrot.slane %v1517, 1
        %v2284 = vrot.slane %v1518, 1
        %v2285 = vsel %vm998, %v2283, %v2284
        %2287 = vrot.lane.b32.xlu0 %v2285, 1
        %v2288 = vpop.permute.xlu0 %2287
        %v2290 = vsel %vm279, 0.0, %v2288
        %s2291 = sld [smem:[#allocation5 + $0xf]]
        %v2292 = vstv %s2291
        %v2293 = vmul.f32 %v2292, %v2290
        %v2294 = vmul.f32 %v2292, %v1011
        %v2295 = vadd.f32 %v2263, %v2293
        %v2296 = vadd.f32 %v2264, %v2294
        %s2297 = sld [smem:[#allocation5 + $0x33]]
        %v2298 = vstv %s2297
        %v2299 = vmul.f32 %v2298, %v2290
        %v2300 = vmul.f32 %v2298, %v1011
        %v2301 = vadd.f32 %v2269, %v2299
        %v2302 = vadd.f32 %v2270, %v2300
        %s2303 = sld [smem:[#allocation5 + $0x57]]
        %v2304 = vstv %s2303
        %v2305 = vmul.f32 %v2304, %v2290
        %v2306 = vmul.f32 %v2304, %v1011
        %v2307 = vadd.f32 %v2275, %v2305
        %v2308 = vadd.f32 %v2276, %v2306
        %s2309 = sld [smem:[#allocation5 + $0x7b]]
        %v2310 = vstv %s2309
        %v2311 = vmul.f32 %v2310, %v2290
        %v2312 = vmul.f32 %v2310, %v1011
        %v2313 = vadd.f32 %v2281, %v2311
        %v2314 = vadd.f32 %v2282, %v2312
        %v2315 = vrot.slane %v1519, 1
        %v2316 = vrot.slane %v1520, 1
        %v2317 = vsel %vm998, %v2315, %v2316
        %2319 = vrot.lane.b32.xlu0 %v2317, 1
        %v2320 = vpop.permute.xlu0 %2319
        %v2322 = vsel %vm279, 0.0, %v2320
        %s2323 = sld [smem:[#allocation5 + $0x18]]
        %v2324 = vstv %s2323
        %v2325 = vmul.f32 %v2324, %v2322
        %v2326 = vmul.f32 %v2324, %v1011
        %v2327 = vadd.f32 %v2295, %v2325
        %v2328 = vadd.f32 %v2296, %v2326
        %s2329 = sld [smem:[#allocation5 + $0x3c]]
        %v2330 = vstv %s2329
        %v2331 = vmul.f32 %v2330, %v2322
        %v2332 = vmul.f32 %v2330, %v1011
        %v2333 = vadd.f32 %v2301, %v2331
        %v2334 = vadd.f32 %v2302, %v2332
        %s2335 = sld [smem:[#allocation5 + $0x60]]
        %v2336 = vstv %s2335
        %v2337 = vmul.f32 %v2336, %v2322
        %v2338 = vmul.f32 %v2336, %v1011
        %v2339 = vadd.f32 %v2307, %v2337
        %v2340 = vadd.f32 %v2308, %v2338
        %s2341 = sld [smem:[#allocation5 + $0x84]]
        %v2342 = vstv %s2341
        %v2343 = vmul.f32 %v2342, %v2322
        %v2344 = vmul.f32 %v2342, %v1011
        %v2345 = vadd.f32 %v2313, %v2343
        %v2346 = vadd.f32 %v2314, %v2344
        %v2347 = vrot.slane %v1521, 1
        %v2348 = vrot.slane %v1522, 1
        %v2349 = vsel %vm998, %v2347, %v2348
        %2351 = vrot.lane.b32.xlu0 %v2349, 1
        %v2352 = vpop.permute.xlu0 %2351
        %v2354 = vsel %vm279, 0.0, %v2352
        %s2355 = sld [smem:[#allocation5 + $0x21]]
        %v2356 = vstv %s2355
        %v2357 = vmul.f32 %v2356, %v2354
        %v2358 = vmul.f32 %v2356, %v1011
        %v2359 = vadd.f32 %v2327, %v2357
        %v2360 = vadd.f32 %v2328, %v2358
        %s2361 = sld [smem:[#allocation5 + $0x45]]
        %v2362 = vstv %s2361
        %v2363 = vmul.f32 %v2362, %v2354
        %v2364 = vmul.f32 %v2362, %v1011
        %v2365 = vadd.f32 %v2333, %v2363
        %v2366 = vadd.f32 %v2334, %v2364
        %s2367 = sld [smem:[#allocation5 + $0x69]]
        %v2368 = vstv %s2367
        %v2369 = vmul.f32 %v2368, %v2354
        %v2370 = vmul.f32 %v2368, %v1011
        %v2371 = vadd.f32 %v2339, %v2369
        %v2372 = vadd.f32 %v2340, %v2370
        %s2373 = sld [smem:[#allocation5 + $0x8d]]
        %v2374 = vstv %s2373
        %v2375 = vmul.f32 %v2374, %v2354
        %v2376 = vmul.f32 %v2374, %v1011
        %v2377 = vadd.f32 %v2345, %v2375
        %v2378 = vadd.f32 %v2346, %v2376
        %s2379 = sld [smem:[#allocation5 + $0x7]]
        %v2380 = vstv %s2379
        %v2381 = vmul.f32 %v2380, %v2253
        %v2382 = vmul.f32 %v2380, 0.0
        %v2383 = vadd.f32 %v2359, %v2381
        %v2384 = vadd.f32 %v2360, %v2382
        %s2385 = sld [smem:[#allocation5 + $0x2b]]
        %v2386 = vstv %s2385
        %v2387 = vmul.f32 %v2386, %v2253
        %v2388 = vmul.f32 %v2386, 0.0
        %v2389 = vadd.f32 %v2365, %v2387
        %v2390 = vadd.f32 %v2366, %v2388
        %s2391 = sld [smem:[#allocation5 + $0x4f]]
        %v2392 = vstv %s2391
        %v2393 = vmul.f32 %v2392, %v2253
        %v2394 = vmul.f32 %v2392, 0.0
        %v2395 = vadd.f32 %v2371, %v2393
        %v2396 = vadd.f32 %v2372, %v2394
        %s2397 = sld [smem:[#allocation5 + $0x73]]
        %v2398 = vstv %s2397
        %v2399 = vmul.f32 %v2398, %v2253
        %v2400 = vmul.f32 %v2398, 0.0
        %v2401 = vadd.f32 %v2377, %v2399
        %v2402 = vadd.f32 %v2378, %v2400
        %s2403 = sld [smem:[#allocation5 + $0x10]]
        %v2404 = vstv %s2403
        %v2405 = vmul.f32 %v2404, %v2285
        %v2406 = vmul.f32 %v2404, 0.0
        %v2407 = vadd.f32 %v2383, %v2405
        %v2408 = vadd.f32 %v2384, %v2406
        %s2409 = sld [smem:[#allocation5 + $0x34]]
        %v2410 = vstv %s2409
        %v2411 = vmul.f32 %v2410, %v2285
        %v2412 = vmul.f32 %v2410, 0.0
        %v2413 = vadd.f32 %v2389, %v2411
        %v2414 = vadd.f32 %v2390, %v2412
        %s2415 = sld [smem:[#allocation5 + $0x58]]
        %v2416 = vstv %s2415
        %v2417 = vmul.f32 %v2416, %v2285
        %v2418 = vmul.f32 %v2416, 0.0
        %v2419 = vadd.f32 %v2395, %v2417
        %v2420 = vadd.f32 %v2396, %v2418
        %s2421 = sld [smem:[#allocation5 + $0x7c]]
        %v2422 = vstv %s2421
        %v2423 = vmul.f32 %v2422, %v2285
        %v2424 = vmul.f32 %v2422, 0.0
        %v2425 = vadd.f32 %v2401, %v2423
        %v2426 = vadd.f32 %v2402, %v2424
        %s2427 = sld [smem:[#allocation5 + $0x19]]
        %v2428 = vstv %s2427
        %v2429 = vmul.f32 %v2428, %v2317
        %v2430 = vmul.f32 %v2428, 0.0
        %v2431 = vadd.f32 %v2407, %v2429
        %v2432 = vadd.f32 %v2408, %v2430
        %s2433 = sld [smem:[#allocation5 + $0x3d]]
        %v2434 = vstv %s2433
        %v2435 = vmul.f32 %v2434, %v2317
        %v2436 = vmul.f32 %v2434, 0.0
        %v2437 = vadd.f32 %v2413, %v2435
        %v2438 = vadd.f32 %v2414, %v2436
        %s2439 = sld [smem:[#allocation5 + $0x61]]
        %v2440 = vstv %s2439
        %v2441 = vmul.f32 %v2440, %v2317
        %v2442 = vmul.f32 %v2440, 0.0
        %v2443 = vadd.f32 %v2419, %v2441
        %v2444 = vadd.f32 %v2420, %v2442
        %s2445 = sld [smem:[#allocation5 + $0x85]]
        %v2446 = vstv %s2445
        %v2447 = vmul.f32 %v2446, %v2317
        %v2448 = vmul.f32 %v2446, 0.0
        %v2449 = vadd.f32 %v2425, %v2447
        %v2450 = vadd.f32 %v2426, %v2448
        %s2451 = sld [smem:[#allocation5 + $0x22]]
        %v2452 = vstv %s2451
        %v2453 = vmul.f32 %v2452, %v2349
        %v2454 = vmul.f32 %v2452, 0.0
        %v2455 = vadd.f32 %v2431, %v2453
        %v2456 = vadd.f32 %v2432, %v2454
        %s2457 = sld [smem:[#allocation5 + $0x46]]
        %v2458 = vstv %s2457
        %v2459 = vmul.f32 %v2458, %v2349
        %v2460 = vmul.f32 %v2458, 0.0
        %v2461 = vadd.f32 %v2437, %v2459
        %v2462 = vadd.f32 %v2438, %v2460
        %s2463 = sld [smem:[#allocation5 + $0x6a]]
        %v2464 = vstv %s2463
        %v2465 = vmul.f32 %v2464, %v2349
        %v2466 = vmul.f32 %v2464, 0.0
        %v2467 = vadd.f32 %v2443, %v2465
        %v2468 = vadd.f32 %v2444, %v2466
        %s2469 = sld [smem:[#allocation5 + $0x8e]]
        %v2470 = vstv %s2469
        %v2471 = vmul.f32 %v2470, %v2349
        %v2472 = vmul.f32 %v2470, 0.0
        %v2473 = vadd.f32 %v2449, %v2471
        %v2474 = vadd.f32 %v2450, %v2472
        %2475 = vrot.lane.b32.xlu0 %v2253, 127
        %v2476 = vpop.permute.xlu0 %2475
        %v2478 = vsel %vm519, %v2476, 0.0
        %s2479 = sld [smem:[#allocation5 + $0x8]]
        %v2480 = vstv %s2479
        %v2481 = vmul.f32 %v2480, %v2478
        %v2482 = vmul.f32 %v2480, %v1235
        %v2483 = vadd.f32 %v2455, %v2481
        %v2484 = vadd.f32 %v2456, %v2482
        %s2485 = sld [smem:[#allocation5 + $0x2c]]
        %v2486 = vstv %s2485
        %v2487 = vmul.f32 %v2486, %v2478
        %v2488 = vmul.f32 %v2486, %v1235
        %v2489 = vadd.f32 %v2461, %v2487
        %v2490 = vadd.f32 %v2462, %v2488
        %s2491 = sld [smem:[#allocation5 + $0x50]]
        %v2492 = vstv %s2491
        %v2493 = vmul.f32 %v2492, %v2478
        %v2494 = vmul.f32 %v2492, %v1235
        %v2495 = vadd.f32 %v2467, %v2493
        %v2496 = vadd.f32 %v2468, %v2494
        %s2497 = sld [smem:[#allocation5 + $0x74]]
        %v2498 = vstv %s2497
        %v2499 = vmul.f32 %v2498, %v2478
        %v2500 = vmul.f32 %v2498, %v1235
        %v2501 = vadd.f32 %v2473, %v2499
        %v2502 = vadd.f32 %v2474, %v2500
        %2503 = vrot.lane.b32.xlu0 %v2285, 127
        %v2504 = vpop.permute.xlu0 %2503
        %v2506 = vsel %vm519, %v2504, 0.0
        %s2507 = sld [smem:[#allocation5 + $0x11]]
        %v2508 = vstv %s2507
        %v2509 = vmul.f32 %v2508, %v2506
        %v2510 = vmul.f32 %v2508, %v1235
        %v2511 = vadd.f32 %v2483, %v2509
        %v2512 = vadd.f32 %v2484, %v2510
        %s2513 = sld [smem:[#allocation5 + $0x35]]
        %v2514 = vstv %s2513
        %v2515 = vmul.f32 %v2514, %v2506
        %v2516 = vmul.f32 %v2514, %v1235
        %v2517 = vadd.f32 %v2489, %v2515
        %v2518 = vadd.f32 %v2490, %v2516
        %s2519 = sld [smem:[#allocation5 + $0x59]]
        %v2520 = vstv %s2519
        %v2521 = vmul.f32 %v2520, %v2506
        %v2522 = vmul.f32 %v2520, %v1235
        %v2523 = vadd.f32 %v2495, %v2521
        %v2524 = vadd.f32 %v2496, %v2522
        %s2525 = sld [smem:[#allocation5 + $0x7d]]
        %v2526 = vstv %s2525
        %v2527 = vmul.f32 %v2526, %v2506
        %v2528 = vmul.f32 %v2526, %v1235
        %v2529 = vadd.f32 %v2501, %v2527
        %v2530 = vadd.f32 %v2502, %v2528
        %2531 = vrot.lane.b32.xlu0 %v2317, 127
        %v2532 = vpop.permute.xlu0 %2531
        %v2534 = vsel %vm519, %v2532, 0.0
        %s2535 = sld [smem:[#allocation5 + $0x1a]]
        %v2536 = vstv %s2535
        %v2537 = vmul.f32 %v2536, %v2534
        %v2538 = vmul.f32 %v2536, %v1235
        %v2539 = vadd.f32 %v2511, %v2537
        %v2540 = vadd.f32 %v2512, %v2538
        %s2541 = sld [smem:[#allocation5 + $0x3e]]
        %v2542 = vstv %s2541
        %v2543 = vmul.f32 %v2542, %v2534
        %v2544 = vmul.f32 %v2542, %v1235
        %v2545 = vadd.f32 %v2517, %v2543
        %v2546 = vadd.f32 %v2518, %v2544
        %s2547 = sld [smem:[#allocation5 + $0x62]]
        %v2548 = vstv %s2547
        %v2549 = vmul.f32 %v2548, %v2534
        %v2550 = vmul.f32 %v2548, %v1235
        %v2551 = vadd.f32 %v2523, %v2549
        %v2552 = vadd.f32 %v2524, %v2550
        %s2553 = sld [smem:[#allocation5 + $0x86]]
        %v2554 = vstv %s2553
        %v2555 = vmul.f32 %v2554, %v2534
        %v2556 = vmul.f32 %v2554, %v1235
        %v2557 = vadd.f32 %v2529, %v2555
        %v2558 = vadd.f32 %v2530, %v2556
        %2559 = vrot.lane.b32.xlu0 %v2349, 127
        %v2560 = vpop.permute.xlu0 %2559
        %v2562 = vsel %vm519, %v2560, 0.0
        %s2563 = sld [smem:[#allocation5 + $0x23]]
        %v2564 = vstv %s2563
        %v2565 = vmul.f32 %v2564, %v2562
        %v2566 = vmul.f32 %v2564, %v1235
        %v2567 = vadd.f32 %v2539, %v2565
        %v2568 = vadd.f32 %v2540, %v2566
        %s2569 = sld [smem:[#allocation5 + $0x47]]
        %v2570 = vstv %s2569
        %v2571 = vmul.f32 %v2570, %v2562
        %v2572 = vmul.f32 %v2570, %v1235
        %v2573 = vadd.f32 %v2545, %v2571
        %v2574 = vadd.f32 %v2546, %v2572
        %s2575 = sld [smem:[#allocation5 + $0x6b]]
        %v2576 = vstv %s2575
        %v2577 = vmul.f32 %v2576, %v2562
        %v2578 = vmul.f32 %v2576, %v1235
        %v2579 = vadd.f32 %v2551, %v2577
        %v2580 = vadd.f32 %v2552, %v2578
        %s2581 = sld [smem:[#allocation5 + $0x8f]]
        %v2582 = vstv %s2581
        %v2583 = vmul.f32 %v2582, %v2562
        %v2584 = vmul.f32 %v2582, %v1235
        %v2585 = vadd.f32 %v2557, %v2583
        %v2586 = vadd.f32 %v2558, %v2584
        %v2587 = vsel %vm270, %v2568, 0.0
        %v2588 = vadd.f32 %v2567, %v2587
        %v2589 = vrot.slane %v2588, 4
        %v2590 = vadd.f32 %v2588, %v2589
        %v2591 = vrot.slane %v2590, 2
        %v2592 = vadd.f32 %v2590, %v2591
        %v2593 = vrot.slane %v2592, 1
        %v2594 = vadd.f32 %v2592, %v2593
        %v2595 = vmul.f32 %v2567, %v2567
        %v2596 = vmul.f32 %v2568, %v2568
        %v2597 = vsel %vm270, %v2596, 0.0
        %v2598 = vadd.f32 %v2595, %v2597
        %v2599 = vrot.slane %v2598, 4
        %v2600 = vadd.f32 %v2598, %v2599
        %v2601 = vrot.slane %v2600, 2
        %v2602 = vadd.f32 %v2600, %v2601
        %v2603 = vrot.slane %v2602, 1
        %v2604 = vadd.f32 %v2602, %v2603
        %v2605 = vmul.f32 %v2594, 0.11111111
        %v2606 = vmul.f32 %v2604, 0.11111111
        %v2607 = vmul.f32 %v2605, %v2605
        %v2608 = vsub.f32 %v2606, %v2607
        %v2609 = vmax.f32 %v2608, 0.0
        %v2610 = vadd.f32 %v2609, 1e-05
        %v2611 = vrsqrt.pop %v2610
        %v2612 = vsub.f32 %v2567, %v2605
        %v2613 = vsub.f32 %v2568, %v2605
        %v2614 = vmul.f32 %v2612, %v2611
        %v2615 = vmul.f32 %v2613, %v2611
        %v2616 = vmul.f32 %v2614, %v1376
        %v2617 = vmul.f32 %v2615, %v1381
        %v2618 = vadd.f32 %v2616, %v1388
        %v2619 = vadd.f32 %v2617, %v1393
        %v2620 = vmax.f32 %v2618, 0.0
        %v2621 = vmax.f32 %v2619, 0.0
        %v2622 = vld [vmem:[%s246] sm:$0xff]
        %v2623 = vld [vmem:[%s246 + $0x8] sm:$0x1]
        %v2624 = vadd.f32 %v2620, %v2622
        %v2625 = vadd.f32 %v2621, %v2623
        %2626 = vst [vmem:[%s251] sm:$0xff] %v2624
        %2627 = vst [vmem:[%s251 + $0x8] sm:$0x1] %v2625
        %v2628 = vsel %vm270, %v2574, 0.0
        %v2629 = vadd.f32 %v2573, %v2628
        %v2630 = vrot.slane %v2629, 4
        %v2631 = vadd.f32 %v2629, %v2630
        %v2632 = vrot.slane %v2631, 2
        %v2633 = vadd.f32 %v2631, %v2632
        %v2634 = vrot.slane %v2633, 1
        %v2635 = vadd.f32 %v2633, %v2634
        %v2636 = vmul.f32 %v2573, %v2573
        %v2637 = vmul.f32 %v2574, %v2574
        %v2638 = vsel %vm270, %v2637, 0.0
        %v2639 = vadd.f32 %v2636, %v2638
        %v2640 = vrot.slane %v2639, 4
        %v2641 = vadd.f32 %v2639, %v2640
        %v2642 = vrot.slane %v2641, 2
        %v2643 = vadd.f32 %v2641, %v2642
        %v2644 = vrot.slane %v2643, 1
        %v2645 = vadd.f32 %v2643, %v2644
        %v2646 = vmul.f32 %v2635, 0.11111111
        %v2647 = vmul.f32 %v2645, 0.11111111
        %v2648 = vmul.f32 %v2646, %v2646
        %v2649 = vsub.f32 %v2647, %v2648
        %v2650 = vmax.f32 %v2649, 0.0
        %v2651 = vadd.f32 %v2650, 1e-05
        %v2652 = vrsqrt.pop %v2651
        %v2653 = vsub.f32 %v2573, %v2646
        %v2654 = vsub.f32 %v2574, %v2646
        %v2655 = vmul.f32 %v2653, %v2652
        %v2656 = vmul.f32 %v2654, %v2652
        %v2657 = vmul.f32 %v2655, %v1376
        %v2658 = vmul.f32 %v2656, %v1381
        %v2659 = vadd.f32 %v2657, %v1388
        %v2660 = vadd.f32 %v2658, %v1393
        %v2661 = vmax.f32 %v2659, 0.0
        %v2662 = vmax.f32 %v2660, 0.0
        %v2663 = vld [vmem:[%s258] sm:$0xff]
        %v2664 = vld [vmem:[%s258 + $0x8] sm:$0x1]
        %v2665 = vadd.f32 %v2661, %v2663
        %v2666 = vadd.f32 %v2662, %v2664
        %s2667 = scalar_lea.vmem %s251, 16
        %2668 = vst [vmem:[%s2667] sm:$0xff] %v2665
        %2669 = vst [vmem:[%s2667 + $0x8] sm:$0x1] %v2666
        %v2670 = vsel %vm270, %v2580, 0.0
        %v2671 = vadd.f32 %v2579, %v2670
        %v2672 = vrot.slane %v2671, 4
        %v2673 = vadd.f32 %v2671, %v2672
        %v2674 = vrot.slane %v2673, 2
        %v2675 = vadd.f32 %v2673, %v2674
        %v2676 = vrot.slane %v2675, 1
        %v2677 = vadd.f32 %v2675, %v2676
        %v2678 = vmul.f32 %v2579, %v2579
        %v2679 = vmul.f32 %v2580, %v2580
        %v2680 = vsel %vm270, %v2679, 0.0
        %v2681 = vadd.f32 %v2678, %v2680
        %v2682 = vrot.slane %v2681, 4
        %v2683 = vadd.f32 %v2681, %v2682
        %v2684 = vrot.slane %v2683, 2
        %v2685 = vadd.f32 %v2683, %v2684
        %v2686 = vrot.slane %v2685, 1
        %v2687 = vadd.f32 %v2685, %v2686
        %v2688 = vmul.f32 %v2677, 0.11111111
        %v2689 = vmul.f32 %v2687, 0.11111111
        %v2690 = vmul.f32 %v2688, %v2688
        %v2691 = vsub.f32 %v2689, %v2690
        %v2692 = vmax.f32 %v2691, 0.0
        %v2693 = vadd.f32 %v2692, 1e-05
        %v2694 = vrsqrt.pop %v2693
        %v2695 = vsub.f32 %v2579, %v2688
        %v2696 = vsub.f32 %v2580, %v2688
        %v2697 = vmul.f32 %v2695, %v2694
        %v2698 = vmul.f32 %v2696, %v2694
        %v2699 = vmul.f32 %v2697, %v1376
        %v2700 = vmul.f32 %v2698, %v1381
        %v2701 = vadd.f32 %v2699, %v1388
        %v2702 = vadd.f32 %v2700, %v1393
        %v2703 = vmax.f32 %v2701, 0.0
        %v2704 = vmax.f32 %v2702, 0.0
        %v2705 = vld [vmem:[%s261] sm:$0xff]
        %v2706 = vld [vmem:[%s261 + $0x8] sm:$0x1]
        %v2707 = vadd.f32 %v2703, %v2705
        %v2708 = vadd.f32 %v2704, %v2706
        %s2709 = scalar_lea.vmem %s251, 32
        %2710 = vst [vmem:[%s2709] sm:$0xff] %v2707
        %2711 = vst [vmem:[%s2709 + $0x8] sm:$0x1] %v2708
        %v2712 = vsel %vm270, %v2586, 0.0
        %v2713 = vadd.f32 %v2585, %v2712
        %v2714 = vrot.slane %v2713, 4
        %v2715 = vadd.f32 %v2713, %v2714
        %v2716 = vrot.slane %v2715, 2
        %v2717 = vadd.f32 %v2715, %v2716
        %v2718 = vrot.slane %v2717, 1
        %v2719 = vadd.f32 %v2717, %v2718
        %v2720 = vmul.f32 %v2585, %v2585
        %v2721 = vmul.f32 %v2586, %v2586
        %v2722 = vsel %vm270, %v2721, 0.0
        %v2723 = vadd.f32 %v2720, %v2722
        %v2724 = vrot.slane %v2723, 4
        %v2725 = vadd.f32 %v2723, %v2724
        %v2726 = vrot.slane %v2725, 2
        %v2727 = vadd.f32 %v2725, %v2726
        %v2728 = vrot.slane %v2727, 1
        %v2729 = vadd.f32 %v2727, %v2728
        %v2730 = vmul.f32 %v2719, 0.11111111
        %v2731 = vmul.f32 %v2729, 0.11111111
        %v2732 = vmul.f32 %v2730, %v2730
        %v2733 = vsub.f32 %v2731, %v2732
        %v2734 = vmax.f32 %v2733, 0.0
        %v2735 = vadd.f32 %v2734, 1e-05
        %v2736 = vrsqrt.pop %v2735
        %v2737 = vsub.f32 %v2585, %v2730
        %v2738 = vsub.f32 %v2586, %v2730
        %v2739 = vmul.f32 %v2737, %v2736
        %v2740 = vmul.f32 %v2738, %v2736
        %v2741 = vmul.f32 %v2739, %v1376
        %v2742 = vmul.f32 %v2740, %v1381
        %v2743 = vadd.f32 %v2741, %v1388
        %v2744 = vadd.f32 %v2742, %v1393
        %v2745 = vmax.f32 %v2743, 0.0
        %v2746 = vmax.f32 %v2744, 0.0
        %v2747 = vld [vmem:[%s264] sm:$0xff]
        %v2748 = vld [vmem:[%s264 + $0x8] sm:$0x1]
        %v2749 = vadd.f32 %v2745, %v2747
        %v2750 = vadd.f32 %v2746, %v2748
        %s2751 = scalar_lea.vmem %s251, 48
        %2752 = vst [vmem:[%s2751] sm:$0xff] %v2749
        %2753 = vst [vmem:[%s2751 + $0x8] sm:$0x1] %v2750
        %p2754 = scmp.lt.s32.totalorder %s18, 1
        %s2755 = scalar_select %p2754, %s18, 1
        %s2756 = smul.addr %s2755, 8
        %s2757 = smul.addr %s2756, 8
        %s2758 = scalar_lea.vmem %s5, %s2757
        // Predicated region
        $region49: #{residual_forward.1} parent=39 // pred_check
          %p2759 = pneg %p146
        $region50: #{residual_forward.1} parent=39 // pred_check_branch
          %2761 = sbr.rel (%p2759) target = $region52
        $region51: #{residual_forward.1} parent=39 // pred_region
          _
        $region52: #{residual_forward.1} parent=39 // pred_fallthru
          _
      $region40: #{residual_forward.1} parent=5 // pred_fallthru
        _
      %p2762 = scmp.le.s32.totalorder 2, %s13
      // Predicated region
      $region53: #{residual_forward.1} parent=5 // pred_check
        %p2763 = pneg %p2762
      $region54: #{residual_forward.1} parent=5 // pred_check_branch
        %2765 = sbr.rel (%p2763) target = $region56
      $region55: #{residual_forward.1} parent=5 // pred_region
        %s2766 = ssub.s32 %s13, 2
        // Predicated region
        $region57: #{residual_forward.1} parent=55 // pred_check
          %p2767 = pneg %p152
        $region58: #{residual_forward.1} parent=55 // pred_check_branch
          %2769 = sbr.rel (%p2767) target = $region60
        $region59: #{residual_forward.1} parent=55 // pred_region
          %p2770 = scmp.lt.s32.totalorder %s19, 1
          %s2771 = scalar_select %p2770, %s19, 1
          %s2772 = smul.addr %s2771, 8
          %s2773 = smul.addr %s2772, 8
          %s2774 = scalar_lea.vmem %s5, %s2773
        $region60: #{residual_forward.1} parent=55 // pred_fallthru
          _
      $region56: #{residual_forward.1} parent=5 // pred_fallthru
        _
    $region6: #{residual_forward.1} parent=1 // loop_footer
      %s17 = sadd.s32 1, %s13
    $region7: #{residual_forward.1} parent=1 // loop_footer_branch
      %12 = sbr.rel target = $region3
    $region8: #{residual_forward.1} parent=1 // loop_exit
      _
    %2775 = vsyncpa [#allocation4], 1
    %s2776 = scalar_lea.sflag [#allocation4], 1
    %2777 = vsyncpa %s2776, 1
    %2778 = vsyncpa [#allocation6], 1

</llo_original>
